<compile_context>
chip_gen: v7x
topology: tpu7x:2x2x1
jax: 0.10.0
libtpu: 0.0.40
codegen_flags: <defaults>
</compile_context>

<pallas_src>
import functools

import jax
import jax.numpy as jnp
from jax import lax
from jax.experimental import pallas as pl
from jax.experimental.pallas import tpu as pltpu


# --------------------------------------------------------------------------
# Kernels
# --------------------------------------------------------------------------
def _mlp_kernel_resident(x_ref, w_ref, b_ref, wl_ref, g_ref, beta_ref, o_ref, *,
                         n_layers, eps, split):
    """All weights VMEM-resident; the full layer chain is unrolled per grid
    step.  Optionally runs two independent M sub-tiles so one sub-tile's VPU
    epilogue overlaps the other's MXU matmuls."""
    gamma = g_ref[...]
    beta = beta_ref[...]

    def chain(r0, rows):
        h = x_ref[pl.ds(r0, rows), :].astype(jnp.bfloat16)
        for i in range(n_layers):
            z = jnp.dot(h, w_ref[i], preferred_element_type=jnp.float32)
            # bias + ReLU (dropout is identity in eval mode)
            z = jnp.maximum(z + b_ref[pl.ds(i, 1), :], 0.0)
            h = z.astype(jnp.bfloat16)
        out = jnp.dot(h, wl_ref[...], preferred_element_type=jnp.float32)
        out = jnp.maximum(out, 0.0)
        mean = jnp.mean(out, axis=-1, keepdims=True)
        var = jnp.mean((out - mean) ** 2, axis=-1, keepdims=True)
        normed = (out - mean) * lax.rsqrt(var + eps)
        o_ref[pl.ds(r0, rows), :] = (normed * gamma + beta).astype(o_ref.dtype)

    bm = o_ref.shape[0]
    if split:
        half = bm // 2
        chain(0, half)
        chain(half, half)
    else:
        chain(0, bm)


def _mlp_kernel_streamed(x_ref, w_ref, b_ref, g_ref, beta_ref, o_ref, h_ref, *,
                         n_layers, eps, split):
    """One Linear per grid step along axis 1.  Layer l+1's (dim,dim) weight is
    DMA'd (double-buffered by the Pallas pipeline) while layer l computes; the
    activation is carried across layer steps in a bf16 VMEM scratch.  Weight /
    bias block index n_layers is the final bias-free Linear (bias row zero,
    unused)."""
    l = pl.program_id(1)
    bm = o_ref.shape[0]
    if split:
        half = bm // 2
        ranges = ((0, half), (half, half))
    else:
        ranges = ((0, bm),)

    @pl.when(l == 0)
    def _():
        h_ref[...] = x_ref[...].astype(jnp.bfloat16)

    @pl.when(l < n_layers)
    def _():
        w = w_ref[0]
        b = b_ref[...]
        outs = []
        for r0, rows in ranges:
            z = jnp.dot(h_ref[pl.ds(r0, rows), :], w,
                        preferred_element_type=jnp.float32)
            outs.append(jnp.maximum(z + b, 0.0).astype(jnp.bfloat16))
        for (r0, rows), z in zip(ranges, outs):
            h_ref[pl.ds(r0, rows), :] = z

    @pl.when(l == n_layers)
    def _():
        w = w_ref[0]                      # streamed block at l == n_layers is W_lst
        gamma = g_ref[...]
        beta = beta_ref[...]
        for r0, rows in ranges:
            out = jnp.dot(h_ref[pl.ds(r0, rows), :], w,
                          preferred_element_type=jnp.float32)
            out = jnp.maximum(out, 0.0)
            mean = jnp.mean(out, axis=-1, keepdims=True)
            var = jnp.mean((out - mean) ** 2, axis=-1, keepdims=True)
            normed = (out - mean) * lax.rsqrt(var + eps)
            o_ref[pl.ds(r0, rows), :] = (normed * gamma + beta).astype(o_ref.dtype)


# --------------------------------------------------------------------------
# Hardware queries & tile sizing
# --------------------------------------------------------------------------
def _vmem_capacity_bytes():
    try:
        cap = getattr(pltpu.get_tpu_info(), "vmem_capacity_bytes", None)
        if cap:
            return int(cap)
    except Exception:
        pass
    return 64 * 1024 * 1024          # conservative fallback (v7x per-TC VMEM)


def _num_tensorcores():
    """Best-effort TensorCore count (2 on v7x, 1 on v5e/v6e); only used to keep
    the grid-step count a multiple of the core count."""
    try:
        info = pltpu.get_tpu_info()
    except Exception:
        return 1
    for name in ("num_tensorcores", "tensorcore_count", "num_cores", "core_count"):
        v = getattr(info, name, None)
        if isinstance(v, int) and v > 0:
            return max(1, min(v, 2))
    return 1


def _round_up(v, m):
    return ((v + m - 1) // m) * m


def _choose_block_m(batch, max_bm, n_tc):
    """Size-aware batch tile.  Small batches -> one grid step (no forced
    splitting on single-TC v5e/v6e); larger batches -> big sublane-aligned
    tiles with the tile count a multiple of the TensorCore count."""
    max_bm = max(16, min(max_bm, 512))   # >=512 rows/step already amortizes per-step overhead
    b_pad = _round_up(batch, 16)
    if b_pad <= max_bm:
        if n_tc > 1 and b_pad >= 32:     # keep both v7x TCs busy
            return _round_up(pl.cdiv(b_pad, n_tc), 16)
        return b_pad                     # grid = 1
    tiles = _round_up(pl.cdiv(b_pad, max_bm), max(n_tc, 1))
    return _round_up(pl.cdiv(b_pad, tiles), 16)


# --------------------------------------------------------------------------
# Wrapper
# --------------------------------------------------------------------------
def mlp_forward(x, w_stack, b_stack, w_lst, gamma, beta, *,
                block_m=None, eps=1e-5, stream_layers=None,
                single_buffer_invariants=True):
    """x: (B, dim).  w_stack: (N, dim, dim) pre-transposed to (in, out).
    b_stack: (N, dim).  w_lst: (dim, dim) pre-transposed.  gamma/beta: (dim,)
    or (1, dim).  Weights feed the MXU as bf16 with f32 accumulation."""
    B, dim = x.shape
    n_layers = w_stack.shape[0]

    w_stack = w_stack.astype(jnp.bfloat16)
    w_lst = w_lst.astype(jnp.bfloat16)
    b_stack = b_stack.astype(jnp.float32)
    gamma = jnp.reshape(gamma, (1, dim)).astype(jnp.float32)
    beta = jnp.reshape(beta, (1, dim)).astype(jnp.float32)

    vmem_budget = (3 * _vmem_capacity_bytes()) // 4     # leave headroom for compiler scratch
    n_tc = _num_tensorcores()

    resident_weight_bytes = (n_layers + 1) * dim * dim * 2 + (n_layers + 2) * dim * 4
    if stream_layers is None:
        stream_layers = (n_layers == 0) or (resident_weight_bytes > vmem_budget // 2)

    if block_m is None:
        if stream_layers:
            resident = 2 * (dim * dim * 2 + dim * 4)            # 2-buffered layer W + bias
            per_row = 2 * 2 * dim * 4 + 2 * dim                 # x/out tiles (2-buf f32) + bf16 scratch
        else:
            resident = resident_weight_bytes
            per_row = 2 * 2 * dim * 4
        avail = max(vmem_budget - resident - (4 << 20), 1 << 20)
        block_m = _choose_block_m(B, max(16, (avail // per_row) // 16 * 16), n_tc)

    B_pad = pl.cdiv(B, block_m) * block_m
    if B_pad != B:
        x = jnp.pad(x, ((0, B_pad - B), (0, 0)))
    m_tiles = B_pad // block_m
    split = (block_m % 32 == 0) and block_m >= 64

    flops = 2 * B_pad * dim * dim * (n_layers + 1)

    def run(single_buffer):
        def inv_spec(shape, index_map):
            # Grid-invariant operand: ask for single buffering (halves its VMEM
            # footprint); fall back to default pipelining if unsupported.
            if single_buffer:
                return pl.BlockSpec(shape, index_map,
                                    pipeline_mode=pl.Buffered(buffer_count=1))
            return pl.BlockSpec(shape, index_map)

        if stream_layers:
            # Pre-stack the final (bias-free) weight behind the hidden weights so
            # the layer grid axis indexes one contiguous (N+1, dim, dim) array.
            # (Callers can pre-stack once to avoid the per-call concat.)
            w_all = jnp.concatenate([w_stack, w_lst[None]], axis=0)
            b_all = jnp.concatenate([b_stack, jnp.zeros((1, dim), jnp.float32)], axis=0)
            kernel = functools.partial(_mlp_kernel_streamed,
                                       n_layers=n_layers, eps=eps, split=split)
            grid_spec = pltpu.PrefetchScalarGridSpec(
                num_scalar_prefetch=0,
                grid=(m_tiles, n_layers + 1),
                in_specs=[
                    pl.BlockSpec((block_m, dim), lambda m, l: (m, 0)),      # x (fetched once per m)
                    pl.BlockSpec((1, dim, dim), lambda m, l: (l, 0, 0)),    # layer weight (streamed)
                    pl.BlockSpec((1, dim), lambda m, l: (l, 0)),            # layer bias (streamed)
                    inv_spec((1, dim), lambda m, l: (0, 0)),                # gamma
                    inv_spec((1, dim), lambda m, l: (0, 0)),                # beta
                ],
                out_specs=pl.BlockSpec((block_m, dim), lambda m, l: (m, 0)),
                scratch_shapes=[pltpu.VMEM((block_m, dim), jnp.bfloat16)],  # carried activation
            )
            args = (x, w_all, b_all, gamma, beta)
            dim_sem = ("parallel", "arbitrary")
            weight_vmem = 2 * (dim * dim * 2 + dim * 4)
            act_vmem = 2 * 2 * block_m * dim * 4 + block_m * dim * 2
            bytes_accessed = (B_pad * dim * 4 * 2
                              + m_tiles * (n_layers + 1) * dim * (dim * 2 + 4)
                              + 2 * dim * 4)
        else:
            kernel = functools.partial(_mlp_kernel_resident,
                                       n_layers=n_layers, eps=eps, split=split)
            grid_spec = pltpu.PrefetchScalarGridSpec(
                num_scalar_prefetch=0,
                grid=(m_tiles,),
                in_specs=[
                    pl.BlockSpec((block_m, dim), lambda m: (m, 0)),          # x tile
                    inv_spec((n_layers, dim, dim), lambda m: (0, 0, 0)),     # W stack (resident)
                    inv_spec((n_layers, dim), lambda m: (0, 0)),             # b stack
                    inv_spec((dim, dim), lambda m: (0, 0)),                  # W_lst
                    inv_spec((1, dim), lambda m: (0, 0)),                    # gamma
                    inv_spec((1, dim), lambda m: (0, 0)),                    # beta
                ],
                out_specs=pl.BlockSpec((block_m, dim), lambda m: (m, 0)),
            )
            args = (x, w_stack, b_stack, w_lst, gamma, beta)
            dim_sem = ("parallel",)
            wbuf = 1 if single_buffer else 2
            weight_vmem = wbuf * resident_weight_bytes
            act_vmem = 2 * 2 * block_m * dim * 4
            bytes_accessed = (B_pad * dim * 4 * 2
                              + (n_layers + 1) * dim * dim * 2
                              + (n_layers + 4) * dim * 4)

        vmem_limit = int(min(vmem_budget,
                             max(8 << 20, int(1.25 * (weight_vmem + act_vmem)) + (2 << 20))))
        cost = pl.CostEstimate(flops=int(flops), transcendentals=int(B_pad),
                               bytes_accessed=int(bytes_accessed))
        return pl.pallas_call(
            kernel,
            out_shape=jax.ShapeDtypeStruct((B_pad, dim), jnp.float32),
            grid_spec=grid_spec,
            compiler_params=pltpu.CompilerParams(
                dimension_semantics=dim_sem,
                vmem_limit_bytes=vmem_limit),
            cost_estimate=cost,
        )(*args)

    try:
        out = run(single_buffer_invariants)
    except Exception:
        if not single_buffer_invariants:
            raise
        # pipeline_mode=pl.Buffered(1) unsupported on this JAX build -> retry
        # with default 2-deep buffering (only costs extra VMEM for invariants).
        out = run(False)

    return out[:B] if B_pad != B else out


# --------------------------------------------------------------------------
# Pure-JAX reference matching the kernel's mixed precision
# --------------------------------------------------------------------------
def reference_forward(x, w_stack_bf, b_stack, w_lst_bf, gamma, beta, eps=1e-5):
    h = x.astype(jnp.float32)
    for i in range(w_stack_bf.shape[0]):
        h = jnp.dot(h.astype(jnp.bfloat16), w_stack_bf[i],
                    preferred_element_type=jnp.float32)
        h = jnp.maximum(h + b_stack[i][None, :], 0.0)
    out = jnp.dot(h.astype(jnp.bfloat16), w_lst_bf,
                  preferred_element_type=jnp.float32)
    out = jnp.maximum(out, 0.0)
    mean = jnp.mean(out, axis=-1, keepdims=True)
    var = jnp.mean((out - mean) ** 2, axis=-1, keepdims=True)
    return (out - mean) * lax.rsqrt(var + eps) * gamma + beta


if __name__ == "__main__":
    N = 3          # hidden Linear layers
    dim = 128      # feature dim (perfect for v5e's 128x128 MXU; multiples of 256 ideal on v6e/v7x)
    B = 256        # batch

    key = jax.random.PRNGKey(0)
    kx, kw, kb, kl, kg, kbeta = jax.random.split(key, 6)

    x = jax.random.normal(kx, (B, dim), dtype=jnp.float32)

    # torch.nn.Linear stores W as (out, in); transpose to (in, out) so the
    # kernel computes x @ W.T + b exactly like torch.
    scale = 1.0 / jnp.sqrt(dim)
    w_torch = jax.random.uniform(kw, (N, dim, dim), jnp.float32, -scale, scale)
    b_stack = jax.random.uniform(kb, (N, dim), jnp.float32, -scale, scale)
    w_lst_torch = jax.random.uniform(kl, (dim, dim), jnp.float32, -scale, scale)

    w_stack = jnp.transpose(w_torch, (0, 2, 1)).astype(jnp.bfloat16)   # (N, in, out)
    w_lst = jnp.transpose(w_lst_torch, (1, 0)).astype(jnp.bfloat16)    # (in, out)

    # LayerNorm affine params (perturbed from torch's default ones/zeros).
    gamma = 1.0 + 0.1 * jax.random.normal(kg, (1, dim), jnp.float32)
    beta = 0.1 * jax.random.normal(kbeta, (1, dim), jnp.float32)

    ref = reference_forward(x, w_stack, b_stack, w_lst, gamma, beta)

    # Default path: weights VMEM-resident, size-aware block_m.
    out = mlp_forward(x, w_stack, b_stack, w_lst, gamma, beta)
    out = jax.block_until_ready(out)
    assert out.shape == (B, dim)
    assert jnp.allclose(out, ref, atol=5e-3, rtol=5e-3), "resident path mismatch"

    # Layer-streamed path (auto-selected for large dim / v7x VMEM) exercised
    # explicitly on the same small problem.
    out_s = mlp_forward(x, w_stack, b_stack, w_lst, gamma, beta,
                        stream_layers=True, block_m=128)
    out_s = jax.block_until_ready(out_s)
    assert jnp.allclose(out_s, ref, atol=5e-3, rtol=5e-3), "streamed path mismatch"

    print("KERNEL_OK")
</pallas_src>

<mosaic_0001>
module attributes {stable_mosaic.version = 11 : i64} {
  func.func @_mlp_kernel_resident(%arg0: i32, %arg1: memref<256x128xf32, #tpu.memory_space<vmem>>, %arg2: memref<3x128x128xbf16, #tpu.memory_space<vmem>>, %arg3: memref<3x128xf32, #tpu.memory_space<vmem>>, %arg4: memref<128x128xbf16, #tpu.memory_space<vmem>>, %arg5: memref<1x128xf32, #tpu.memory_space<vmem>>, %arg6: memref<1x128xf32, #tpu.memory_space<vmem>>, %arg7: memref<256x128xf32, #tpu.memory_space<vmem>>) attributes {dimension_semantics = [#tpu.dimension_semantics<parallel>], iteration_bounds = array<i64: 1>, scalar_prefetch = 0 : i64, scratch_operands = 0 : i64, tpu.core_type = #tpu.core_type<tc>, window_params = [{transform_indices = @transform_0, window_bounds = array<i64: 256, 128>}, {pipeline_mode = #tpu.pipeline_mode<synchronous>, transform_indices = @transform_1, window_bounds = array<i64: 3, 128, 128>}, {pipeline_mode = #tpu.pipeline_mode<synchronous>, transform_indices = @transform_2, window_bounds = array<i64: 3, 128>}, {pipeline_mode = #tpu.pipeline_mode<synchronous>, transform_indices = @transform_3, window_bounds = array<i64: 128, 128>}, {pipeline_mode = #tpu.pipeline_mode<synchronous>, transform_indices = @transform_4, window_bounds = array<i64: 1, 128>}, {pipeline_mode = #tpu.pipeline_mode<synchronous>, transform_indices = @transform_5, window_bounds = array<i64: 1, 128>}, {transform_indices = @transform_6, window_bounds = array<i64: 256, 128>}]} {
    %c0 = arith.constant 0 : index
    %c0_0 = arith.constant 0 : index
    %0 = vector.load %arg5[%c0, %c0_0] : memref<1x128xf32, #tpu.memory_space<vmem>>, vector<1x128xf32>
    %c0_1 = arith.constant 0 : index
    %c0_2 = arith.constant 0 : index
    %1 = vector.load %arg6[%c0_1, %c0_2] : memref<1x128xf32, #tpu.memory_space<vmem>>, vector<1x128xf32>
    %c0_3 = arith.constant 0 : index
    %c0_4 = arith.constant 0 : index
    %2 = vector.load %arg1[%c0_3, %c0_4] : memref<256x128xf32, #tpu.memory_space<vmem>>, vector<128x128xf32>
    %3 = arith.truncf %2 : vector<128x128xf32> to vector<128x128xbf16>
    %c0_5 = arith.constant 0 : index
    %c0_6 = arith.constant 0 : index
    %c0_7 = arith.constant 0 : index
    %4 = vector.load %arg2[%c0_5, %c0_6, %c0_7] : memref<3x128x128xbf16, #tpu.memory_space<vmem>>, vector<1x128x128xbf16>
    %5 = vector.shape_cast %4 : vector<1x128x128xbf16> to vector<128x128xbf16>
    %cst = arith.constant dense<0.000000e+00> : vector<128x128xf32>
    %6 = tpu.matmul %3, %5, %cst {dimension_numbers = #tpu.dot_dimension_numbers<[1], [0], [0], [1], [0, 0, 1, 1], [], []>} : vector<128x128xbf16>, vector<128x128xbf16>, vector<128x128xf32> -> vector<128x128xf32>
    %c0_8 = arith.constant 0 : index
    %c0_9 = arith.constant 0 : index
    %7 = vector.load %arg3[%c0_8, %c0_9] : memref<3x128xf32, #tpu.memory_space<vmem>>, vector<1x128xf32>
    %8 = vector.broadcast %7 : vector<1x128xf32> to vector<128x128xf32>
    %9 = arith.addf %6, %8 : vector<128x128xf32>
    %cst_10 = arith.constant 0.000000e+00 : f32
    %10 = vector.broadcast %cst_10 : f32 to vector<128x128xf32>
    %11 = arith.maximumf %9, %10 : vector<128x128xf32>
    %12 = arith.truncf %11 : vector<128x128xf32> to vector<128x128xbf16>
    %c1 = arith.constant 1 : index
    %c0_11 = arith.constant 0 : index
    %c0_12 = arith.constant 0 : index
    %13 = vector.load %arg2[%c1, %c0_11, %c0_12] : memref<3x128x128xbf16, #tpu.memory_space<vmem>>, vector<1x128x128xbf16>
    %14 = vector.shape_cast %13 : vector<1x128x128xbf16> to vector<128x128xbf16>
    %cst_13 = arith.constant dense<0.000000e+00> : vector<128x128xf32>
    %15 = tpu.matmul %12, %14, %cst_13 {dimension_numbers = #tpu.dot_dimension_numbers<[1], [0], [0], [1], [0, 0, 1, 1], [], []>} : vector<128x128xbf16>, vector<128x128xbf16>, vector<128x128xf32> -> vector<128x128xf32>
    %c1_14 = arith.constant 1 : index
    %c0_15 = arith.constant 0 : index
    %16 = vector.load %arg3[%c1_14, %c0_15] : memref<3x128xf32, #tpu.memory_space<vmem>>, vector<1x128xf32>
    %17 = vector.broadcast %16 : vector<1x128xf32> to vector<128x128xf32>
    %18 = arith.addf %15, %17 : vector<128x128xf32>
    %cst_16 = arith.constant 0.000000e+00 : f32
    %19 = vector.broadcast %cst_16 : f32 to vector<128x128xf32>
    %20 = arith.maximumf %18, %19 : vector<128x128xf32>
    %21 = arith.truncf %20 : vector<128x128xf32> to vector<128x128xbf16>
    %c2 = arith.constant 2 : index
    %c0_17 = arith.constant 0 : index
    %c0_18 = arith.constant 0 : index
    %22 = vector.load %arg2[%c2, %c0_17, %c0_18] : memref<3x128x128xbf16, #tpu.memory_space<vmem>>, vector<1x128x128xbf16>
    %23 = vector.shape_cast %22 : vector<1x128x128xbf16> to vector<128x128xbf16>
    %cst_19 = arith.constant dense<0.000000e+00> : vector<128x128xf32>
    %24 = tpu.matmul %21, %23, %cst_19 {dimension_numbers = #tpu.dot_dimension_numbers<[1], [0], [0], [1], [0, 0, 1, 1], [], []>} : vector<128x128xbf16>, vector<128x128xbf16>, vector<128x128xf32> -> vector<128x128xf32>
    %c2_20 = arith.constant 2 : index
    %c0_21 = arith.constant 0 : index
    %25 = vector.load %arg3[%c2_20, %c0_21] : memref<3x128xf32, #tpu.memory_space<vmem>>, vector<1x128xf32>
    %26 = vector.broadcast %25 : vector<1x128xf32> to vector<128x128xf32>
    %27 = arith.addf %24, %26 : vector<128x128xf32>
    %cst_22 = arith.constant 0.000000e+00 : f32
    %28 = vector.broadcast %cst_22 : f32 to vector<128x128xf32>
    %29 = arith.maximumf %27, %28 : vector<128x128xf32>
    %30 = arith.truncf %29 : vector<128x128xf32> to vector<128x128xbf16>
    %c0_23 = arith.constant 0 : index
    %c0_24 = arith.constant 0 : index
    %31 = vector.load %arg4[%c0_23, %c0_24] : memref<128x128xbf16, #tpu.memory_space<vmem>>, vector<128x128xbf16>
    %cst_25 = arith.constant dense<0.000000e+00> : vector<128x128xf32>
    %32 = tpu.matmul %30, %31, %cst_25 {dimension_numbers = #tpu.dot_dimension_numbers<[1], [0], [0], [1], [0, 0, 1, 1], [], []>} : vector<128x128xbf16>, vector<128x128xbf16>, vector<128x128xf32> -> vector<128x128xf32>
    %cst_26 = arith.constant 0.000000e+00 : f32
    %33 = vector.broadcast %cst_26 : f32 to vector<128x128xf32>
    %34 = arith.maximumf %32, %33 : vector<128x128xf32>
    %cst_27 = arith.constant dense<0.000000e+00> : vector<128xf32>
    %35 = vector.multi_reduction <add>, %34, %cst_27 [1] : vector<128x128xf32> to vector<128xf32>
    %36 = vector.shape_cast %35 : vector<128xf32> to vector<128x1xf32>
    %cst_28 = arith.constant 1.280000e+02 : f32
    %37 = vector.broadcast %cst_28 : f32 to vector<128x1xf32>
    %38 = arith.divf %36, %37 : vector<128x1xf32>
    %39 = vector.broadcast %38 : vector<128x1xf32> to vector<128x128xf32>
    %40 = arith.subf %34, %39 : vector<128x128xf32>
    %41 = arith.mulf %40, %40 : vector<128x128xf32>
    %cst_29 = arith.constant dense<0.000000e+00> : vector<128xf32>
    %42 = vector.multi_reduction <add>, %41, %cst_29 [1] : vector<128x128xf32> to vector<128xf32>
    %43 = vector.shape_cast %42 : vector<128xf32> to vector<128x1xf32>
    %cst_30 = arith.constant 1.280000e+02 : f32
    %44 = vector.broadcast %cst_30 : f32 to vector<128x1xf32>
    %45 = arith.divf %43, %44 : vector<128x1xf32>
    %46 = vector.broadcast %38 : vector<128x1xf32> to vector<128x128xf32>
    %47 = arith.subf %34, %46 : vector<128x128xf32>
    %cst_31 = arith.constant 9.99999974E-6 : f32
    %48 = vector.broadcast %cst_31 : f32 to vector<128x1xf32>
    %49 = arith.addf %45, %48 : vector<128x1xf32>
    %50 = math.rsqrt %49 : vector<128x1xf32>
    %51 = vector.broadcast %50 : vector<128x1xf32> to vector<128x128xf32>
    %52 = arith.mulf %47, %51 : vector<128x128xf32>
    %53 = vector.broadcast %0 : vector<1x128xf32> to vector<128x128xf32>
    %54 = arith.mulf %52, %53 : vector<128x128xf32>
    %55 = vector.broadcast %1 : vector<1x128xf32> to vector<128x128xf32>
    %56 = arith.addf %54, %55 : vector<128x128xf32>
    %c0_32 = arith.constant 0 : index
    %c0_33 = arith.constant 0 : index
    %57 = vector.load %arg7[%c0_32, %c0_33] : memref<256x128xf32, #tpu.memory_space<vmem>>, vector<128x128xf32>
    tpu.vector_store %arg7[%c0_32, %c0_33], %56 {strides = array<i32>} : memref<256x128xf32, #tpu.memory_space<vmem>>, vector<128x128xf32>,
    %c128 = arith.constant 128 : index
    %c0_34 = arith.constant 0 : index
    %58 = vector.load %arg1[%c128, %c0_34] : memref<256x128xf32, #tpu.memory_space<vmem>>, vector<128x128xf32>
    %59 = arith.truncf %58 : vector<128x128xf32> to vector<128x128xbf16>
    %c0_35 = arith.constant 0 : index
    %c0_36 = arith.constant 0 : index
    %c0_37 = arith.constant 0 : index
    %60 = vector.load %arg2[%c0_35, %c0_36, %c0_37] : memref<3x128x128xbf16, #tpu.memory_space<vmem>>, vector<1x128x128xbf16>
    %61 = vector.shape_cast %60 : vector<1x128x128xbf16> to vector<128x128xbf16>
    %cst_38 = arith.constant dense<0.000000e+00> : vector<128x128xf32>
    %62 = tpu.matmul %59, %61, %cst_38 {dimension_numbers = #tpu.dot_dimension_numbers<[1], [0], [0], [1], [0, 0, 1, 1], [], []>} : vector<128x128xbf16>, vector<128x128xbf16>, vector<128x128xf32> -> vector<128x128xf32>
    %c0_39 = arith.constant 0 : index
    %c0_40 = arith.constant 0 : index
    %63 = vector.load %arg3[%c0_39, %c0_40] : memref<3x128xf32, #tpu.memory_space<vmem>>, vector<1x128xf32>
    %64 = vector.broadcast %63 : vector<1x128xf32> to vector<128x128xf32>
    %65 = arith.addf %62, %64 : vector<128x128xf32>
    %cst_41 = arith.constant 0.000000e+00 : f32
    %66 = vector.broadcast %cst_41 : f32 to vector<128x128xf32>
    %67 = arith.maximumf %65, %66 : vector<128x128xf32>
    %68 = arith.truncf %67 : vector<128x128xf32> to vector<128x128xbf16>
    %c1_42 = arith.constant 1 : index
    %c0_43 = arith.constant 0 : index
    %c0_44 = arith.constant 0 : index
    %69 = vector.load %arg2[%c1_42, %c0_43, %c0_44] : memref<3x128x128xbf16, #tpu.memory_space<vmem>>, vector<1x128x128xbf16>
    %70 = vector.shape_cast %69 : vector<1x128x128xbf16> to vector<128x128xbf16>
    %cst_45 = arith.constant dense<0.000000e+00> : vector<128x128xf32>
    %71 = tpu.matmul %68, %70, %cst_45 {dimension_numbers = #tpu.dot_dimension_numbers<[1], [0], [0], [1], [0, 0, 1, 1], [], []>} : vector<128x128xbf16>, vector<128x128xbf16>, vector<128x128xf32> -> vector<128x128xf32>
    %c1_46 = arith.constant 1 : index
    %c0_47 = arith.constant 0 : index
    %72 = vector.load %arg3[%c1_46, %c0_47] : memref<3x128xf32, #tpu.memory_space<vmem>>, vector<1x128xf32>
    %73 = vector.broadcast %72 : vector<1x128xf32> to vector<128x128xf32>
    %74 = arith.addf %71, %73 : vector<128x128xf32>
    %cst_48 = arith.constant 0.000000e+00 : f32
    %75 = vector.broadcast %cst_48 : f32 to vector<128x128xf32>
    %76 = arith.maximumf %74, %75 : vector<128x128xf32>
    %77 = arith.truncf %76 : vector<128x128xf32> to vector<128x128xbf16>
    %c2_49 = arith.constant 2 : index
    %c0_50 = arith.constant 0 : index
    %c0_51 = arith.constant 0 : index
    %78 = vector.load %arg2[%c2_49, %c0_50, %c0_51] : memref<3x128x128xbf16, #tpu.memory_space<vmem>>, vector<1x128x128xbf16>
    %79 = vector.shape_cast %78 : vector<1x128x128xbf16> to vector<128x128xbf16>
    %cst_52 = arith.constant dense<0.000000e+00> : vector<128x128xf32>
    %80 = tpu.matmul %77, %79, %cst_52 {dimension_numbers = #tpu.dot_dimension_numbers<[1], [0], [0], [1], [0, 0, 1, 1], [], []>} : vector<128x128xbf16>, vector<128x128xbf16>, vector<128x128xf32> -> vector<128x128xf32>
    %c2_53 = arith.constant 2 : index
    %c0_54 = arith.constant 0 : index
    %81 = vector.load %arg3[%c2_53, %c0_54] : memref<3x128xf32, #tpu.memory_space<vmem>>, vector<1x128xf32>
    %82 = vector.broadcast %81 : vector<1x128xf32> to vector<128x128xf32>
    %83 = arith.addf %80, %82 : vector<128x128xf32>
    %cst_55 = arith.constant 0.000000e+00 : f32
    %84 = vector.broadcast %cst_55 : f32 to vector<128x128xf32>
    %85 = arith.maximumf %83, %84 : vector<128x128xf32>
    %86 = arith.truncf %85 : vector<128x128xf32> to vector<128x128xbf16>
    %c0_56 = arith.constant 0 : index
    %c0_57 = arith.constant 0 : index
    %87 = vector.load %arg4[%c0_56, %c0_57] : memref<128x128xbf16, #tpu.memory_space<vmem>>, vector<128x128xbf16>
    %cst_58 = arith.constant dense<0.000000e+00> : vector<128x128xf32>
    %88 = tpu.matmul %86, %87, %cst_58 {dimension_numbers = #tpu.dot_dimension_numbers<[1], [0], [0], [1], [0, 0, 1, 1], [], []>} : vector<128x128xbf16>, vector<128x128xbf16>, vector<128x128xf32> -> vector<128x128xf32>
    %cst_59 = arith.constant 0.000000e+00 : f32
    %89 = vector.broadcast %cst_59 : f32 to vector<128x128xf32>
    %90 = arith.maximumf %88, %89 : vector<128x128xf32>
    %cst_60 = arith.constant dense<0.000000e+00> : vector<128xf32>
    %91 = vector.multi_reduction <add>, %90, %cst_60 [1] : vector<128x128xf32> to vector<128xf32>
    %92 = vector.shape_cast %91 : vector<128xf32> to vector<128x1xf32>
    %cst_61 = arith.constant 1.280000e+02 : f32
    %93 = vector.broadcast %cst_61 : f32 to vector<128x1xf32>
    %94 = arith.divf %92, %93 : vector<128x1xf32>
    %95 = vector.broadcast %94 : vector<128x1xf32> to vector<128x128xf32>
    %96 = arith.subf %90, %95 : vector<128x128xf32>
    %97 = arith.mulf %96, %96 : vector<128x128xf32>
    %cst_62 = arith.constant dense<0.000000e+00> : vector<128xf32>
    %98 = vector.multi_reduction <add>, %97, %cst_62 [1] : vector<128x128xf32> to vector<128xf32>
    %99 = vector.shape_cast %98 : vector<128xf32> to vector<128x1xf32>
    %cst_63 = arith.constant 1.280000e+02 : f32
    %100 = vector.broadcast %cst_63 : f32 to vector<128x1xf32>
    %101 = arith.divf %99, %100 : vector<128x1xf32>
    %102 = vector.broadcast %94 : vector<128x1xf32> to vector<128x128xf32>
    %103 = arith.subf %90, %102 : vector<128x128xf32>
    %cst_64 = arith.constant 9.99999974E-6 : f32
    %104 = vector.broadcast %cst_64 : f32 to vector<128x1xf32>
    %105 = arith.addf %101, %104 : vector<128x1xf32>
    %106 = math.rsqrt %105 : vector<128x1xf32>
    %107 = vector.broadcast %106 : vector<128x1xf32> to vector<128x128xf32>
    %108 = arith.mulf %103, %107 : vector<128x128xf32>
    %109 = vector.broadcast %0 : vector<1x128xf32> to vector<128x128xf32>
    %110 = arith.mulf %108, %109 : vector<128x128xf32>
    %111 = vector.broadcast %1 : vector<1x128xf32> to vector<128x128xf32>
    %112 = arith.addf %110, %111 : vector<128x128xf32>
    %c128_65 = arith.constant 128 : index
    %c0_66 = arith.constant 0 : index
    %113 = vector.load %arg7[%c128_65, %c0_66] : memref<256x128xf32, #tpu.memory_space<vmem>>, vector<128x128xf32>
    tpu.vector_store %arg7[%c128_65, %c0_66], %112 {strides = array<i32>} : memref<256x128xf32, #tpu.memory_space<vmem>>, vector<128x128xf32>,
    return
  }
  func.func @transform_0(%arg0: i32) -> (i32, i32) {
    %c0_i32 = arith.constant 0 : i32
    %c0_i32_0 = arith.constant 0 : i32
    return %arg0, %c0_i32 : i32, i32
  }
  func.func @transform_1(%arg0: i32) -> (i32, i32, i32) {
    %c0_i32 = arith.constant 0 : i32
    %c0_i32_0 = arith.constant 0 : i32
    %c0_i32_1 = arith.constant 0 : i32
    %c0_i32_2 = arith.constant 0 : i32
    return %c0_i32, %c0_i32_0, %c0_i32_1 : i32, i32, i32
  }
  func.func @transform_2(%arg0: i32) -> (i32, i32) {
    %c0_i32 = arith.constant 0 : i32
    %c0_i32_0 = arith.constant 0 : i32
    %c0_i32_1 = arith.constant 0 : i32
    return %c0_i32, %c0_i32_0 : i32, i32
  }
  func.func @transform_3(%arg0: i32) -> (i32, i32) {
    %c0_i32 = arith.constant 0 : i32
    %c0_i32_0 = arith.constant 0 : i32
    %c0_i32_1 = arith.constant 0 : i32
    return %c0_i32, %c0_i32_0 : i32, i32
  }
  func.func @transform_4(%arg0: i32) -> (i32, i32) {
    %c0_i32 = arith.constant 0 : i32
    %c0_i32_0 = arith.constant 0 : i32
    %c0_i32_1 = arith.constant 0 : i32
    return %c0_i32, %c0_i32_0 : i32, i32
  }
  func.func @transform_5(%arg0: i32) -> (i32, i32) {
    %c0_i32 = arith.constant 0 : i32
    %c0_i32_0 = arith.constant 0 : i32
    %c0_i32_1 = arith.constant 0 : i32
    return %c0_i32, %c0_i32_0 : i32, i32
  }
  func.func @transform_6(%arg0: i32) -> (i32, i32) {
    %c0_i32 = arith.constant 0 : i32
    %c0_i32_0 = arith.constant 0 : i32
    return %arg0, %c0_i32 : i32, i32
  }
}

module attributes {stable_mosaic.version = 11 : i64} {
  func.func @_mlp_kernel_resident(%arg0: i32, %arg1: memref<256x128xf32, #tpu.memory_space<vmem>>, %arg2: memref<3x128x128xbf16, #tpu.memory_space<vmem>>, %arg3: memref<3x128xf32, #tpu.memory_space<vmem>>, %arg4: memref<128x128xbf16, #tpu.memory_space<vmem>>, %arg5: memref<1x128xf32, #tpu.memory_space<vmem>>, %arg6: memref<1x128xf32, #tpu.memory_space<vmem>>, %arg7: memref<256x128xf32, #tpu.memory_space<vmem>>) attributes {dimension_semantics = [#tpu.dimension_semantics<parallel>], iteration_bounds = array<i64: 1>, scalar_prefetch = 0 : i64, scratch_operands = 0 : i64, tpu.core_type = #tpu.core_type<tc>, window_params = [{transform_indices = @transform_0, window_bounds = array<i64: 256, 128>}, {pipeline_mode = #tpu.pipeline_mode<synchronous>, transform_indices = @transform_1, window_bounds = array<i64: 3, 128, 128>}, {pipeline_mode = #tpu.pipeline_mode<synchronous>, transform_indices = @transform_2, window_bounds = array<i64: 3, 128>}, {pipeline_mode = #tpu.pipeline_mode<synchronous>, transform_indices = @transform_3, window_bounds = array<i64: 128, 128>}, {pipeline_mode = #tpu.pipeline_mode<synchronous>, transform_indices = @transform_4, window_bounds = array<i64: 1, 128>}, {pipeline_mode = #tpu.pipeline_mode<synchronous>, transform_indices = @transform_5, window_bounds = array<i64: 1, 128>}, {transform_indices = @transform_6, window_bounds = array<i64: 256, 128>}]} {
    %c0 = arith.constant 0 : index
    %c0_0 = arith.constant 0 : index
    %0 = vector.load %arg5[%c0, %c0_0] : memref<1x128xf32, #tpu.memory_space<vmem>>, vector<1x128xf32>
    %c0_1 = arith.constant 0 : index
    %c0_2 = arith.constant 0 : index
    %1 = vector.load %arg6[%c0_1, %c0_2] : memref<1x128xf32, #tpu.memory_space<vmem>>, vector<1x128xf32>
    %c0_3 = arith.constant 0 : index
    %c0_4 = arith.constant 0 : index
    %2 = vector.load %arg1[%c0_3, %c0_4] : memref<256x128xf32, #tpu.memory_space<vmem>>, vector<128x128xf32>
    %3 = arith.truncf %2 : vector<128x128xf32> to vector<128x128xbf16>
    %c0_5 = arith.constant 0 : index
    %c0_6 = arith.constant 0 : index
    %c0_7 = arith.constant 0 : index
    %4 = vector.load %arg2[%c0_5, %c0_6, %c0_7] : memref<3x128x128xbf16, #tpu.memory_space<vmem>>, vector<1x128x128xbf16>
    %5 = vector.shape_cast %4 : vector<1x128x128xbf16> to vector<128x128xbf16>
    %cst = arith.constant dense<0.000000e+00> : vector<128x128xf32>
    %6 = tpu.matmul %3, %5, %cst {dimension_numbers = #tpu.dot_dimension_numbers<[1], [0], [0], [1], [0, 0, 1, 1], [], []>} : vector<128x128xbf16>, vector<128x128xbf16>, vector<128x128xf32> -> vector<128x128xf32>
    %c0_8 = arith.constant 0 : index
    %c0_9 = arith.constant 0 : index
    %7 = vector.load %arg3[%c0_8, %c0_9] : memref<3x128xf32, #tpu.memory_space<vmem>>, vector<1x128xf32>
    %8 = vector.broadcast %7 : vector<1x128xf32> to vector<128x128xf32>
    %9 = arith.addf %6, %8 : vector<128x128xf32>
    %cst_10 = arith.constant 0.000000e+00 : f32
    %10 = vector.broadcast %cst_10 : f32 to vector<128x128xf32>
    %11 = arith.maximumf %9, %10 : vector<128x128xf32>
    %12 = arith.truncf %11 : vector<128x128xf32> to vector<128x128xbf16>
    %c1 = arith.constant 1 : index
    %c0_11 = arith.constant 0 : index
    %c0_12 = arith.constant 0 : index
    %13 = vector.load %arg2[%c1, %c0_11, %c0_12] : memref<3x128x128xbf16, #tpu.memory_space<vmem>>, vector<1x128x128xbf16>
    %14 = vector.shape_cast %13 : vector<1x128x128xbf16> to vector<128x128xbf16>
    %cst_13 = arith.constant dense<0.000000e+00> : vector<128x128xf32>
    %15 = tpu.matmul %12, %14, %cst_13 {dimension_numbers = #tpu.dot_dimension_numbers<[1], [0], [0], [1], [0, 0, 1, 1], [], []>} : vector<128x128xbf16>, vector<128x128xbf16>, vector<128x128xf32> -> vector<128x128xf32>
    %c1_14 = arith.constant 1 : index
    %c0_15 = arith.constant 0 : index
    %16 = vector.load %arg3[%c1_14, %c0_15] : memref<3x128xf32, #tpu.memory_space<vmem>>, vector<1x128xf32>
    %17 = vector.broadcast %16 : vector<1x128xf32> to vector<128x128xf32>
    %18 = arith.addf %15, %17 : vector<128x128xf32>
    %cst_16 = arith.constant 0.000000e+00 : f32
    %19 = vector.broadcast %cst_16 : f32 to vector<128x128xf32>
    %20 = arith.maximumf %18, %19 : vector<128x128xf32>
    %21 = arith.truncf %20 : vector<128x128xf32> to vector<128x128xbf16>
    %c2 = arith.constant 2 : index
    %c0_17 = arith.constant 0 : index
    %c0_18 = arith.constant 0 : index
    %22 = vector.load %arg2[%c2, %c0_17, %c0_18] : memref<3x128x128xbf16, #tpu.memory_space<vmem>>, vector<1x128x128xbf16>
    %23 = vector.shape_cast %22 : vector<1x128x128xbf16> to vector<128x128xbf16>
    %cst_19 = arith.constant dense<0.000000e+00> : vector<128x128xf32>
    %24 = tpu.matmul %21, %23, %cst_19 {dimension_numbers = #tpu.dot_dimension_numbers<[1], [0], [0], [1], [0, 0, 1, 1], [], []>} : vector<128x128xbf16>, vector<128x128xbf16>, vector<128x128xf32> -> vector<128x128xf32>
    %c2_20 = arith.constant 2 : index
    %c0_21 = arith.constant 0 : index
    %25 = vector.load %arg3[%c2_20, %c0_21] : memref<3x128xf32, #tpu.memory_space<vmem>>, vector<1x128xf32>
    %26 = vector.broadcast %25 : vector<1x128xf32> to vector<128x128xf32>
    %27 = arith.addf %24, %26 : vector<128x128xf32>
    %cst_22 = arith.constant 0.000000e+00 : f32
    %28 = vector.broadcast %cst_22 : f32 to vector<128x128xf32>
    %29 = arith.maximumf %27, %28 : vector<128x128xf32>
    %30 = arith.truncf %29 : vector<128x128xf32> to vector<128x128xbf16>
    %c0_23 = arith.constant 0 : index
    %c0_24 = arith.constant 0 : index
    %31 = vector.load %arg4[%c0_23, %c0_24] : memref<128x128xbf16, #tpu.memory_space<vmem>>, vector<128x128xbf16>
    %cst_25 = arith.constant dense<0.000000e+00> : vector<128x128xf32>
    %32 = tpu.matmul %30, %31, %cst_25 {dimension_numbers = #tpu.dot_dimension_numbers<[1], [0], [0], [1], [0, 0, 1, 1], [], []>} : vector<128x128xbf16>, vector<128x128xbf16>, vector<128x128xf32> -> vector<128x128xf32>
    %cst_26 = arith.constant 0.000000e+00 : f32
    %33 = vector.broadcast %cst_26 : f32 to vector<128x128xf32>
    %34 = arith.maximumf %32, %33 : vector<128x128xf32>
    %cst_27 = arith.constant dense<0.000000e+00> : vector<128xf32>
    %35 = vector.multi_reduction <add>, %34, %cst_27 [1] : vector<128x128xf32> to vector<128xf32>
    %36 = vector.shape_cast %35 : vector<128xf32> to vector<128x1xf32>
    %cst_28 = arith.constant 1.280000e+02 : f32
    %37 = vector.broadcast %cst_28 : f32 to vector<128x1xf32>
    %38 = arith.divf %36, %37 : vector<128x1xf32>
    %39 = vector.broadcast %38 : vector<128x1xf32> to vector<128x128xf32>
    %40 = arith.subf %34, %39 : vector<128x128xf32>
    %41 = arith.mulf %40, %40 : vector<128x128xf32>
    %cst_29 = arith.constant dense<0.000000e+00> : vector<128xf32>
    %42 = vector.multi_reduction <add>, %41, %cst_29 [1] : vector<128x128xf32> to vector<128xf32>
    %43 = vector.shape_cast %42 : vector<128xf32> to vector<128x1xf32>
    %cst_30 = arith.constant 1.280000e+02 : f32
    %44 = vector.broadcast %cst_30 : f32 to vector<128x1xf32>
    %45 = arith.divf %43, %44 : vector<128x1xf32>
    %46 = vector.broadcast %38 : vector<128x1xf32> to vector<128x128xf32>
    %47 = arith.subf %34, %46 : vector<128x128xf32>
    %cst_31 = arith.constant 9.99999974E-6 : f32
    %48 = vector.broadcast %cst_31 : f32 to vector<128x1xf32>
    %49 = arith.addf %45, %48 : vector<128x1xf32>
    %50 = math.rsqrt %49 : vector<128x1xf32>
    %51 = vector.broadcast %50 : vector<128x1xf32> to vector<128x128xf32>
    %52 = arith.mulf %47, %51 : vector<128x128xf32>
    %53 = vector.broadcast %0 : vector<1x128xf32> to vector<128x128xf32>
    %54 = arith.mulf %52, %53 : vector<128x128xf32>
    %55 = vector.broadcast %1 : vector<1x128xf32> to vector<128x128xf32>
    %56 = arith.addf %54, %55 : vector<128x128xf32>
    %c0_32 = arith.constant 0 : index
    %c0_33 = arith.constant 0 : index
    %57 = vector.load %arg7[%c0_32, %c0_33] : memref<256x128xf32, #tpu.memory_space<vmem>>, vector<128x128xf32>
    tpu.vector_store %arg7[%c0_32, %c0_33], %56 {strides = array<i32>} : memref<256x128xf32, #tpu.memory_space<vmem>>, vector<128x128xf32>,
    %c128 = arith.constant 128 : index
    %c0_34 = arith.constant 0 : index
    %58 = vector.load %arg1[%c128, %c0_34] : memref<256x128xf32, #tpu.memory_space<vmem>>, vector<128x128xf32>
    %59 = arith.truncf %58 : vector<128x128xf32> to vector<128x128xbf16>
    %c0_35 = arith.constant 0 : index
    %c0_36 = arith.constant 0 : index
    %c0_37 = arith.constant 0 : index
    %60 = vector.load %arg2[%c0_35, %c0_36, %c0_37] : memref<3x128x128xbf16, #tpu.memory_space<vmem>>, vector<1x128x128xbf16>
    %61 = vector.shape_cast %60 : vector<1x128x128xbf16> to vector<128x128xbf16>
    %cst_38 = arith.constant dense<0.000000e+00> : vector<128x128xf32>
    %62 = tpu.matmul %59, %61, %cst_38 {dimension_numbers = #tpu.dot_dimension_numbers<[1], [0], [0], [1], [0, 0, 1, 1], [], []>} : vector<128x128xbf16>, vector<128x128xbf16>, vector<128x128xf32> -> vector<128x128xf32>
    %c0_39 = arith.constant 0 : index
    %c0_40 = arith.constant 0 : index
    %63 = vector.load %arg3[%c0_39, %c0_40] : memref<3x128xf32, #tpu.memory_space<vmem>>, vector<1x128xf32>
    %64 = vector.broadcast %63 : vector<1x128xf32> to vector<128x128xf32>
    %65 = arith.addf %62, %64 : vector<128x128xf32>
    %cst_41 = arith.constant 0.000000e+00 : f32
    %66 = vector.broadcast %cst_41 : f32 to vector<128x128xf32>
    %67 = arith.maximumf %65, %66 : vector<128x128xf32>
    %68 = arith.truncf %67 : vector<128x128xf32> to vector<128x128xbf16>
    %c1_42 = arith.constant 1 : index
    %c0_43 = arith.constant 0 : index
    %c0_44 = arith.constant 0 : index
    %69 = vector.load %arg2[%c1_42, %c0_43, %c0_44] : memref<3x128x128xbf16, #tpu.memory_space<vmem>>, vector<1x128x128xbf16>
    %70 = vector.shape_cast %69 : vector<1x128x128xbf16> to vector<128x128xbf16>
    %cst_45 = arith.constant dense<0.000000e+00> : vector<128x128xf32>
    %71 = tpu.matmul %68, %70, %cst_45 {dimension_numbers = #tpu.dot_dimension_numbers<[1], [0], [0], [1], [0, 0, 1, 1], [], []>} : vector<128x128xbf16>, vector<128x128xbf16>, vector<128x128xf32> -> vector<128x128xf32>
    %c1_46 = arith.constant 1 : index
    %c0_47 = arith.constant 0 : index
    %72 = vector.load %arg3[%c1_46, %c0_47] : memref<3x128xf32, #tpu.memory_space<vmem>>, vector<1x128xf32>
    %73 = vector.broadcast %72 : vector<1x128xf32> to vector<128x128xf32>
    %74 = arith.addf %71, %73 : vector<128x128xf32>
    %cst_48 = arith.constant 0.000000e+00 : f32
    %75 = vector.broadcast %cst_48 : f32 to vector<128x128xf32>
    %76 = arith.maximumf %74, %75 : vector<128x128xf32>
    %77 = arith.truncf %76 : vector<128x128xf32> to vector<128x128xbf16>
    %c2_49 = arith.constant 2 : index
    %c0_50 = arith.constant 0 : index
    %c0_51 = arith.constant 0 : index
    %78 = vector.load %arg2[%c2_49, %c0_50, %c0_51] : memref<3x128x128xbf16, #tpu.memory_space<vmem>>, vector<1x128x128xbf16>
    %79 = vector.shape_cast %78 : vector<1x128x128xbf16> to vector<128x128xbf16>
    %cst_52 = arith.constant dense<0.000000e+00> : vector<128x128xf32>
    %80 = tpu.matmul %77, %79, %cst_52 {dimension_numbers = #tpu.dot_dimension_numbers<[1], [0], [0], [1], [0, 0, 1, 1], [], []>} : vector<128x128xbf16>, vector<128x128xbf16>, vector<128x128xf32> -> vector<128x128xf32>
    %c2_53 = arith.constant 2 : index
    %c0_54 = arith.constant 0 : index
    %81 = vector.load %arg3[%c2_53, %c0_54] : memref<3x128xf32, #tpu.memory_space<vmem>>, vector<1x128xf32>
    %82 = vector.broadcast %81 : vector<1x128xf32> to vector<128x128xf32>
    %83 = arith.addf %80, %82 : vector<128x128xf32>
    %cst_55 = arith.constant 0.000000e+00 : f32
    %84 = vector.broadcast %cst_55 : f32 to vector<128x128xf32>
    %85 = arith.maximumf %83, %84 : vector<128x128xf32>
    %86 = arith.truncf %85 : vector<128x128xf32> to vector<128x128xbf16>
    %c0_56 = arith.constant 0 : index
    %c0_57 = arith.constant 0 : index
    %87 = vector.load %arg4[%c0_56, %c0_57] : memref<128x128xbf16, #tpu.memory_space<vmem>>, vector<128x128xbf16>
    %cst_58 = arith.constant dense<0.000000e+00> : vector<128x128xf32>
    %88 = tpu.matmul %86, %87, %cst_58 {dimension_numbers = #tpu.dot_dimension_numbers<[1], [0], [0], [1], [0, 0, 1, 1], [], []>} : vector<128x128xbf16>, vector<128x128xbf16>, vector<128x128xf32> -> vector<128x128xf32>
    %cst_59 = arith.constant 0.000000e+00 : f32
    %89 = vector.broadcast %cst_59 : f32 to vector<128x128xf32>
    %90 = arith.maximumf %88, %89 : vector<128x128xf32>
    %cst_60 = arith.constant dense<0.000000e+00> : vector<128xf32>
    %91 = vector.multi_reduction <add>, %90, %cst_60 [1] : vector<128x128xf32> to vector<128xf32>
    %92 = vector.shape_cast %91 : vector<128xf32> to vector<128x1xf32>
    %cst_61 = arith.constant 1.280000e+02 : f32
    %93 = vector.broadcast %cst_61 : f32 to vector<128x1xf32>
    %94 = arith.divf %92, %93 : vector<128x1xf32>
    %95 = vector.broadcast %94 : vector<128x1xf32> to vector<128x128xf32>
    %96 = arith.subf %90, %95 : vector<128x128xf32>
    %97 = arith.mulf %96, %96 : vector<128x128xf32>
    %cst_62 = arith.constant dense<0.000000e+00> : vector<128xf32>
    %98 = vector.multi_reduction <add>, %97, %cst_62 [1] : vector<128x128xf32> to vector<128xf32>
    %99 = vector.shape_cast %98 : vector<128xf32> to vector<128x1xf32>
    %cst_63 = arith.constant 1.280000e+02 : f32
    %100 = vector.broadcast %cst_63 : f32 to vector<128x1xf32>
    %101 = arith.divf %99, %100 : vector<128x1xf32>
    %102 = vector.broadcast %94 : vector<128x1xf32> to vector<128x128xf32>
    %103 = arith.subf %90, %102 : vector<128x128xf32>
    %cst_64 = arith.constant 9.99999974E-6 : f32
    %104 = vector.broadcast %cst_64 : f32 to vector<128x1xf32>
    %105 = arith.addf %101, %104 : vector<128x1xf32>
    %106 = math.rsqrt %105 : vector<128x1xf32>
    %107 = vector.broadcast %106 : vector<128x1xf32> to vector<128x128xf32>
    %108 = arith.mulf %103, %107 : vector<128x128xf32>
    %109 = vector.broadcast %0 : vector<1x128xf32> to vector<128x128xf32>
    %110 = arith.mulf %108, %109 : vector<128x128xf32>
    %111 = vector.broadcast %1 : vector<1x128xf32> to vector<128x128xf32>
    %112 = arith.addf %110, %111 : vector<128x128xf32>
    %c128_65 = arith.constant 128 : index
    %c0_66 = arith.constant 0 : index
    %113 = vector.load %arg7[%c128_65, %c0_66] : memref<256x128xf32, #tpu.memory_space<vmem>>, vector<128x128xf32>
    tpu.vector_store %arg7[%c128_65, %c0_66], %112 {strides = array<i32>} : memref<256x128xf32, #tpu.memory_space<vmem>>, vector<128x128xf32>,
    return
  }
  func.func @transform_0(%arg0: i32) -> (i32, i32) {
    %c0_i32 = arith.constant 0 : i32
    %c0_i32_0 = arith.constant 0 : i32
    return %arg0, %c0_i32 : i32, i32
  }
  func.func @transform_1(%arg0: i32) -> (i32, i32, i32) {
    %c0_i32 = arith.constant 0 : i32
    %c0_i32_0 = arith.constant 0 : i32
    %c0_i32_1 = arith.constant 0 : i32
    %c0_i32_2 = arith.constant 0 : i32
    return %c0_i32, %c0_i32_0, %c0_i32_1 : i32, i32, i32
  }
  func.func @transform_2(%arg0: i32) -> (i32, i32) {
    %c0_i32 = arith.constant 0 : i32
    %c0_i32_0 = arith.constant 0 : i32
    %c0_i32_1 = arith.constant 0 : i32
    return %c0_i32, %c0_i32_0 : i32, i32
  }
  func.func @transform_3(%arg0: i32) -> (i32, i32) {
    %c0_i32 = arith.constant 0 : i32
    %c0_i32_0 = arith.constant 0 : i32
    %c0_i32_1 = arith.constant 0 : i32
    return %c0_i32, %c0_i32_0 : i32, i32
  }
  func.func @transform_4(%arg0: i32) -> (i32, i32) {
    %c0_i32 = arith.constant 0 : i32
    %c0_i32_0 = arith.constant 0 : i32
    %c0_i32_1 = arith.constant 0 : i32
    return %c0_i32, %c0_i32_0 : i32, i32
  }
  func.func @transform_5(%arg0: i32) -> (i32, i32) {
    %c0_i32 = arith.constant 0 : i32
    %c0_i32_0 = arith.constant 0 : i32
    %c0_i32_1 = arith.constant 0 : i32
    return %c0_i32, %c0_i32_0 : i32, i32
  }
  func.func @transform_6(%arg0: i32) -> (i32, i32) {
    %c0_i32 = arith.constant 0 : i32
    %c0_i32_0 = arith.constant 0 : i32
    return %arg0, %c0_i32 : i32, i32
  }
}

</mosaic_0001>

<llo_original>
// kernel: tpu_custom_call.1
$region0: #{tpu_custom_call.1}
  #allocation0 [shape = 'u32[]', space=smem, size = 0x4, offset = 0x4, fixed_abs, tag = 'smem constant byte address 0x4 - core index']
  #allocation1 [shape = 'u32[144,128]{1,0:T(1,128)}', space=vmem, size = 0x12000, scoped, tag = 'internal scratch']
  %s0 = inlined_call_operand.hbm [shape: f32[256,128], index: 0, kind: input, shape index: {}]
  %s1 = inlined_call_operand.hbm [shape: bf16[3,128,128], index: 1, kind: input, shape index: {}]
  %s2 = inlined_call_operand.vmem [shape: f32[3,128], index: 2, kind: input, shape index: {}]
  %s3 = inlined_call_operand.hbm [shape: bf16[128,128], index: 3, kind: input, shape index: {}]
  %s4 = inlined_call_operand.vmem [shape: f32[1,128], index: 4, kind: input, shape index: {}]
  %s5 = inlined_call_operand.vmem [shape: f32[1,128], index: 5, kind: input, shape index: {}]
  %s6 = inlined_call_operand.hbm [shape: f32[256,128], index: 6, kind: output, shape index: {}]
  %s7 = sld [smem:[#allocation0]]
  $region46: #{tpu_custom_call.1} parent=0
    _
  %s9 = ssub.s32 1, %s7
  %s10 = scalar_select 0, %s9, %s7
  $region1: #{tpu_custom_call.1} parent=0
    #allocation2 [shape = 'u8[131072]{0}', space=vmem, size = 0x20000, scoped, tag = 'input window, operand 0, single buffered']
    #allocation3 [shape = 's32[1]{0}', space=sflag, size = 0x4, scoped, tag = 'scoped memory for tpu_custom_call.1']
    #allocation4 [shape = 's32[1]{0}', space=sflag, size = 0x4, scoped, tag = 'scoped memory for tpu_custom_call.1']
    #allocation5 [shape = 'u8[98304]{0}', space=vmem, size = 0x18000, scoped, tag = 'input window, operand 1, single buffered']
    #allocation6 [shape = 's32[1]{0}', space=sflag, size = 0x4, scoped, tag = 'scoped memory for tpu_custom_call.1']
    #allocation7 [shape = 'u8[32768]{0}', space=vmem, size = 0x8000, scoped, tag = 'input window, operand 3, single buffered']
    #allocation8 [shape = 'u8[131072]{0}', space=vmem, size = 0x20000, scoped, tag = 'output window, operand 0, single buffered']
    %11 = vsyncpa [#allocation3], 0
    %12 = vsyncpa [#allocation6], 0
    %13 = vsyncpa [#allocation4], 0
    // Predicated region
    $region2: #{tpu_custom_call.1} parent=1 // pred_check
      _
    $region3: #{tpu_custom_call.1} parent=1 // pred_check_branch
      %15 = sbr.rel (0) target = $region5
    $region4: #{tpu_custom_call.1} parent=1 // pred_region
      %s17 = ssub.s32 4096, 4096
      %18 = vsyncadd [#allocation3], %s17
      %s19 = sshll.u32 [#allocation2], 4
      %s20 = int_to_ptr.vmem [resolvable:$true] %s19
      %25 = dma.hbm_to_vmem [thread:$0]  %s0, 4096, %s20, [#allocation3], 128, 128, 8
    $region5: #{tpu_custom_call.1} parent=1 // pred_fallthru
      _
    // Predicated region
    $region6: #{tpu_custom_call.1} parent=1 // pred_check
      _
    $region7: #{tpu_custom_call.1} parent=1 // pred_check_branch
      %27 = sbr.rel (0) target = $region9
    $region8: #{tpu_custom_call.1} parent=1 // pred_region
      %s29 = ssub.s32 3072, 3072
      %30 = vsyncadd [#allocation6], %s29
      %s31 = sshll.u32 [#allocation5], 4
      %s32 = int_to_ptr.vmem [resolvable:$true] %s31
      %37 = dma.hbm_to_vmem [thread:$0]  %s1, 3072, %s32, [#allocation6], 64, 64, 4
    $region9: #{tpu_custom_call.1} parent=1 // pred_fallthru
      _
    // Predicated region
    $region10: #{tpu_custom_call.1} parent=1 // pred_check
      _
    $region11: #{tpu_custom_call.1} parent=1 // pred_check_branch
      %39 = sbr.rel (0) target = $region13
    $region12: #{tpu_custom_call.1} parent=1 // pred_region
      _
    $region13: #{tpu_custom_call.1} parent=1 // pred_fallthru
      _
    // Predicated region
    $region14: #{tpu_custom_call.1} parent=1 // pred_check
      _
    $region15: #{tpu_custom_call.1} parent=1 // pred_check_branch
      %41 = sbr.rel (0) target = $region17
    $region16: #{tpu_custom_call.1} parent=1 // pred_region
      %s43 = ssub.s32 1024, 1024
      %44 = vsyncadd [#allocation6], %s43
      %s45 = sshll.u32 [#allocation7], 4
      %s46 = int_to_ptr.vmem [resolvable:$true] %s45
      %51 = dma.hbm_to_vmem [thread:$0]  %s3, 1024, %s46, [#allocation6], 64, 64, 4
    $region17: #{tpu_custom_call.1} parent=1 // pred_fallthru
      _
    // Predicated region
    $region18: #{tpu_custom_call.1} parent=1 // pred_check
      _
    $region19: #{tpu_custom_call.1} parent=1 // pred_check_branch
      %53 = sbr.rel (0) target = $region21
    $region20: #{tpu_custom_call.1} parent=1 // pred_region
      _
    $region21: #{tpu_custom_call.1} parent=1 // pred_fallthru
      _
    // Predicated region
    $region22: #{tpu_custom_call.1} parent=1 // pred_check
      _
    $region23: #{tpu_custom_call.1} parent=1 // pred_check_branch
      %55 = sbr.rel (0) target = $region25
    $region24: #{tpu_custom_call.1} parent=1 // pred_region
      _
    $region25: #{tpu_custom_call.1} parent=1 // pred_fallthru
      _
    // Predicated region
    $region26: #{tpu_custom_call.1} parent=1 // pred_check
      _
    $region27: #{tpu_custom_call.1} parent=1 // pred_check_branch
      %57 = sbr.rel (0) target = $region29
    $region28: #{tpu_custom_call.1} parent=1 // pred_region
      %58 = dma.done [#allocation3], 4096
    $region29: #{tpu_custom_call.1} parent=1 // pred_fallthru
      _
    // Predicated region
    $region30: #{tpu_custom_call.1} parent=1 // pred_check
      _
    $region31: #{tpu_custom_call.1} parent=1 // pred_check_branch
      %60 = sbr.rel (0) target = $region33
    $region32: #{tpu_custom_call.1} parent=1 // pred_region
      %61 = dma.done [#allocation6], 3072
    $region33: #{tpu_custom_call.1} parent=1 // pred_fallthru
      _
    // Predicated region
    $region34: #{tpu_custom_call.1} parent=1 // pred_check
      _
    $region35: #{tpu_custom_call.1} parent=1 // pred_check_branch
      %63 = sbr.rel (0) target = $region37
    $region36: #{tpu_custom_call.1} parent=1 // pred_region
      %64 = dma.done [#allocation6], 1024
    $region37: #{tpu_custom_call.1} parent=1 // pred_fallthru
      _
    %v66 = vld [vmem:[%s4] sm:$0x1]
    %v67 = vld [vmem:[%s5] sm:$0x1]
    %v68 = vld [vmem:[#allocation2] sm:$0xff]
    %v69 = vld [vmem:[#allocation2 + $0x8] sm:$0xff]
    %v70 = vld [vmem:[#allocation2 + $0x10] sm:$0xff]
    %v71 = vld [vmem:[#allocation2 + $0x18] sm:$0xff]
    %v72 = vld [vmem:[#allocation2 + $0x20] sm:$0xff]
    %v73 = vld [vmem:[#allocation2 + $0x28] sm:$0xff]
    %v74 = vld [vmem:[#allocation2 + $0x30] sm:$0xff]
    %v75 = vld [vmem:[#allocation2 + $0x38] sm:$0xff]
    %v76 = vld [vmem:[#allocation2 + $0x40] sm:$0xff]
    %v77 = vld [vmem:[#allocation2 + $0x48] sm:$0xff]
    %v78 = vld [vmem:[#allocation2 + $0x50] sm:$0xff]
    %v79 = vld [vmem:[#allocation2 + $0x58] sm:$0xff]
    %v80 = vld [vmem:[#allocation2 + $0x60] sm:$0xff]
    %v81 = vld [vmem:[#allocation2 + $0x68] sm:$0xff]
    %v82 = vld [vmem:[#allocation2 + $0x70] sm:$0xff]
    %v83 = vld [vmem:[#allocation2 + $0x78] sm:$0xff]
    %v84 = vpack.c.bf16 %v69, %v68
    %v85 = vpack.c.bf16 %v71, %v70
    %v86 = vpack.c.bf16 %v73, %v72
    %v87 = vpack.c.bf16 %v75, %v74
    %v88 = vpack.c.bf16 %v77, %v76
    %v89 = vpack.c.bf16 %v79, %v78
    %v90 = vpack.c.bf16 %v81, %v80
    %v91 = vpack.c.bf16 %v83, %v82
    %v92 = vld [vmem:[#allocation5] sm:$0xf]
    %v93 = vld [vmem:[#allocation5 + $0x4] sm:$0xf]
    %v94 = vld [vmem:[#allocation5 + $0x8] sm:$0xf]
    %v95 = vld [vmem:[#allocation5 + $0xc] sm:$0xf]
    %v96 = vld [vmem:[#allocation5 + $0x10] sm:$0xf]
    %v97 = vld [vmem:[#allocation5 + $0x14] sm:$0xf]
    %v98 = vld [vmem:[#allocation5 + $0x18] sm:$0xf]
    %v99 = vld [vmem:[#allocation5 + $0x1c] sm:$0xf]
    %v100 = vld [vmem:[#allocation5 + $0x20] sm:$0xf]
    %v101 = vld [vmem:[#allocation5 + $0x24] sm:$0xf]
    %v102 = vld [vmem:[#allocation5 + $0x28] sm:$0xf]
    %v103 = vld [vmem:[#allocation5 + $0x2c] sm:$0xf]
    %v104 = vld [vmem:[#allocation5 + $0x30] sm:$0xf]
    %v105 = vld [vmem:[#allocation5 + $0x34] sm:$0xf]
    %v106 = vld [vmem:[#allocation5 + $0x38] sm:$0xf]
    %v107 = vld [vmem:[#allocation5 + $0x3c] sm:$0xf]
    %v108 = vld [vmem:[%s2] sm:$0x1]
    %v109 = vlaneseq
    %v110 = vshrl.u32 %v109, 7
    %v111 = vsub.s32 0, %v110
    %v112 = vrot.slane %v108, %v111
    %v129 = vunpack.c.l.b16 %v92
    %v130 = vunpack.c.l.b16 %v93
    %v131 = vunpack.c.l.b16 %v94
    %v132 = vunpack.c.l.b16 %v95
    %v133 = vunpack.c.l.b16 %v96
    %v134 = vunpack.c.l.b16 %v97
    %v135 = vunpack.c.l.b16 %v98
    %v136 = vunpack.c.l.b16 %v99
    %v137 = vunpack.c.l.b16 %v100
    %v138 = vunpack.c.l.b16 %v101
    %v139 = vunpack.c.l.b16 %v102
    %v140 = vunpack.c.l.b16 %v103
    %v141 = vunpack.c.l.b16 %v104
    %v142 = vunpack.c.l.b16 %v105
    %v143 = vunpack.c.l.b16 %v106
    %v144 = vunpack.c.l.b16 %v107
    %v145 = vpack.c.b16 %v130, %v129
    %v146 = vpack.c.b16 %v132, %v131
    %v147 = vpack.c.b16 %v134, %v133
    %v148 = vpack.c.b16 %v136, %v135
    %v149 = vpack.c.b16 %v138, %v137
    %v150 = vpack.c.b16 %v140, %v139
    %v151 = vpack.c.b16 %v142, %v141
    %v152 = vpack.c.b16 %v144, %v143
    %161 = vmatprep.subr.bf16.mxu0 0
    %162 = vmatpush1.bf16.msra.mxu0 %v145
    %163 = vmatprep.subr.bf16.mxu0 0
    %164 = vmatpush1.bf16.msra.mxu0 %v146
    %165 = vmatprep.subr.bf16.mxu0 0
    %166 = vmatpush1.bf16.msra.mxu0 %v147
    %167 = vmatprep.subr.bf16.mxu0 0
    %168 = vmatpush1.bf16.msra.mxu0 %v148
    %169 = vmatprep.subr.bf16.mxu0 0
    %170 = vmatpush1.bf16.msra.mxu0 %v149
    %171 = vmatprep.subr.bf16.mxu0 0
    %172 = vmatpush1.bf16.msra.mxu0 %v150
    %173 = vmatprep.subr.bf16.mxu0 0
    %174 = vmatpush1.bf16.msra.mxu0 %v151
    %175 = vmatprep.subr.bf16.mxu0 0
    %176 = vmatpush1.bf16.msra.mxu0 %v152
    %177 = vmatprep.subr.bf16.mxu0 0
    %178 = vmatpush1.bf16.msra.mxu0 0
    %179 = vmatprep.subr.bf16.mxu0 0
    %180 = vmatpush1.bf16.msra.mxu0 0
    %181 = vmatprep.subr.bf16.mxu0 0
    %182 = vmatpush1.bf16.msra.mxu0 0
    %183 = vmatprep.subr.bf16.mxu0 0
    %184 = vmatpush1.bf16.msra.mxu0 0
    %185 = vmatprep.subr.bf16.mxu0 0
    %186 = vmatpush1.bf16.msra.mxu0 0
    %187 = vmatprep.subr.bf16.mxu0 0
    %188 = vmatpush1.bf16.msra.mxu0 0
    %189 = vmatprep.subr.bf16.mxu0 0
    %190 = vmatpush1.bf16.msra.mxu0 0
    %191 = vmatprep.subr.bf16.mxu0 0
    %192 = vmatpush1.bf16.msra.mxu0 0
    %193 = vmatprep.mubr.bf16.mxu0 0
    %194 = vmatmul.mubr.bf16.gmra.mrb[0].mxu0 %v84
    %v195 = vpop.f32.mrb[0].mxu0
    %v196 = vadd.f32 %v112, %v195
    %v197 = vpop.f32.mrb[0].mxu0
    %v198 = vpop.f32.mrb[0].mxu0
    %v199 = vadd.f32 %v112, %v198
    %v200 = vpop.f32.mrb[0].mxu0
    %201 = vmatprep.mubr.bf16.mxu0 0
    %202 = vmatmul.mubr.bf16.gmra.mrb[0].mxu0 %v85
    %v203 = vpop.f32.mrb[0].mxu0
    %v204 = vadd.f32 %v112, %v203
    %v205 = vpop.f32.mrb[0].mxu0
    %v206 = vpop.f32.mrb[0].mxu0
    %v207 = vadd.f32 %v112, %v206
    %v208 = vpop.f32.mrb[0].mxu0
    %209 = vmatprep.mubr.bf16.mxu0 0
    %210 = vmatmul.mubr.bf16.gmra.mrb[0].mxu0 %v86
    %v211 = vpop.f32.mrb[0].mxu0
    %v212 = vadd.f32 %v112, %v211
    %v213 = vpop.f32.mrb[0].mxu0
    %v214 = vpop.f32.mrb[0].mxu0
    %v215 = vadd.f32 %v112, %v214
    %v216 = vpop.f32.mrb[0].mxu0
    %217 = vmatprep.mubr.bf16.mxu0 0
    %218 = vmatmul.mubr.bf16.gmra.mrb[0].mxu0 %v87
    %v219 = vpop.f32.mrb[0].mxu0
    %v220 = vadd.f32 %v112, %v219
    %v221 = vpop.f32.mrb[0].mxu0
    %v222 = vpop.f32.mrb[0].mxu0
    %v223 = vadd.f32 %v112, %v222
    %v224 = vpop.f32.mrb[0].mxu0
    %225 = vmatprep.mubr.bf16.mxu0 0
    %226 = vmatmul.mubr.bf16.gmra.mrb[0].mxu0 %v88
    %v227 = vpop.f32.mrb[0].mxu0
    %v228 = vadd.f32 %v112, %v227
    %v229 = vpop.f32.mrb[0].mxu0
    %v230 = vpop.f32.mrb[0].mxu0
    %v231 = vadd.f32 %v112, %v230
    %v232 = vpop.f32.mrb[0].mxu0
    %233 = vmatprep.mubr.bf16.mxu0 0
    %234 = vmatmul.mubr.bf16.gmra.mrb[0].mxu0 %v89
    %v235 = vpop.f32.mrb[0].mxu0
    %v236 = vadd.f32 %v112, %v235
    %v237 = vpop.f32.mrb[0].mxu0
    %v238 = vpop.f32.mrb[0].mxu0
    %v239 = vadd.f32 %v112, %v238
    %v240 = vpop.f32.mrb[0].mxu0
    %241 = vmatprep.mubr.bf16.mxu0 0
    %242 = vmatmul.mubr.bf16.gmra.mrb[0].mxu0 %v90
    %v243 = vpop.f32.mrb[0].mxu0
    %v244 = vadd.f32 %v112, %v243
    %v245 = vpop.f32.mrb[0].mxu0
    %v246 = vpop.f32.mrb[0].mxu0
    %v247 = vadd.f32 %v112, %v246
    %v248 = vpop.f32.mrb[0].mxu0
    %249 = vmatprep.mubr.bf16.mxu0 0
    %250 = vmatmul.mubr.bf16.gmra.mrb[0].mxu0 %v91
    %v251 = vpop.f32.mrb[0].mxu0
    %v252 = vadd.f32 %v112, %v251
    %v253 = vpop.f32.mrb[0].mxu0
    %v254 = vpop.f32.mrb[0].mxu0
    %v255 = vadd.f32 %v112, %v254
    %v256 = vpop.f32.mrb[0].mxu0
    %257 = vdwg.mxu0
    %v258 = vmax.f32 %v196, 0.0
    %v259 = vmax.f32 %v199, 0.0
    %v260 = vmax.f32 %v204, 0.0
    %v261 = vmax.f32 %v207, 0.0
    %v262 = vmax.f32 %v212, 0.0
    %v263 = vmax.f32 %v215, 0.0
    %v264 = vmax.f32 %v220, 0.0
    %v265 = vmax.f32 %v223, 0.0
    %v266 = vmax.f32 %v228, 0.0
    %v267 = vmax.f32 %v231, 0.0
    %v268 = vmax.f32 %v236, 0.0
    %v269 = vmax.f32 %v239, 0.0
    %v270 = vmax.f32 %v244, 0.0
    %v271 = vmax.f32 %v247, 0.0
    %v272 = vmax.f32 %v252, 0.0
    %v273 = vmax.f32 %v255, 0.0
    %v274 = vpack.c.bf16 %v259, %v258
    %v275 = vpack.c.bf16 %v261, %v260
    %v276 = vpack.c.bf16 %v263, %v262
    %v277 = vpack.c.bf16 %v265, %v264
    %v278 = vpack.c.bf16 %v267, %v266
    %v279 = vpack.c.bf16 %v269, %v268
    %v280 = vpack.c.bf16 %v271, %v270
    %v281 = vpack.c.bf16 %v273, %v272
    %s282 = scalar_lea.vmem [#allocation5], 64
    %v283 = vld [vmem:[%s282] sm:$0xf]
    %v284 = vld [vmem:[%s282 + $0x4] sm:$0xf]
    %v285 = vld [vmem:[%s282 + $0x8] sm:$0xf]
    %v286 = vld [vmem:[%s282 + $0xc] sm:$0xf]
    %v287 = vld [vmem:[%s282 + $0x10] sm:$0xf]
    %v288 = vld [vmem:[%s282 + $0x14] sm:$0xf]
    %v289 = vld [vmem:[%s282 + $0x18] sm:$0xf]
    %v290 = vld [vmem:[%s282 + $0x1c] sm:$0xf]
    %v291 = vld [vmem:[%s282 + $0x20] sm:$0xf]
    %v292 = vld [vmem:[%s282 + $0x24] sm:$0xf]
    %v293 = vld [vmem:[%s282 + $0x28] sm:$0xf]
    %v294 = vld [vmem:[%s282 + $0x2c] sm:$0xf]
    %v295 = vld [vmem:[%s282 + $0x30] sm:$0xf]
    %v296 = vld [vmem:[%s282 + $0x34] sm:$0xf]
    %v297 = vld [vmem:[%s282 + $0x38] sm:$0xf]
    %v298 = vld [vmem:[%s282 + $0x3c] sm:$0xf]
    %v299 = vld [vmem:[%s2 + $0x1] sm:$0x1]
    %v300 = vlaneseq
    %v301 = vshrl.u32 %v300, 7
    %v302 = vsub.s32 0, %v301
    %v303 = vrot.slane %v299, %v302
    %v320 = vunpack.c.l.b16 %v283
    %v321 = vunpack.c.l.b16 %v284
    %v322 = vunpack.c.l.b16 %v285
    %v323 = vunpack.c.l.b16 %v286
    %v324 = vunpack.c.l.b16 %v287
    %v325 = vunpack.c.l.b16 %v288
    %v326 = vunpack.c.l.b16 %v289
    %v327 = vunpack.c.l.b16 %v290
    %v328 = vunpack.c.l.b16 %v291
    %v329 = vunpack.c.l.b16 %v292
    %v330 = vunpack.c.l.b16 %v293
    %v331 = vunpack.c.l.b16 %v294
    %v332 = vunpack.c.l.b16 %v295
    %v333 = vunpack.c.l.b16 %v296
    %v334 = vunpack.c.l.b16 %v297
    %v335 = vunpack.c.l.b16 %v298
    %v336 = vpack.c.b16 %v321, %v320
    %v337 = vpack.c.b16 %v323, %v322
    %v338 = vpack.c.b16 %v325, %v324
    %v339 = vpack.c.b16 %v327, %v326
    %v340 = vpack.c.b16 %v329, %v328
    %v341 = vpack.c.b16 %v331, %v330
    %v342 = vpack.c.b16 %v333, %v332
    %v343 = vpack.c.b16 %v335, %v334
    %352 = vmatprep.subr.bf16.mxu0 0
    %353 = vmatpush1.bf16.msra.mxu0 %v336
    %354 = vmatprep.subr.bf16.mxu0 0
    %355 = vmatpush1.bf16.msra.mxu0 %v337
    %356 = vmatprep.subr.bf16.mxu0 0
    %357 = vmatpush1.bf16.msra.mxu0 %v338
    %358 = vmatprep.subr.bf16.mxu0 0
    %359 = vmatpush1.bf16.msra.mxu0 %v339
    %360 = vmatprep.subr.bf16.mxu0 0
    %361 = vmatpush1.bf16.msra.mxu0 %v340
    %362 = vmatprep.subr.bf16.mxu0 0
    %363 = vmatpush1.bf16.msra.mxu0 %v341
    %364 = vmatprep.subr.bf16.mxu0 0
    %365 = vmatpush1.bf16.msra.mxu0 %v342
    %366 = vmatprep.subr.bf16.mxu0 0
    %367 = vmatpush1.bf16.msra.mxu0 %v343
    %368 = vmatprep.subr.bf16.mxu0 0
    %369 = vmatpush1.bf16.msra.mxu0 0
    %370 = vmatprep.subr.bf16.mxu0 0
    %371 = vmatpush1.bf16.msra.mxu0 0
    %372 = vmatprep.subr.bf16.mxu0 0
    %373 = vmatpush1.bf16.msra.mxu0 0
    %374 = vmatprep.subr.bf16.mxu0 0
    %375 = vmatpush1.bf16.msra.mxu0 0
    %376 = vmatprep.subr.bf16.mxu0 0
    %377 = vmatpush1.bf16.msra.mxu0 0
    %378 = vmatprep.subr.bf16.mxu0 0
    %379 = vmatpush1.bf16.msra.mxu0 0
    %380 = vmatprep.subr.bf16.mxu0 0
    %381 = vmatpush1.bf16.msra.mxu0 0
    %382 = vmatprep.subr.bf16.mxu0 0
    %383 = vmatpush1.bf16.msra.mxu0 0
    %384 = vmatprep.mubr.bf16.mxu0 0
    %385 = vmatmul.mubr.bf16.gmra.mrb[0].mxu0 %v274
    %v386 = vpop.f32.mrb[0].mxu0
    %v387 = vadd.f32 %v303, %v386
    %v388 = vpop.f32.mrb[0].mxu0
    %v389 = vpop.f32.mrb[0].mxu0
    %v390 = vadd.f32 %v303, %v389
    %v391 = vpop.f32.mrb[0].mxu0
    %392 = vmatprep.mubr.bf16.mxu0 0
    %393 = vmatmul.mubr.bf16.gmra.mrb[0].mxu0 %v275
    %v394 = vpop.f32.mrb[0].mxu0
    %v395 = vadd.f32 %v303, %v394
    %v396 = vpop.f32.mrb[0].mxu0
    %v397 = vpop.f32.mrb[0].mxu0
    %v398 = vadd.f32 %v303, %v397
    %v399 = vpop.f32.mrb[0].mxu0
    %400 = vmatprep.mubr.bf16.mxu0 0
    %401 = vmatmul.mubr.bf16.gmra.mrb[0].mxu0 %v276
    %v402 = vpop.f32.mrb[0].mxu0
    %v403 = vadd.f32 %v303, %v402
    %v404 = vpop.f32.mrb[0].mxu0
    %v405 = vpop.f32.mrb[0].mxu0
    %v406 = vadd.f32 %v303, %v405
    %v407 = vpop.f32.mrb[0].mxu0
    %408 = vmatprep.mubr.bf16.mxu0 0
    %409 = vmatmul.mubr.bf16.gmra.mrb[0].mxu0 %v277
    %v410 = vpop.f32.mrb[0].mxu0
    %v411 = vadd.f32 %v303, %v410
    %v412 = vpop.f32.mrb[0].mxu0
    %v413 = vpop.f32.mrb[0].mxu0
    %v414 = vadd.f32 %v303, %v413
    %v415 = vpop.f32.mrb[0].mxu0
    %416 = vmatprep.mubr.bf16.mxu0 0
    %417 = vmatmul.mubr.bf16.gmra.mrb[0].mxu0 %v278
    %v418 = vpop.f32.mrb[0].mxu0
    %v419 = vadd.f32 %v303, %v418
    %v420 = vpop.f32.mrb[0].mxu0
    %v421 = vpop.f32.mrb[0].mxu0
    %v422 = vadd.f32 %v303, %v421
    %v423 = vpop.f32.mrb[0].mxu0
    %424 = vmatprep.mubr.bf16.mxu0 0
    %425 = vmatmul.mubr.bf16.gmra.mrb[0].mxu0 %v279
    %v426 = vpop.f32.mrb[0].mxu0
    %v427 = vadd.f32 %v303, %v426
    %v428 = vpop.f32.mrb[0].mxu0
    %v429 = vpop.f32.mrb[0].mxu0
    %v430 = vadd.f32 %v303, %v429
    %v431 = vpop.f32.mrb[0].mxu0
    %432 = vmatprep.mubr.bf16.mxu0 0
    %433 = vmatmul.mubr.bf16.gmra.mrb[0].mxu0 %v280
    %v434 = vpop.f32.mrb[0].mxu0
    %v435 = vadd.f32 %v303, %v434
    %v436 = vpop.f32.mrb[0].mxu0
    %v437 = vpop.f32.mrb[0].mxu0
    %v438 = vadd.f32 %v303, %v437
    %v439 = vpop.f32.mrb[0].mxu0
    %440 = vmatprep.mubr.bf16.mxu0 0
    %441 = vmatmul.mubr.bf16.gmra.mrb[0].mxu0 %v281
    %v442 = vpop.f32.mrb[0].mxu0
    %v443 = vadd.f32 %v303, %v442
    %v444 = vpop.f32.mrb[0].mxu0
    %v445 = vpop.f32.mrb[0].mxu0
    %v446 = vadd.f32 %v303, %v445
    %v447 = vpop.f32.mrb[0].mxu0
    %448 = vdwg.mxu0
    %v449 = vmax.f32 %v387, 0.0
    %v450 = vmax.f32 %v390, 0.0
    %v451 = vmax.f32 %v395, 0.0
    %v452 = vmax.f32 %v398, 0.0
    %v453 = vmax.f32 %v403, 0.0
    %v454 = vmax.f32 %v406, 0.0
    %v455 = vmax.f32 %v411, 0.0
    %v456 = vmax.f32 %v414, 0.0
    %v457 = vmax.f32 %v419, 0.0
    %v458 = vmax.f32 %v422, 0.0
    %v459 = vmax.f32 %v427, 0.0
    %v460 = vmax.f32 %v430, 0.0
    %v461 = vmax.f32 %v435, 0.0
    %v462 = vmax.f32 %v438, 0.0
    %v463 = vmax.f32 %v443, 0.0
    %v464 = vmax.f32 %v446, 0.0
    %v465 = vpack.c.bf16 %v450, %v449
    %v466 = vpack.c.bf16 %v452, %v451
    %v467 = vpack.c.bf16 %v454, %v453
    %v468 = vpack.c.bf16 %v456, %v455
    %v469 = vpack.c.bf16 %v458, %v457
    %v470 = vpack.c.bf16 %v460, %v459
    %v471 = vpack.c.bf16 %v462, %v461
    %v472 = vpack.c.bf16 %v464, %v463
    %s473 = scalar_lea.vmem [#allocation5], 128
    %v474 = vld [vmem:[%s473] sm:$0xf]
    %v475 = vld [vmem:[%s473 + $0x4] sm:$0xf]
    %v476 = vld [vmem:[%s473 + $0x8] sm:$0xf]
    %v477 = vld [vmem:[%s473 + $0xc] sm:$0xf]
    %v478 = vld [vmem:[%s473 + $0x10] sm:$0xf]
    %v479 = vld [vmem:[%s473 + $0x14] sm:$0xf]
    %v480 = vld [vmem:[%s473 + $0x18] sm:$0xf]
    %v481 = vld [vmem:[%s473 + $0x1c] sm:$0xf]
    %v482 = vld [vmem:[%s473 + $0x20] sm:$0xf]
    %v483 = vld [vmem:[%s473 + $0x24] sm:$0xf]
    %v484 = vld [vmem:[%s473 + $0x28] sm:$0xf]
    %v485 = vld [vmem:[%s473 + $0x2c] sm:$0xf]
    %v486 = vld [vmem:[%s473 + $0x30] sm:$0xf]
    %v487 = vld [vmem:[%s473 + $0x34] sm:$0xf]
    %v488 = vld [vmem:[%s473 + $0x38] sm:$0xf]
    %v489 = vld [vmem:[%s473 + $0x3c] sm:$0xf]
    %v490 = vld [vmem:[%s2 + $0x2] sm:$0x1]
    %v491 = vlaneseq
    %v492 = vshrl.u32 %v491, 7
    %v493 = vsub.s32 0, %v492
    %v494 = vrot.slane %v490, %v493
    %v511 = vunpack.c.l.b16 %v474
    %v512 = vunpack.c.l.b16 %v475
    %v513 = vunpack.c.l.b16 %v476
    %v514 = vunpack.c.l.b16 %v477
    %v515 = vunpack.c.l.b16 %v478
    %v516 = vunpack.c.l.b16 %v479
    %v517 = vunpack.c.l.b16 %v480
    %v518 = vunpack.c.l.b16 %v481
    %v519 = vunpack.c.l.b16 %v482
    %v520 = vunpack.c.l.b16 %v483
    %v521 = vunpack.c.l.b16 %v484
    %v522 = vunpack.c.l.b16 %v485
    %v523 = vunpack.c.l.b16 %v486
    %v524 = vunpack.c.l.b16 %v487
    %v525 = vunpack.c.l.b16 %v488
    %v526 = vunpack.c.l.b16 %v489
    %v527 = vpack.c.b16 %v512, %v511
    %v528 = vpack.c.b16 %v514, %v513
    %v529 = vpack.c.b16 %v516, %v515
    %v530 = vpack.c.b16 %v518, %v517
    %v531 = vpack.c.b16 %v520, %v519
    %v532 = vpack.c.b16 %v522, %v521
    %v533 = vpack.c.b16 %v524, %v523
    %v534 = vpack.c.b16 %v526, %v525
    %543 = vmatprep.subr.bf16.mxu0 0
    %544 = vmatpush1.bf16.msra.mxu0 %v527
    %545 = vmatprep.subr.bf16.mxu0 0
    %546 = vmatpush1.bf16.msra.mxu0 %v528
    %547 = vmatprep.subr.bf16.mxu0 0
    %548 = vmatpush1.bf16.msra.mxu0 %v529
    %549 = vmatprep.subr.bf16.mxu0 0
    %550 = vmatpush1.bf16.msra.mxu0 %v530
    %551 = vmatprep.subr.bf16.mxu0 0
    %552 = vmatpush1.bf16.msra.mxu0 %v531
    %553 = vmatprep.subr.bf16.mxu0 0
    %554 = vmatpush1.bf16.msra.mxu0 %v532
    %555 = vmatprep.subr.bf16.mxu0 0
    %556 = vmatpush1.bf16.msra.mxu0 %v533
    %557 = vmatprep.subr.bf16.mxu0 0
    %558 = vmatpush1.bf16.msra.mxu0 %v534
    %559 = vmatprep.subr.bf16.mxu0 0
    %560 = vmatpush1.bf16.msra.mxu0 0
    %561 = vmatprep.subr.bf16.mxu0 0
    %562 = vmatpush1.bf16.msra.mxu0 0
    %563 = vmatprep.subr.bf16.mxu0 0
    %564 = vmatpush1.bf16.msra.mxu0 0
    %565 = vmatprep.subr.bf16.mxu0 0
    %566 = vmatpush1.bf16.msra.mxu0 0
    %567 = vmatprep.subr.bf16.mxu0 0
    %568 = vmatpush1.bf16.msra.mxu0 0
    %569 = vmatprep.subr.bf16.mxu0 0
    %570 = vmatpush1.bf16.msra.mxu0 0
    %571 = vmatprep.subr.bf16.mxu0 0
    %572 = vmatpush1.bf16.msra.mxu0 0
    %573 = vmatprep.subr.bf16.mxu0 0
    %574 = vmatpush1.bf16.msra.mxu0 0
    %575 = vmatprep.mubr.bf16.mxu0 0
    %576 = vmatmul.mubr.bf16.gmra.mrb[0].mxu0 %v465
    %v577 = vpop.f32.mrb[0].mxu0
    %v578 = vadd.f32 %v494, %v577
    %v579 = vpop.f32.mrb[0].mxu0
    %v580 = vpop.f32.mrb[0].mxu0
    %v581 = vadd.f32 %v494, %v580
    %v582 = vpop.f32.mrb[0].mxu0
    %583 = vmatprep.mubr.bf16.mxu0 0
    %584 = vmatmul.mubr.bf16.gmra.mrb[0].mxu0 %v466
    %v585 = vpop.f32.mrb[0].mxu0
    %v586 = vadd.f32 %v494, %v585
    %v587 = vpop.f32.mrb[0].mxu0
    %v588 = vpop.f32.mrb[0].mxu0
    %v589 = vadd.f32 %v494, %v588
    %v590 = vpop.f32.mrb[0].mxu0
    %591 = vmatprep.mubr.bf16.mxu0 0
    %592 = vmatmul.mubr.bf16.gmra.mrb[0].mxu0 %v467
    %v593 = vpop.f32.mrb[0].mxu0
    %v594 = vadd.f32 %v494, %v593
    %v595 = vpop.f32.mrb[0].mxu0
    %v596 = vpop.f32.mrb[0].mxu0
    %v597 = vadd.f32 %v494, %v596
    %v598 = vpop.f32.mrb[0].mxu0
    %599 = vmatprep.mubr.bf16.mxu0 0
    %600 = vmatmul.mubr.bf16.gmra.mrb[0].mxu0 %v468
    %v601 = vpop.f32.mrb[0].mxu0
    %v602 = vadd.f32 %v494, %v601
    %v603 = vpop.f32.mrb[0].mxu0
    %v604 = vpop.f32.mrb[0].mxu0
    %v605 = vadd.f32 %v494, %v604
    %v606 = vpop.f32.mrb[0].mxu0
    %607 = vmatprep.mubr.bf16.mxu0 0
    %608 = vmatmul.mubr.bf16.gmra.mrb[0].mxu0 %v469
    %v609 = vpop.f32.mrb[0].mxu0
    %v610 = vadd.f32 %v494, %v609
    %v611 = vpop.f32.mrb[0].mxu0
    %v612 = vpop.f32.mrb[0].mxu0
    %v613 = vadd.f32 %v494, %v612
    %v614 = vpop.f32.mrb[0].mxu0
    %615 = vmatprep.mubr.bf16.mxu0 0
    %616 = vmatmul.mubr.bf16.gmra.mrb[0].mxu0 %v470
    %v617 = vpop.f32.mrb[0].mxu0
    %v618 = vadd.f32 %v494, %v617
    %v619 = vpop.f32.mrb[0].mxu0
    %v620 = vpop.f32.mrb[0].mxu0
    %v621 = vadd.f32 %v494, %v620
    %v622 = vpop.f32.mrb[0].mxu0
    %623 = vmatprep.mubr.bf16.mxu0 0
    %624 = vmatmul.mubr.bf16.gmra.mrb[0].mxu0 %v471
    %v625 = vpop.f32.mrb[0].mxu0
    %v626 = vadd.f32 %v494, %v625
    %v627 = vpop.f32.mrb[0].mxu0
    %v628 = vpop.f32.mrb[0].mxu0
    %v629 = vadd.f32 %v494, %v628
    %v630 = vpop.f32.mrb[0].mxu0
    %631 = vmatprep.mubr.bf16.mxu0 0
    %632 = vmatmul.mubr.bf16.gmra.mrb[0].mxu0 %v472
    %v633 = vpop.f32.mrb[0].mxu0
    %v634 = vadd.f32 %v494, %v633
    %v635 = vpop.f32.mrb[0].mxu0
    %v636 = vpop.f32.mrb[0].mxu0
    %v637 = vadd.f32 %v494, %v636
    %v638 = vpop.f32.mrb[0].mxu0
    %639 = vdwg.mxu0
    %v640 = vmax.f32 %v578, 0.0
    %v641 = vmax.f32 %v581, 0.0
    %v642 = vmax.f32 %v586, 0.0
    %v643 = vmax.f32 %v589, 0.0
    %v644 = vmax.f32 %v594, 0.0
    %v645 = vmax.f32 %v597, 0.0
    %v646 = vmax.f32 %v602, 0.0
    %v647 = vmax.f32 %v605, 0.0
    %v648 = vmax.f32 %v610, 0.0
    %v649 = vmax.f32 %v613, 0.0
    %v650 = vmax.f32 %v618, 0.0
    %v651 = vmax.f32 %v621, 0.0
    %v652 = vmax.f32 %v626, 0.0
    %v653 = vmax.f32 %v629, 0.0
    %v654 = vmax.f32 %v634, 0.0
    %v655 = vmax.f32 %v637, 0.0
    %v656 = vpack.c.bf16 %v641, %v640
    %v657 = vpack.c.bf16 %v643, %v642
    %v658 = vpack.c.bf16 %v645, %v644
    %v659 = vpack.c.bf16 %v647, %v646
    %v660 = vpack.c.bf16 %v649, %v648
    %v661 = vpack.c.bf16 %v651, %v650
    %v662 = vpack.c.bf16 %v653, %v652
    %v663 = vpack.c.bf16 %v655, %v654
    %v664 = vld [vmem:[#allocation7] sm:$0xf]
    %v665 = vld [vmem:[#allocation7 + $0x4] sm:$0xf]
    %v666 = vld [vmem:[#allocation7 + $0x8] sm:$0xf]
    %v667 = vld [vmem:[#allocation7 + $0xc] sm:$0xf]
    %v668 = vld [vmem:[#allocation7 + $0x10] sm:$0xf]
    %v669 = vld [vmem:[#allocation7 + $0x14] sm:$0xf]
    %v670 = vld [vmem:[#allocation7 + $0x18] sm:$0xf]
    %v671 = vld [vmem:[#allocation7 + $0x1c] sm:$0xf]
    %v672 = vld [vmem:[#allocation7 + $0x20] sm:$0xf]
    %v673 = vld [vmem:[#allocation7 + $0x24] sm:$0xf]
    %v674 = vld [vmem:[#allocation7 + $0x28] sm:$0xf]
    %v675 = vld [vmem:[#allocation7 + $0x2c] sm:$0xf]
    %v676 = vld [vmem:[#allocation7 + $0x30] sm:$0xf]
    %v677 = vld [vmem:[#allocation7 + $0x34] sm:$0xf]
    %v678 = vld [vmem:[#allocation7 + $0x38] sm:$0xf]
    %v679 = vld [vmem:[#allocation7 + $0x3c] sm:$0xf]
    %v696 = vunpack.c.l.b16 %v664
    %v697 = vunpack.c.l.b16 %v665
    %v698 = vunpack.c.l.b16 %v666
    %v699 = vunpack.c.l.b16 %v667
    %v700 = vunpack.c.l.b16 %v668
    %v701 = vunpack.c.l.b16 %v669
    %v702 = vunpack.c.l.b16 %v670
    %v703 = vunpack.c.l.b16 %v671
    %v704 = vunpack.c.l.b16 %v672
    %v705 = vunpack.c.l.b16 %v673
    %v706 = vunpack.c.l.b16 %v674
    %v707 = vunpack.c.l.b16 %v675
    %v708 = vunpack.c.l.b16 %v676
    %v709 = vunpack.c.l.b16 %v677
    %v710 = vunpack.c.l.b16 %v678
    %v711 = vunpack.c.l.b16 %v679
    %v712 = vpack.c.b16 %v697, %v696
    %v713 = vpack.c.b16 %v699, %v698
    %v714 = vpack.c.b16 %v701, %v700
    %v715 = vpack.c.b16 %v703, %v702
    %v716 = vpack.c.b16 %v705, %v704
    %v717 = vpack.c.b16 %v707, %v706
    %v718 = vpack.c.b16 %v709, %v708
    %v719 = vpack.c.b16 %v711, %v710
    %728 = vmatprep.subr.bf16.mxu0 0
    %729 = vmatpush1.bf16.msra.mxu0 %v712
    %730 = vmatprep.subr.bf16.mxu0 0
    %731 = vmatpush1.bf16.msra.mxu0 %v713
    %732 = vmatprep.subr.bf16.mxu0 0
    %733 = vmatpush1.bf16.msra.mxu0 %v714
    %734 = vmatprep.subr.bf16.mxu0 0
    %735 = vmatpush1.bf16.msra.mxu0 %v715
    %736 = vmatprep.subr.bf16.mxu0 0
    %737 = vmatpush1.bf16.msra.mxu0 %v716
    %738 = vmatprep.subr.bf16.mxu0 0
    %739 = vmatpush1.bf16.msra.mxu0 %v717
    %740 = vmatprep.subr.bf16.mxu0 0
    %741 = vmatpush1.bf16.msra.mxu0 %v718
    %742 = vmatprep.subr.bf16.mxu0 0
    %743 = vmatpush1.bf16.msra.mxu0 %v719
    %744 = vmatprep.subr.bf16.mxu0 0
    %745 = vmatpush1.bf16.msra.mxu0 0
    %746 = vmatprep.subr.bf16.mxu0 0
    %747 = vmatpush1.bf16.msra.mxu0 0
    %748 = vmatprep.subr.bf16.mxu0 0
    %749 = vmatpush1.bf16.msra.mxu0 0
    %750 = vmatprep.subr.bf16.mxu0 0
    %751 = vmatpush1.bf16.msra.mxu0 0
    %752 = vmatprep.subr.bf16.mxu0 0
    %753 = vmatpush1.bf16.msra.mxu0 0
    %754 = vmatprep.subr.bf16.mxu0 0
    %755 = vmatpush1.bf16.msra.mxu0 0
    %756 = vmatprep.subr.bf16.mxu0 0
    %757 = vmatpush1.bf16.msra.mxu0 0
    %758 = vmatprep.subr.bf16.mxu0 0
    %759 = vmatpush1.bf16.msra.mxu0 0
    %760 = vmatprep.mubr.bf16.mxu0 0
    %761 = vmatmul.mubr.bf16.gmra.mrb[0].mxu0 %v656
    %v762 = vpop.f32.mrb[0].mxu0
    %v763 = vadd.f32 0.0, %v762
    %v764 = vpop.f32.mrb[0].mxu0
    %v765 = vpop.f32.mrb[0].mxu0
    %v766 = vadd.f32 0.0, %v765
    %v767 = vpop.f32.mrb[0].mxu0
    %768 = vmatprep.mubr.bf16.mxu0 0
    %769 = vmatmul.mubr.bf16.gmra.mrb[0].mxu0 %v657
    %v770 = vpop.f32.mrb[0].mxu0
    %v771 = vadd.f32 0.0, %v770
    %v772 = vpop.f32.mrb[0].mxu0
    %v773 = vpop.f32.mrb[0].mxu0
    %v774 = vadd.f32 0.0, %v773
    %v775 = vpop.f32.mrb[0].mxu0
    %776 = vmatprep.mubr.bf16.mxu0 0
    %777 = vmatmul.mubr.bf16.gmra.mrb[0].mxu0 %v658
    %v778 = vpop.f32.mrb[0].mxu0
    %v779 = vadd.f32 0.0, %v778
    %v780 = vpop.f32.mrb[0].mxu0
    %v781 = vpop.f32.mrb[0].mxu0
    %v782 = vadd.f32 0.0, %v781
    %v783 = vpop.f32.mrb[0].mxu0
    %784 = vmatprep.mubr.bf16.mxu0 0
    %785 = vmatmul.mubr.bf16.gmra.mrb[0].mxu0 %v659
    %v786 = vpop.f32.mrb[0].mxu0
    %v787 = vadd.f32 0.0, %v786
    %v788 = vpop.f32.mrb[0].mxu0
    %v789 = vpop.f32.mrb[0].mxu0
    %v790 = vadd.f32 0.0, %v789
    %v791 = vpop.f32.mrb[0].mxu0
    %792 = vmatprep.mubr.bf16.mxu0 0
    %793 = vmatmul.mubr.bf16.gmra.mrb[0].mxu0 %v660
    %v794 = vpop.f32.mrb[0].mxu0
    %v795 = vadd.f32 0.0, %v794
    %v796 = vpop.f32.mrb[0].mxu0
    %v797 = vpop.f32.mrb[0].mxu0
    %v798 = vadd.f32 0.0, %v797
    %v799 = vpop.f32.mrb[0].mxu0
    %800 = vmatprep.mubr.bf16.mxu0 0
    %801 = vmatmul.mubr.bf16.gmra.mrb[0].mxu0 %v661
    %v802 = vpop.f32.mrb[0].mxu0
    %v803 = vadd.f32 0.0, %v802
    %v804 = vpop.f32.mrb[0].mxu0
    %v805 = vpop.f32.mrb[0].mxu0
    %v806 = vadd.f32 0.0, %v805
    %v807 = vpop.f32.mrb[0].mxu0
    %808 = vmatprep.mubr.bf16.mxu0 0
    %809 = vmatmul.mubr.bf16.gmra.mrb[0].mxu0 %v662
    %v810 = vpop.f32.mrb[0].mxu0
    %v811 = vadd.f32 0.0, %v810
    %v812 = vpop.f32.mrb[0].mxu0
    %v813 = vpop.f32.mrb[0].mxu0
    %v814 = vadd.f32 0.0, %v813
    %v815 = vpop.f32.mrb[0].mxu0
    %816 = vmatprep.mubr.bf16.mxu0 0
    %817 = vmatmul.mubr.bf16.gmra.mrb[0].mxu0 %v663
    %v818 = vpop.f32.mrb[0].mxu0
    %v819 = vadd.f32 0.0, %v818
    %v820 = vpop.f32.mrb[0].mxu0
    %v821 = vpop.f32.mrb[0].mxu0
    %v822 = vadd.f32 0.0, %v821
    %v823 = vpop.f32.mrb[0].mxu0
    %824 = vdwg.mxu0
    %v825 = vmax.f32 %v763, 0.0
    %v826 = vmax.f32 %v766, 0.0
    %v827 = vmax.f32 %v771, 0.0
    %v828 = vmax.f32 %v774, 0.0
    %v829 = vmax.f32 %v779, 0.0
    %v830 = vmax.f32 %v782, 0.0
    %v831 = vmax.f32 %v787, 0.0
    %v832 = vmax.f32 %v790, 0.0
    %v833 = vmax.f32 %v795, 0.0
    %v834 = vmax.f32 %v798, 0.0
    %v835 = vmax.f32 %v803, 0.0
    %v836 = vmax.f32 %v806, 0.0
    %v837 = vmax.f32 %v811, 0.0
    %v838 = vmax.f32 %v814, 0.0
    %v839 = vmax.f32 %v819, 0.0
    %v840 = vmax.f32 %v822, 0.0
    %841 = vadd.xlane.f32.xlu0 %v825
    %v842 = vpop.xlane.xlu0 %841
    %843 = vadd.xlane.f32.xlu0 %v826
    %v844 = vpop.xlane.xlu0 %843
    %845 = vadd.xlane.f32.xlu0 %v827
    %v846 = vpop.xlane.xlu0 %845
    %847 = vadd.xlane.f32.xlu0 %v828
    %v848 = vpop.xlane.xlu0 %847
    %849 = vadd.xlane.f32.xlu0 %v829
    %v850 = vpop.xlane.xlu0 %849
    %851 = vadd.xlane.f32.xlu0 %v830
    %v852 = vpop.xlane.xlu0 %851
    %853 = vadd.xlane.f32.xlu0 %v831
    %v854 = vpop.xlane.xlu0 %853
    %855 = vadd.xlane.f32.xlu0 %v832
    %v856 = vpop.xlane.xlu0 %855
    %857 = vadd.xlane.f32.xlu0 %v833
    %v858 = vpop.xlane.xlu0 %857
    %859 = vadd.xlane.f32.xlu0 %v834
    %v860 = vpop.xlane.xlu0 %859
    %861 = vadd.xlane.f32.xlu0 %v835
    %v862 = vpop.xlane.xlu0 %861
    %863 = vadd.xlane.f32.xlu0 %v836
    %v864 = vpop.xlane.xlu0 %863
    %865 = vadd.xlane.f32.xlu0 %v837
    %v866 = vpop.xlane.xlu0 %865
    %867 = vadd.xlane.f32.xlu0 %v838
    %v868 = vpop.xlane.xlu0 %867
    %869 = vadd.xlane.f32.xlu0 %v839
    %v870 = vpop.xlane.xlu0 %869
    %871 = vadd.xlane.f32.xlu0 %v840
    %v872 = vpop.xlane.xlu0 %871
    %v873 = vrcp.pop 128.0
    %v874 = vmul.f32 %v842, %v873
    %v875 = vmul.f32 %v844, %v873
    %v876 = vmul.f32 %v846, %v873
    %v877 = vmul.f32 %v848, %v873
    %v878 = vmul.f32 %v850, %v873
    %v879 = vmul.f32 %v852, %v873
    %v880 = vmul.f32 %v854, %v873
    %v881 = vmul.f32 %v856, %v873
    %v882 = vmul.f32 %v858, %v873
    %v883 = vmul.f32 %v860, %v873
    %v884 = vmul.f32 %v862, %v873
    %v885 = vmul.f32 %v864, %v873
    %v886 = vmul.f32 %v866, %v873
    %v887 = vmul.f32 %v868, %v873
    %v888 = vmul.f32 %v870, %v873
    %v889 = vmul.f32 %v872, %v873
    %v890 = vsub.f32 %v825, %v874
    %v891 = vsub.f32 %v826, %v875
    %v892 = vsub.f32 %v827, %v876
    %v893 = vsub.f32 %v828, %v877
    %v894 = vsub.f32 %v829, %v878
    %v895 = vsub.f32 %v830, %v879
    %v896 = vsub.f32 %v831, %v880
    %v897 = vsub.f32 %v832, %v881
    %v898 = vsub.f32 %v833, %v882
    %v899 = vsub.f32 %v834, %v883
    %v900 = vsub.f32 %v835, %v884
    %v901 = vsub.f32 %v836, %v885
    %v902 = vsub.f32 %v837, %v886
    %v903 = vsub.f32 %v838, %v887
    %v904 = vsub.f32 %v839, %v888
    %v905 = vsub.f32 %v840, %v889
    %v906 = vmul.f32 %v890, %v890
    %v907 = vmul.f32 %v891, %v891
    %v908 = vmul.f32 %v892, %v892
    %v909 = vmul.f32 %v893, %v893
    %v910 = vmul.f32 %v894, %v894
    %v911 = vmul.f32 %v895, %v895
    %v912 = vmul.f32 %v896, %v896
    %v913 = vmul.f32 %v897, %v897
    %v914 = vmul.f32 %v898, %v898
    %v915 = vmul.f32 %v899, %v899
    %v916 = vmul.f32 %v900, %v900
    %v917 = vmul.f32 %v901, %v901
    %v918 = vmul.f32 %v902, %v902
    %v919 = vmul.f32 %v903, %v903
    %v920 = vmul.f32 %v904, %v904
    %v921 = vmul.f32 %v905, %v905
    %922 = vadd.xlane.f32.xlu0 %v906
    %v923 = vpop.xlane.xlu0 %922
    %924 = vadd.xlane.f32.xlu0 %v907
    %v925 = vpop.xlane.xlu0 %924
    %926 = vadd.xlane.f32.xlu0 %v908
    %v927 = vpop.xlane.xlu0 %926
    %928 = vadd.xlane.f32.xlu0 %v909
    %v929 = vpop.xlane.xlu0 %928
    %930 = vadd.xlane.f32.xlu0 %v910
    %v931 = vpop.xlane.xlu0 %930
    %932 = vadd.xlane.f32.xlu0 %v911
    %v933 = vpop.xlane.xlu0 %932
    %934 = vadd.xlane.f32.xlu0 %v912
    %v935 = vpop.xlane.xlu0 %934
    %936 = vadd.xlane.f32.xlu0 %v913
    %v937 = vpop.xlane.xlu0 %936
    %938 = vadd.xlane.f32.xlu0 %v914
    %v939 = vpop.xlane.xlu0 %938
    %940 = vadd.xlane.f32.xlu0 %v915
    %v941 = vpop.xlane.xlu0 %940
    %942 = vadd.xlane.f32.xlu0 %v916
    %v943 = vpop.xlane.xlu0 %942
    %944 = vadd.xlane.f32.xlu0 %v917
    %v945 = vpop.xlane.xlu0 %944
    %946 = vadd.xlane.f32.xlu0 %v918
    %v947 = vpop.xlane.xlu0 %946
    %948 = vadd.xlane.f32.xlu0 %v919
    %v949 = vpop.xlane.xlu0 %948
    %950 = vadd.xlane.f32.xlu0 %v920
    %v951 = vpop.xlane.xlu0 %950
    %952 = vadd.xlane.f32.xlu0 %v921
    %v953 = vpop.xlane.xlu0 %952
    %v954 = vmul.f32 %v923, %v873
    %v955 = vmul.f32 %v925, %v873
    %v956 = vmul.f32 %v927, %v873
    %v957 = vmul.f32 %v929, %v873
    %v958 = vmul.f32 %v931, %v873
    %v959 = vmul.f32 %v933, %v873
    %v960 = vmul.f32 %v935, %v873
    %v961 = vmul.f32 %v937, %v873
    %v962 = vmul.f32 %v939, %v873
    %v963 = vmul.f32 %v941, %v873
    %v964 = vmul.f32 %v943, %v873
    %v965 = vmul.f32 %v945, %v873
    %v966 = vmul.f32 %v947, %v873
    %v967 = vmul.f32 %v949, %v873
    %v968 = vmul.f32 %v951, %v873
    %v969 = vmul.f32 %v953, %v873
    %v970 = vadd.f32 %v954, 1e-05
    %v971 = vadd.f32 %v955, 1e-05
    %v972 = vadd.f32 %v956, 1e-05
    %v973 = vadd.f32 %v957, 1e-05
    %v974 = vadd.f32 %v958, 1e-05
    %v975 = vadd.f32 %v959, 1e-05
    %v976 = vadd.f32 %v960, 1e-05
    %v977 = vadd.f32 %v961, 1e-05
    %v978 = vadd.f32 %v962, 1e-05
    %v979 = vadd.f32 %v963, 1e-05
    %v980 = vadd.f32 %v964, 1e-05
    %v981 = vadd.f32 %v965, 1e-05
    %v982 = vadd.f32 %v966, 1e-05
    %v983 = vadd.f32 %v967, 1e-05
    %v984 = vadd.f32 %v968, 1e-05
    %v985 = vadd.f32 %v969, 1e-05
    %v986 = vrsqrt.pop %v970
    %v987 = vrsqrt.pop %v971
    %v988 = vrsqrt.pop %v972
    %v989 = vrsqrt.pop %v973
    %v990 = vrsqrt.pop %v974
    %v991 = vrsqrt.pop %v975
    %v992 = vrsqrt.pop %v976
    %v993 = vrsqrt.pop %v977
    %v994 = vrsqrt.pop %v978
    %v995 = vrsqrt.pop %v979
    %v996 = vrsqrt.pop %v980
    %v997 = vrsqrt.pop %v981
    %v998 = vrsqrt.pop %v982
    %v999 = vrsqrt.pop %v983
    %v1000 = vrsqrt.pop %v984
    %v1001 = vrsqrt.pop %v985
    %v1002 = vmul.f32 %v890, %v986
    %v1003 = vmul.f32 %v891, %v987
    %v1004 = vmul.f32 %v892, %v988
    %v1005 = vmul.f32 %v893, %v989
    %v1006 = vmul.f32 %v894, %v990
    %v1007 = vmul.f32 %v895, %v991
    %v1008 = vmul.f32 %v896, %v992
    %v1009 = vmul.f32 %v897, %v993
    %v1010 = vmul.f32 %v898, %v994
    %v1011 = vmul.f32 %v899, %v995
    %v1012 = vmul.f32 %v900, %v996
    %v1013 = vmul.f32 %v901, %v997
    %v1014 = vmul.f32 %v902, %v998
    %v1015 = vmul.f32 %v903, %v999
    %v1016 = vmul.f32 %v904, %v1000
    %v1017 = vmul.f32 %v905, %v1001
    %v1019 = vlaneseq
    %v1020 = vshrl.u32 %v1019, 7
    %v1021 = vsub.s32 0, %v1020
    %v1022 = vrot.slane %v66, %v1021
    %v1024 = vmul.f32 %v1002, %v1022
    %v1025 = vmul.f32 %v1003, %v1022
    %v1026 = vmul.f32 %v1004, %v1022
    %v1027 = vmul.f32 %v1005, %v1022
    %v1028 = vmul.f32 %v1006, %v1022
    %v1029 = vmul.f32 %v1007, %v1022
    %v1030 = vmul.f32 %v1008, %v1022
    %v1031 = vmul.f32 %v1009, %v1022
    %v1032 = vmul.f32 %v1010, %v1022
    %v1033 = vmul.f32 %v1011, %v1022
    %v1034 = vmul.f32 %v1012, %v1022
    %v1035 = vmul.f32 %v1013, %v1022
    %v1036 = vmul.f32 %v1014, %v1022
    %v1037 = vmul.f32 %v1015, %v1022
    %v1038 = vmul.f32 %v1016, %v1022
    %v1039 = vmul.f32 %v1017, %v1022
    %v1041 = vlaneseq
    %v1042 = vshrl.u32 %v1041, 7
    %v1043 = vsub.s32 0, %v1042
    %v1044 = vrot.slane %v67, %v1043
    %v1046 = vadd.f32 %v1024, %v1044
    %v1047 = vadd.f32 %v1025, %v1044
    %v1048 = vadd.f32 %v1026, %v1044
    %v1049 = vadd.f32 %v1027, %v1044
    %v1050 = vadd.f32 %v1028, %v1044
    %v1051 = vadd.f32 %v1029, %v1044
    %v1052 = vadd.f32 %v1030, %v1044
    %v1053 = vadd.f32 %v1031, %v1044
    %v1054 = vadd.f32 %v1032, %v1044
    %v1055 = vadd.f32 %v1033, %v1044
    %v1056 = vadd.f32 %v1034, %v1044
    %v1057 = vadd.f32 %v1035, %v1044
    %v1058 = vadd.f32 %v1036, %v1044
    %v1059 = vadd.f32 %v1037, %v1044
    %v1060 = vadd.f32 %v1038, %v1044
    %v1061 = vadd.f32 %v1039, %v1044
    %1062 = vst [vmem:[#allocation8] sm:$0xff] %v1046
    %1063 = vst [vmem:[#allocation8 + $0x8] sm:$0xff] %v1047
    %1064 = vst [vmem:[#allocation8 + $0x10] sm:$0xff] %v1048
    %1065 = vst [vmem:[#allocation8 + $0x18] sm:$0xff] %v1049
    %1066 = vst [vmem:[#allocation8 + $0x20] sm:$0xff] %v1050
    %1067 = vst [vmem:[#allocation8 + $0x28] sm:$0xff] %v1051
    %1068 = vst [vmem:[#allocation8 + $0x30] sm:$0xff] %v1052
    %1069 = vst [vmem:[#allocation8 + $0x38] sm:$0xff] %v1053
    %1070 = vst [vmem:[#allocation8 + $0x40] sm:$0xff] %v1054
    %1071 = vst [vmem:[#allocation8 + $0x48] sm:$0xff] %v1055
    %1072 = vst [vmem:[#allocation8 + $0x50] sm:$0xff] %v1056
    %1073 = vst [vmem:[#allocation8 + $0x58] sm:$0xff] %v1057
    %1074 = vst [vmem:[#allocation8 + $0x60] sm:$0xff] %v1058
    %1075 = vst [vmem:[#allocation8 + $0x68] sm:$0xff] %v1059
    %1076 = vst [vmem:[#allocation8 + $0x70] sm:$0xff] %v1060
    %1077 = vst [vmem:[#allocation8 + $0x78] sm:$0xff] %v1061
    %v1078 = vld [vmem:[#allocation2 + $0x80] sm:$0xff]
    %v1079 = vld [vmem:[#allocation2 + $0x88] sm:$0xff]
    %v1080 = vld [vmem:[#allocation2 + $0x90] sm:$0xff]
    %v1081 = vld [vmem:[#allocation2 + $0x98] sm:$0xff]
    %v1082 = vld [vmem:[#allocation2 + $0xa0] sm:$0xff]
    %v1083 = vld [vmem:[#allocation2 + $0xa8] sm:$0xff]
    %v1084 = vld [vmem:[#allocation2 + $0xb0] sm:$0xff]
    %v1085 = vld [vmem:[#allocation2 + $0xb8] sm:$0xff]
    %v1086 = vld [vmem:[#allocation2 + $0xc0] sm:$0xff]
    %v1087 = vld [vmem:[#allocation2 + $0xc8] sm:$0xff]
    %v1088 = vld [vmem:[#allocation2 + $0xd0] sm:$0xff]
    %v1089 = vld [vmem:[#allocation2 + $0xd8] sm:$0xff]
    %v1090 = vld [vmem:[#allocation2 + $0xe0] sm:$0xff]
    %v1091 = vld [vmem:[#allocation2 + $0xe8] sm:$0xff]
    %v1092 = vld [vmem:[#allocation2 + $0xf0] sm:$0xff]
    %v1093 = vld [vmem:[#allocation2 + $0xf8] sm:$0xff]
    %v1094 = vpack.c.bf16 %v1079, %v1078
    %v1095 = vpack.c.bf16 %v1081, %v1080
    %v1096 = vpack.c.bf16 %v1083, %v1082
    %v1097 = vpack.c.bf16 %v1085, %v1084
    %v1098 = vpack.c.bf16 %v1087, %v1086
    %v1099 = vpack.c.bf16 %v1089, %v1088
    %v1100 = vpack.c.bf16 %v1091, %v1090
    %v1101 = vpack.c.bf16 %v1093, %v1092
    %v1102 = vld [vmem:[#allocation5] sm:$0xf]
    %v1103 = vld [vmem:[#allocation5 + $0x4] sm:$0xf]
    %v1104 = vld [vmem:[#allocation5 + $0x8] sm:$0xf]
    %v1105 = vld [vmem:[#allocation5 + $0xc] sm:$0xf]
    %v1106 = vld [vmem:[#allocation5 + $0x10] sm:$0xf]
    %v1107 = vld [vmem:[#allocation5 + $0x14] sm:$0xf]
    %v1108 = vld [vmem:[#allocation5 + $0x18] sm:$0xf]
    %v1109 = vld [vmem:[#allocation5 + $0x1c] sm:$0xf]
    %v1110 = vld [vmem:[#allocation5 + $0x20] sm:$0xf]
    %v1111 = vld [vmem:[#allocation5 + $0x24] sm:$0xf]
    %v1112 = vld [vmem:[#allocation5 + $0x28] sm:$0xf]
    %v1113 = vld [vmem:[#allocation5 + $0x2c] sm:$0xf]
    %v1114 = vld [vmem:[#allocation5 + $0x30] sm:$0xf]
    %v1115 = vld [vmem:[#allocation5 + $0x34] sm:$0xf]
    %v1116 = vld [vmem:[#allocation5 + $0x38] sm:$0xf]
    %v1117 = vld [vmem:[#allocation5 + $0x3c] sm:$0xf]
    %v1118 = vld [vmem:[%s2] sm:$0x1]
    %v1119 = vlaneseq
    %v1120 = vshrl.u32 %v1119, 7
    %v1121 = vsub.s32 0, %v1120
    %v1122 = vrot.slane %v1118, %v1121
    %v1139 = vunpack.c.l.b16 %v1102
    %v1140 = vunpack.c.l.b16 %v1103
    %v1141 = vunpack.c.l.b16 %v1104
    %v1142 = vunpack.c.l.b16 %v1105
    %v1143 = vunpack.c.l.b16 %v1106
    %v1144 = vunpack.c.l.b16 %v1107
    %v1145 = vunpack.c.l.b16 %v1108
    %v1146 = vunpack.c.l.b16 %v1109
    %v1147 = vunpack.c.l.b16 %v1110
    %v1148 = vunpack.c.l.b16 %v1111
    %v1149 = vunpack.c.l.b16 %v1112
    %v1150 = vunpack.c.l.b16 %v1113
    %v1151 = vunpack.c.l.b16 %v1114
    %v1152 = vunpack.c.l.b16 %v1115
    %v1153 = vunpack.c.l.b16 %v1116
    %v1154 = vunpack.c.l.b16 %v1117
    %v1155 = vpack.c.b16 %v1140, %v1139
    %v1156 = vpack.c.b16 %v1142, %v1141
    %v1157 = vpack.c.b16 %v1144, %v1143
    %v1158 = vpack.c.b16 %v1146, %v1145
    %v1159 = vpack.c.b16 %v1148, %v1147
    %v1160 = vpack.c.b16 %v1150, %v1149
    %v1161 = vpack.c.b16 %v1152, %v1151
    %v1162 = vpack.c.b16 %v1154, %v1153
    %1171 = vmatprep.subr.bf16.mxu0 0
    %1172 = vmatpush1.bf16.msra.mxu0 %v1155
    %1173 = vmatprep.subr.bf16.mxu0 0
    %1174 = vmatpush1.bf16.msra.mxu0 %v1156
    %1175 = vmatprep.subr.bf16.mxu0 0
    %1176 = vmatpush1.bf16.msra.mxu0 %v1157
    %1177 = vmatprep.subr.bf16.mxu0 0
    %1178 = vmatpush1.bf16.msra.mxu0 %v1158
    %1179 = vmatprep.subr.bf16.mxu0 0
    %1180 = vmatpush1.bf16.msra.mxu0 %v1159
    %1181 = vmatprep.subr.bf16.mxu0 0
    %1182 = vmatpush1.bf16.msra.mxu0 %v1160
    %1183 = vmatprep.subr.bf16.mxu0 0
    %1184 = vmatpush1.bf16.msra.mxu0 %v1161
    %1185 = vmatprep.subr.bf16.mxu0 0
    %1186 = vmatpush1.bf16.msra.mxu0 %v1162
    %1187 = vmatprep.subr.bf16.mxu0 0
    %1188 = vmatpush1.bf16.msra.mxu0 0
    %1189 = vmatprep.subr.bf16.mxu0 0
    %1190 = vmatpush1.bf16.msra.mxu0 0
    %1191 = vmatprep.subr.bf16.mxu0 0
    %1192 = vmatpush1.bf16.msra.mxu0 0
    %1193 = vmatprep.subr.bf16.mxu0 0
    %1194 = vmatpush1.bf16.msra.mxu0 0
    %1195 = vmatprep.subr.bf16.mxu0 0
    %1196 = vmatpush1.bf16.msra.mxu0 0
    %1197 = vmatprep.subr.bf16.mxu0 0
    %1198 = vmatpush1.bf16.msra.mxu0 0
    %1199 = vmatprep.subr.bf16.mxu0 0
    %1200 = vmatpush1.bf16.msra.mxu0 0
    %1201 = vmatprep.subr.bf16.mxu0 0
    %1202 = vmatpush1.bf16.msra.mxu0 0
    %1203 = vmatprep.mubr.bf16.mxu0 0
    %1204 = vmatmul.mubr.bf16.gmra.mrb[0].mxu0 %v1094
    %v1205 = vpop.f32.mrb[0].mxu0
    %v1206 = vadd.f32 %v1122, %v1205
    %v1207 = vpop.f32.mrb[0].mxu0
    %v1208 = vpop.f32.mrb[0].mxu0
    %v1209 = vadd.f32 %v1122, %v1208
    %v1210 = vpop.f32.mrb[0].mxu0
    %1211 = vmatprep.mubr.bf16.mxu0 0
    %1212 = vmatmul.mubr.bf16.gmra.mrb[0].mxu0 %v1095
    %v1213 = vpop.f32.mrb[0].mxu0
    %v1214 = vadd.f32 %v1122, %v1213
    %v1215 = vpop.f32.mrb[0].mxu0
    %v1216 = vpop.f32.mrb[0].mxu0
    %v1217 = vadd.f32 %v1122, %v1216
    %v1218 = vpop.f32.mrb[0].mxu0
    %1219 = vmatprep.mubr.bf16.mxu0 0
    %1220 = vmatmul.mubr.bf16.gmra.mrb[0].mxu0 %v1096
    %v1221 = vpop.f32.mrb[0].mxu0
    %v1222 = vadd.f32 %v1122, %v1221
    %v1223 = vpop.f32.mrb[0].mxu0
    %v1224 = vpop.f32.mrb[0].mxu0
    %v1225 = vadd.f32 %v1122, %v1224
    %v1226 = vpop.f32.mrb[0].mxu0
    %1227 = vmatprep.mubr.bf16.mxu0 0
    %1228 = vmatmul.mubr.bf16.gmra.mrb[0].mxu0 %v1097
    %v1229 = vpop.f32.mrb[0].mxu0
    %v1230 = vadd.f32 %v1122, %v1229
    %v1231 = vpop.f32.mrb[0].mxu0
    %v1232 = vpop.f32.mrb[0].mxu0
    %v1233 = vadd.f32 %v1122, %v1232
    %v1234 = vpop.f32.mrb[0].mxu0
    %1235 = vmatprep.mubr.bf16.mxu0 0
    %1236 = vmatmul.mubr.bf16.gmra.mrb[0].mxu0 %v1098
    %v1237 = vpop.f32.mrb[0].mxu0
    %v1238 = vadd.f32 %v1122, %v1237
    %v1239 = vpop.f32.mrb[0].mxu0
    %v1240 = vpop.f32.mrb[0].mxu0
    %v1241 = vadd.f32 %v1122, %v1240
    %v1242 = vpop.f32.mrb[0].mxu0
    %1243 = vmatprep.mubr.bf16.mxu0 0
    %1244 = vmatmul.mubr.bf16.gmra.mrb[0].mxu0 %v1099
    %v1245 = vpop.f32.mrb[0].mxu0
    %v1246 = vadd.f32 %v1122, %v1245
    %v1247 = vpop.f32.mrb[0].mxu0
    %v1248 = vpop.f32.mrb[0].mxu0
    %v1249 = vadd.f32 %v1122, %v1248
    %v1250 = vpop.f32.mrb[0].mxu0
    %1251 = vmatprep.mubr.bf16.mxu0 0
    %1252 = vmatmul.mubr.bf16.gmra.mrb[0].mxu0 %v1100
    %v1253 = vpop.f32.mrb[0].mxu0
    %v1254 = vadd.f32 %v1122, %v1253
    %v1255 = vpop.f32.mrb[0].mxu0
    %v1256 = vpop.f32.mrb[0].mxu0
    %v1257 = vadd.f32 %v1122, %v1256
    %v1258 = vpop.f32.mrb[0].mxu0
    %1259 = vmatprep.mubr.bf16.mxu0 0
    %1260 = vmatmul.mubr.bf16.gmra.mrb[0].mxu0 %v1101
    %v1261 = vpop.f32.mrb[0].mxu0
    %v1262 = vadd.f32 %v1122, %v1261
    %v1263 = vpop.f32.mrb[0].mxu0
    %v1264 = vpop.f32.mrb[0].mxu0
    %v1265 = vadd.f32 %v1122, %v1264
    %v1266 = vpop.f32.mrb[0].mxu0
    %1267 = vdwg.mxu0
    %v1268 = vmax.f32 %v1206, 0.0
    %v1269 = vmax.f32 %v1209, 0.0
    %v1270 = vmax.f32 %v1214, 0.0
    %v1271 = vmax.f32 %v1217, 0.0
    %v1272 = vmax.f32 %v1222, 0.0
    %v1273 = vmax.f32 %v1225, 0.0
    %v1274 = vmax.f32 %v1230, 0.0
    %v1275 = vmax.f32 %v1233, 0.0
    %v1276 = vmax.f32 %v1238, 0.0
    %v1277 = vmax.f32 %v1241, 0.0
    %v1278 = vmax.f32 %v1246, 0.0
    %v1279 = vmax.f32 %v1249, 0.0
    %v1280 = vmax.f32 %v1254, 0.0
    %v1281 = vmax.f32 %v1257, 0.0
    %v1282 = vmax.f32 %v1262, 0.0
    %v1283 = vmax.f32 %v1265, 0.0
    %v1284 = vpack.c.bf16 %v1269, %v1268
    %v1285 = vpack.c.bf16 %v1271, %v1270
    %v1286 = vpack.c.bf16 %v1273, %v1272
    %v1287 = vpack.c.bf16 %v1275, %v1274
    %v1288 = vpack.c.bf16 %v1277, %v1276
    %v1289 = vpack.c.bf16 %v1279, %v1278
    %v1290 = vpack.c.bf16 %v1281, %v1280
    %v1291 = vpack.c.bf16 %v1283, %v1282
    %v1292 = vld [vmem:[%s282] sm:$0xf]
    %v1293 = vld [vmem:[%s282 + $0x4] sm:$0xf]
    %v1294 = vld [vmem:[%s282 + $0x8] sm:$0xf]
    %v1295 = vld [vmem:[%s282 + $0xc] sm:$0xf]
    %v1296 = vld [vmem:[%s282 + $0x10] sm:$0xf]
    %v1297 = vld [vmem:[%s282 + $0x14] sm:$0xf]
    %v1298 = vld [vmem:[%s282 + $0x18] sm:$0xf]
    %v1299 = vld [vmem:[%s282 + $0x1c] sm:$0xf]
    %v1300 = vld [vmem:[%s282 + $0x20] sm:$0xf]
    %v1301 = vld [vmem:[%s282 + $0x24] sm:$0xf]
    %v1302 = vld [vmem:[%s282 + $0x28] sm:$0xf]
    %v1303 = vld [vmem:[%s282 + $0x2c] sm:$0xf]
    %v1304 = vld [vmem:[%s282 + $0x30] sm:$0xf]
    %v1305 = vld [vmem:[%s282 + $0x34] sm:$0xf]
    %v1306 = vld [vmem:[%s282 + $0x38] sm:$0xf]
    %v1307 = vld [vmem:[%s282 + $0x3c] sm:$0xf]
    %v1308 = vld [vmem:[%s2 + $0x1] sm:$0x1]
    %v1309 = vlaneseq
    %v1310 = vshrl.u32 %v1309, 7
    %v1311 = vsub.s32 0, %v1310
    %v1312 = vrot.slane %v1308, %v1311
    %v1329 = vunpack.c.l.b16 %v1292
    %v1330 = vunpack.c.l.b16 %v1293
    %v1331 = vunpack.c.l.b16 %v1294
    %v1332 = vunpack.c.l.b16 %v1295
    %v1333 = vunpack.c.l.b16 %v1296
    %v1334 = vunpack.c.l.b16 %v1297
    %v1335 = vunpack.c.l.b16 %v1298
    %v1336 = vunpack.c.l.b16 %v1299
    %v1337 = vunpack.c.l.b16 %v1300
    %v1338 = vunpack.c.l.b16 %v1301
    %v1339 = vunpack.c.l.b16 %v1302
    %v1340 = vunpack.c.l.b16 %v1303
    %v1341 = vunpack.c.l.b16 %v1304
    %v1342 = vunpack.c.l.b16 %v1305
    %v1343 = vunpack.c.l.b16 %v1306
    %v1344 = vunpack.c.l.b16 %v1307
    %v1345 = vpack.c.b16 %v1330, %v1329
    %v1346 = vpack.c.b16 %v1332, %v1331
    %v1347 = vpack.c.b16 %v1334, %v1333
    %v1348 = vpack.c.b16 %v1336, %v1335
    %v1349 = vpack.c.b16 %v1338, %v1337
    %v1350 = vpack.c.b16 %v1340, %v1339
    %v1351 = vpack.c.b16 %v1342, %v1341
    %v1352 = vpack.c.b16 %v1344, %v1343
    %1361 = vmatprep.subr.bf16.mxu0 0
    %1362 = vmatpush1.bf16.msra.mxu0 %v1345
    %1363 = vmatprep.subr.bf16.mxu0 0
    %1364 = vmatpush1.bf16.msra.mxu0 %v1346
    %1365 = vmatprep.subr.bf16.mxu0 0
    %1366 = vmatpush1.bf16.msra.mxu0 %v1347
    %1367 = vmatprep.subr.bf16.mxu0 0
    %1368 = vmatpush1.bf16.msra.mxu0 %v1348
    %1369 = vmatprep.subr.bf16.mxu0 0
    %1370 = vmatpush1.bf16.msra.mxu0 %v1349
    %1371 = vmatprep.subr.bf16.mxu0 0
    %1372 = vmatpush1.bf16.msra.mxu0 %v1350
    %1373 = vmatprep.subr.bf16.mxu0 0
    %1374 = vmatpush1.bf16.msra.mxu0 %v1351
    %1375 = vmatprep.subr.bf16.mxu0 0
    %1376 = vmatpush1.bf16.msra.mxu0 %v1352
    %1377 = vmatprep.subr.bf16.mxu0 0
    %1378 = vmatpush1.bf16.msra.mxu0 0
    %1379 = vmatprep.subr.bf16.mxu0 0
    %1380 = vmatpush1.bf16.msra.mxu0 0
    %1381 = vmatprep.subr.bf16.mxu0 0
    %1382 = vmatpush1.bf16.msra.mxu0 0
    %1383 = vmatprep.subr.bf16.mxu0 0
    %1384 = vmatpush1.bf16.msra.mxu0 0
    %1385 = vmatprep.subr.bf16.mxu0 0
    %1386 = vmatpush1.bf16.msra.mxu0 0
    %1387 = vmatprep.subr.bf16.mxu0 0
    %1388 = vmatpush1.bf16.msra.mxu0 0
    %1389 = vmatprep.subr.bf16.mxu0 0
    %1390 = vmatpush1.bf16.msra.mxu0 0
    %1391 = vmatprep.subr.bf16.mxu0 0
    %1392 = vmatpush1.bf16.msra.mxu0 0
    %1393 = vmatprep.mubr.bf16.mxu0 0
    %1394 = vmatmul.mubr.bf16.gmra.mrb[0].mxu0 %v1284
    %v1395 = vpop.f32.mrb[0].mxu0
    %v1396 = vadd.f32 %v1312, %v1395
    %v1397 = vpop.f32.mrb[0].mxu0
    %v1398 = vpop.f32.mrb[0].mxu0
    %v1399 = vadd.f32 %v1312, %v1398
    %v1400 = vpop.f32.mrb[0].mxu0
    %1401 = vmatprep.mubr.bf16.mxu0 0
    %1402 = vmatmul.mubr.bf16.gmra.mrb[0].mxu0 %v1285
    %v1403 = vpop.f32.mrb[0].mxu0
    %v1404 = vadd.f32 %v1312, %v1403
    %v1405 = vpop.f32.mrb[0].mxu0
    %v1406 = vpop.f32.mrb[0].mxu0
    %v1407 = vadd.f32 %v1312, %v1406
    %v1408 = vpop.f32.mrb[0].mxu0
    %1409 = vmatprep.mubr.bf16.mxu0 0
    %1410 = vmatmul.mubr.bf16.gmra.mrb[0].mxu0 %v1286
    %v1411 = vpop.f32.mrb[0].mxu0
    %v1412 = vadd.f32 %v1312, %v1411
    %v1413 = vpop.f32.mrb[0].mxu0
    %v1414 = vpop.f32.mrb[0].mxu0
    %v1415 = vadd.f32 %v1312, %v1414
    %v1416 = vpop.f32.mrb[0].mxu0
    %1417 = vmatprep.mubr.bf16.mxu0 0
    %1418 = vmatmul.mubr.bf16.gmra.mrb[0].mxu0 %v1287
    %v1419 = vpop.f32.mrb[0].mxu0
    %v1420 = vadd.f32 %v1312, %v1419
    %v1421 = vpop.f32.mrb[0].mxu0
    %v1422 = vpop.f32.mrb[0].mxu0
    %v1423 = vadd.f32 %v1312, %v1422
    %v1424 = vpop.f32.mrb[0].mxu0
    %1425 = vmatprep.mubr.bf16.mxu0 0
    %1426 = vmatmul.mubr.bf16.gmra.mrb[0].mxu0 %v1288
    %v1427 = vpop.f32.mrb[0].mxu0
    %v1428 = vadd.f32 %v1312, %v1427
    %v1429 = vpop.f32.mrb[0].mxu0
    %v1430 = vpop.f32.mrb[0].mxu0
    %v1431 = vadd.f32 %v1312, %v1430
    %v1432 = vpop.f32.mrb[0].mxu0
    %1433 = vmatprep.mubr.bf16.mxu0 0
    %1434 = vmatmul.mubr.bf16.gmra.mrb[0].mxu0 %v1289
    %v1435 = vpop.f32.mrb[0].mxu0
    %v1436 = vadd.f32 %v1312, %v1435
    %v1437 = vpop.f32.mrb[0].mxu0
    %v1438 = vpop.f32.mrb[0].mxu0
    %v1439 = vadd.f32 %v1312, %v1438
    %v1440 = vpop.f32.mrb[0].mxu0
    %1441 = vmatprep.mubr.bf16.mxu0 0
    %1442 = vmatmul.mubr.bf16.gmra.mrb[0].mxu0 %v1290
    %v1443 = vpop.f32.mrb[0].mxu0
    %v1444 = vadd.f32 %v1312, %v1443
    %v1445 = vpop.f32.mrb[0].mxu0
    %v1446 = vpop.f32.mrb[0].mxu0
    %v1447 = vadd.f32 %v1312, %v1446
    %v1448 = vpop.f32.mrb[0].mxu0
    %1449 = vmatprep.mubr.bf16.mxu0 0
    %1450 = vmatmul.mubr.bf16.gmra.mrb[0].mxu0 %v1291
    %v1451 = vpop.f32.mrb[0].mxu0
    %v1452 = vadd.f32 %v1312, %v1451
    %v1453 = vpop.f32.mrb[0].mxu0
    %v1454 = vpop.f32.mrb[0].mxu0
    %v1455 = vadd.f32 %v1312, %v1454
    %v1456 = vpop.f32.mrb[0].mxu0
    %1457 = vdwg.mxu0
    %v1458 = vmax.f32 %v1396, 0.0
    %v1459 = vmax.f32 %v1399, 0.0
    %v1460 = vmax.f32 %v1404, 0.0
    %v1461 = vmax.f32 %v1407, 0.0
    %v1462 = vmax.f32 %v1412, 0.0
    %v1463 = vmax.f32 %v1415, 0.0
    %v1464 = vmax.f32 %v1420, 0.0
    %v1465 = vmax.f32 %v1423, 0.0
    %v1466 = vmax.f32 %v1428, 0.0
    %v1467 = vmax.f32 %v1431, 0.0
    %v1468 = vmax.f32 %v1436, 0.0
    %v1469 = vmax.f32 %v1439, 0.0
    %v1470 = vmax.f32 %v1444, 0.0
    %v1471 = vmax.f32 %v1447, 0.0
    %v1472 = vmax.f32 %v1452, 0.0
    %v1473 = vmax.f32 %v1455, 0.0
    %v1474 = vpack.c.bf16 %v1459, %v1458
    %v1475 = vpack.c.bf16 %v1461, %v1460
    %v1476 = vpack.c.bf16 %v1463, %v1462
    %v1477 = vpack.c.bf16 %v1465, %v1464
    %v1478 = vpack.c.bf16 %v1467, %v1466
    %v1479 = vpack.c.bf16 %v1469, %v1468
    %v1480 = vpack.c.bf16 %v1471, %v1470
    %v1481 = vpack.c.bf16 %v1473, %v1472
    %v1482 = vld [vmem:[%s473] sm:$0xf]
    %v1483 = vld [vmem:[%s473 + $0x4] sm:$0xf]
    %v1484 = vld [vmem:[%s473 + $0x8] sm:$0xf]
    %v1485 = vld [vmem:[%s473 + $0xc] sm:$0xf]
    %v1486 = vld [vmem:[%s473 + $0x10] sm:$0xf]
    %v1487 = vld [vmem:[%s473 + $0x14] sm:$0xf]
    %v1488 = vld [vmem:[%s473 + $0x18] sm:$0xf]
    %v1489 = vld [vmem:[%s473 + $0x1c] sm:$0xf]
    %v1490 = vld [vmem:[%s473 + $0x20] sm:$0xf]
    %v1491 = vld [vmem:[%s473 + $0x24] sm:$0xf]
    %v1492 = vld [vmem:[%s473 + $0x28] sm:$0xf]
    %v1493 = vld [vmem:[%s473 + $0x2c] sm:$0xf]
    %v1494 = vld [vmem:[%s473 + $0x30] sm:$0xf]
    %v1495 = vld [vmem:[%s473 + $0x34] sm:$0xf]
    %v1496 = vld [vmem:[%s473 + $0x38] sm:$0xf]
    %v1497 = vld [vmem:[%s473 + $0x3c] sm:$0xf]
    %v1498 = vld [vmem:[%s2 + $0x2] sm:$0x1]
    %v1499 = vlaneseq
    %v1500 = vshrl.u32 %v1499, 7
    %v1501 = vsub.s32 0, %v1500
    %v1502 = vrot.slane %v1498, %v1501
    %v1519 = vunpack.c.l.b16 %v1482
    %v1520 = vunpack.c.l.b16 %v1483
    %v1521 = vunpack.c.l.b16 %v1484
    %v1522 = vunpack.c.l.b16 %v1485
    %v1523 = vunpack.c.l.b16 %v1486
    %v1524 = vunpack.c.l.b16 %v1487
    %v1525 = vunpack.c.l.b16 %v1488
    %v1526 = vunpack.c.l.b16 %v1489
    %v1527 = vunpack.c.l.b16 %v1490
    %v1528 = vunpack.c.l.b16 %v1491
    %v1529 = vunpack.c.l.b16 %v1492
    %v1530 = vunpack.c.l.b16 %v1493
    %v1531 = vunpack.c.l.b16 %v1494
    %v1532 = vunpack.c.l.b16 %v1495
    %v1533 = vunpack.c.l.b16 %v1496
    %v1534 = vunpack.c.l.b16 %v1497
    %v1535 = vpack.c.b16 %v1520, %v1519
    %v1536 = vpack.c.b16 %v1522, %v1521
    %v1537 = vpack.c.b16 %v1524, %v1523
    %v1538 = vpack.c.b16 %v1526, %v1525
    %v1539 = vpack.c.b16 %v1528, %v1527
    %v1540 = vpack.c.b16 %v1530, %v1529
    %v1541 = vpack.c.b16 %v1532, %v1531
    %v1542 = vpack.c.b16 %v1534, %v1533
    %1551 = vmatprep.subr.bf16.mxu0 0
    %1552 = vmatpush1.bf16.msra.mxu0 %v1535
    %1553 = vmatprep.subr.bf16.mxu0 0
    %1554 = vmatpush1.bf16.msra.mxu0 %v1536
    %1555 = vmatprep.subr.bf16.mxu0 0
    %1556 = vmatpush1.bf16.msra.mxu0 %v1537
    %1557 = vmatprep.subr.bf16.mxu0 0
    %1558 = vmatpush1.bf16.msra.mxu0 %v1538
    %1559 = vmatprep.subr.bf16.mxu0 0
    %1560 = vmatpush1.bf16.msra.mxu0 %v1539
    %1561 = vmatprep.subr.bf16.mxu0 0
    %1562 = vmatpush1.bf16.msra.mxu0 %v1540
    %1563 = vmatprep.subr.bf16.mxu0 0
    %1564 = vmatpush1.bf16.msra.mxu0 %v1541
    %1565 = vmatprep.subr.bf16.mxu0 0
    %1566 = vmatpush1.bf16.msra.mxu0 %v1542
    %1567 = vmatprep.subr.bf16.mxu0 0
    %1568 = vmatpush1.bf16.msra.mxu0 0
    %1569 = vmatprep.subr.bf16.mxu0 0
    %1570 = vmatpush1.bf16.msra.mxu0 0
    %1571 = vmatprep.subr.bf16.mxu0 0
    %1572 = vmatpush1.bf16.msra.mxu0 0
    %1573 = vmatprep.subr.bf16.mxu0 0
    %1574 = vmatpush1.bf16.msra.mxu0 0
    %1575 = vmatprep.subr.bf16.mxu0 0
    %1576 = vmatpush1.bf16.msra.mxu0 0
    %1577 = vmatprep.subr.bf16.mxu0 0
    %1578 = vmatpush1.bf16.msra.mxu0 0
    %1579 = vmatprep.subr.bf16.mxu0 0
    %1580 = vmatpush1.bf16.msra.mxu0 0
    %1581 = vmatprep.subr.bf16.mxu0 0
    %1582 = vmatpush1.bf16.msra.mxu0 0
    %1583 = vmatprep.mubr.bf16.mxu0 0
    %1584 = vmatmul.mubr.bf16.gmra.mrb[0].mxu0 %v1474
    %v1585 = vpop.f32.mrb[0].mxu0
    %v1586 = vadd.f32 %v1502, %v1585
    %v1587 = vpop.f32.mrb[0].mxu0
    %v1588 = vpop.f32.mrb[0].mxu0
    %v1589 = vadd.f32 %v1502, %v1588
    %v1590 = vpop.f32.mrb[0].mxu0
    %1591 = vmatprep.mubr.bf16.mxu0 0
    %1592 = vmatmul.mubr.bf16.gmra.mrb[0].mxu0 %v1475
    %v1593 = vpop.f32.mrb[0].mxu0
    %v1594 = vadd.f32 %v1502, %v1593
    %v1595 = vpop.f32.mrb[0].mxu0
    %v1596 = vpop.f32.mrb[0].mxu0
    %v1597 = vadd.f32 %v1502, %v1596
    %v1598 = vpop.f32.mrb[0].mxu0
    %1599 = vmatprep.mubr.bf16.mxu0 0
    %1600 = vmatmul.mubr.bf16.gmra.mrb[0].mxu0 %v1476
    %v1601 = vpop.f32.mrb[0].mxu0
    %v1602 = vadd.f32 %v1502, %v1601
    %v1603 = vpop.f32.mrb[0].mxu0
    %v1604 = vpop.f32.mrb[0].mxu0
    %v1605 = vadd.f32 %v1502, %v1604
    %v1606 = vpop.f32.mrb[0].mxu0
    %1607 = vmatprep.mubr.bf16.mxu0 0
    %1608 = vmatmul.mubr.bf16.gmra.mrb[0].mxu0 %v1477
    %v1609 = vpop.f32.mrb[0].mxu0
    %v1610 = vadd.f32 %v1502, %v1609
    %v1611 = vpop.f32.mrb[0].mxu0
    %v1612 = vpop.f32.mrb[0].mxu0
    %v1613 = vadd.f32 %v1502, %v1612
    %v1614 = vpop.f32.mrb[0].mxu0
    %1615 = vmatprep.mubr.bf16.mxu0 0
    %1616 = vmatmul.mubr.bf16.gmra.mrb[0].mxu0 %v1478
    %v1617 = vpop.f32.mrb[0].mxu0
    %v1618 = vadd.f32 %v1502, %v1617
    %v1619 = vpop.f32.mrb[0].mxu0
    %v1620 = vpop.f32.mrb[0].mxu0
    %v1621 = vadd.f32 %v1502, %v1620
    %v1622 = vpop.f32.mrb[0].mxu0
    %1623 = vmatprep.mubr.bf16.mxu0 0
    %1624 = vmatmul.mubr.bf16.gmra.mrb[0].mxu0 %v1479
    %v1625 = vpop.f32.mrb[0].mxu0
    %v1626 = vadd.f32 %v1502, %v1625
    %v1627 = vpop.f32.mrb[0].mxu0
    %v1628 = vpop.f32.mrb[0].mxu0
    %v1629 = vadd.f32 %v1502, %v1628
    %v1630 = vpop.f32.mrb[0].mxu0
    %1631 = vmatprep.mubr.bf16.mxu0 0
    %1632 = vmatmul.mubr.bf16.gmra.mrb[0].mxu0 %v1480
    %v1633 = vpop.f32.mrb[0].mxu0
    %v1634 = vadd.f32 %v1502, %v1633
    %v1635 = vpop.f32.mrb[0].mxu0
    %v1636 = vpop.f32.mrb[0].mxu0
    %v1637 = vadd.f32 %v1502, %v1636
    %v1638 = vpop.f32.mrb[0].mxu0
    %1639 = vmatprep.mubr.bf16.mxu0 0
    %1640 = vmatmul.mubr.bf16.gmra.mrb[0].mxu0 %v1481
    %v1641 = vpop.f32.mrb[0].mxu0
    %v1642 = vadd.f32 %v1502, %v1641
    %v1643 = vpop.f32.mrb[0].mxu0
    %v1644 = vpop.f32.mrb[0].mxu0
    %v1645 = vadd.f32 %v1502, %v1644
    %v1646 = vpop.f32.mrb[0].mxu0
    %1647 = vdwg.mxu0
    %v1648 = vmax.f32 %v1586, 0.0
    %v1649 = vmax.f32 %v1589, 0.0
    %v1650 = vmax.f32 %v1594, 0.0
    %v1651 = vmax.f32 %v1597, 0.0
    %v1652 = vmax.f32 %v1602, 0.0
    %v1653 = vmax.f32 %v1605, 0.0
    %v1654 = vmax.f32 %v1610, 0.0
    %v1655 = vmax.f32 %v1613, 0.0
    %v1656 = vmax.f32 %v1618, 0.0
    %v1657 = vmax.f32 %v1621, 0.0
    %v1658 = vmax.f32 %v1626, 0.0
    %v1659 = vmax.f32 %v1629, 0.0
    %v1660 = vmax.f32 %v1634, 0.0
    %v1661 = vmax.f32 %v1637, 0.0
    %v1662 = vmax.f32 %v1642, 0.0
    %v1663 = vmax.f32 %v1645, 0.0
    %v1664 = vpack.c.bf16 %v1649, %v1648
    %v1665 = vpack.c.bf16 %v1651, %v1650
    %v1666 = vpack.c.bf16 %v1653, %v1652
    %v1667 = vpack.c.bf16 %v1655, %v1654
    %v1668 = vpack.c.bf16 %v1657, %v1656
    %v1669 = vpack.c.bf16 %v1659, %v1658
    %v1670 = vpack.c.bf16 %v1661, %v1660
    %v1671 = vpack.c.bf16 %v1663, %v1662
    %v1672 = vld [vmem:[#allocation7] sm:$0xf]
    %v1673 = vld [vmem:[#allocation7 + $0x4] sm:$0xf]
    %v1674 = vld [vmem:[#allocation7 + $0x8] sm:$0xf]
    %v1675 = vld [vmem:[#allocation7 + $0xc] sm:$0xf]
    %v1676 = vld [vmem:[#allocation7 + $0x10] sm:$0xf]
    %v1677 = vld [vmem:[#allocation7 + $0x14] sm:$0xf]
    %v1678 = vld [vmem:[#allocation7 + $0x18] sm:$0xf]
    %v1679 = vld [vmem:[#allocation7 + $0x1c] sm:$0xf]
    %v1680 = vld [vmem:[#allocation7 + $0x20] sm:$0xf]
    %v1681 = vld [vmem:[#allocation7 + $0x24] sm:$0xf]
    %v1682 = vld [vmem:[#allocation7 + $0x28] sm:$0xf]
    %v1683 = vld [vmem:[#allocation7 + $0x2c] sm:$0xf]
    %v1684 = vld [vmem:[#allocation7 + $0x30] sm:$0xf]
    %v1685 = vld [vmem:[#allocation7 + $0x34] sm:$0xf]
    %v1686 = vld [vmem:[#allocation7 + $0x38] sm:$0xf]
    %v1687 = vld [vmem:[#allocation7 + $0x3c] sm:$0xf]
    %v1704 = vunpack.c.l.b16 %v1672
    %v1705 = vunpack.c.l.b16 %v1673
    %v1706 = vunpack.c.l.b16 %v1674
    %v1707 = vunpack.c.l.b16 %v1675
    %v1708 = vunpack.c.l.b16 %v1676
    %v1709 = vunpack.c.l.b16 %v1677
    %v1710 = vunpack.c.l.b16 %v1678
    %v1711 = vunpack.c.l.b16 %v1679
    %v1712 = vunpack.c.l.b16 %v1680
    %v1713 = vunpack.c.l.b16 %v1681
    %v1714 = vunpack.c.l.b16 %v1682
    %v1715 = vunpack.c.l.b16 %v1683
    %v1716 = vunpack.c.l.b16 %v1684
    %v1717 = vunpack.c.l.b16 %v1685
    %v1718 = vunpack.c.l.b16 %v1686
    %v1719 = vunpack.c.l.b16 %v1687
    %v1720 = vpack.c.b16 %v1705, %v1704
    %v1721 = vpack.c.b16 %v1707, %v1706
    %v1722 = vpack.c.b16 %v1709, %v1708
    %v1723 = vpack.c.b16 %v1711, %v1710
    %v1724 = vpack.c.b16 %v1713, %v1712
    %v1725 = vpack.c.b16 %v1715, %v1714
    %v1726 = vpack.c.b16 %v1717, %v1716
    %v1727 = vpack.c.b16 %v1719, %v1718
    %1736 = vmatprep.subr.bf16.mxu0 0
    %1737 = vmatpush1.bf16.msra.mxu0 %v1720
    %1738 = vmatprep.subr.bf16.mxu0 0
    %1739 = vmatpush1.bf16.msra.mxu0 %v1721
    %1740 = vmatprep.subr.bf16.mxu0 0
    %1741 = vmatpush1.bf16.msra.mxu0 %v1722
    %1742 = vmatprep.subr.bf16.mxu0 0
    %1743 = vmatpush1.bf16.msra.mxu0 %v1723
    %1744 = vmatprep.subr.bf16.mxu0 0
    %1745 = vmatpush1.bf16.msra.mxu0 %v1724
    %1746 = vmatprep.subr.bf16.mxu0 0
    %1747 = vmatpush1.bf16.msra.mxu0 %v1725
    %1748 = vmatprep.subr.bf16.mxu0 0
    %1749 = vmatpush1.bf16.msra.mxu0 %v1726
    %1750 = vmatprep.subr.bf16.mxu0 0
    %1751 = vmatpush1.bf16.msra.mxu0 %v1727
    %1752 = vmatprep.subr.bf16.mxu0 0
    %1753 = vmatpush1.bf16.msra.mxu0 0
    %1754 = vmatprep.subr.bf16.mxu0 0
    %1755 = vmatpush1.bf16.msra.mxu0 0
    %1756 = vmatprep.subr.bf16.mxu0 0
    %1757 = vmatpush1.bf16.msra.mxu0 0
    %1758 = vmatprep.subr.bf16.mxu0 0
    %1759 = vmatpush1.bf16.msra.mxu0 0
    %1760 = vmatprep.subr.bf16.mxu0 0
    %1761 = vmatpush1.bf16.msra.mxu0 0
    %1762 = vmatprep.subr.bf16.mxu0 0
    %1763 = vmatpush1.bf16.msra.mxu0 0
    %1764 = vmatprep.subr.bf16.mxu0 0
    %1765 = vmatpush1.bf16.msra.mxu0 0
    %1766 = vmatprep.subr.bf16.mxu0 0
    %1767 = vmatpush1.bf16.msra.mxu0 0
    %1768 = vmatprep.mubr.bf16.mxu0 0
    %1769 = vmatmul.mubr.bf16.gmra.mrb[0].mxu0 %v1664
    %v1770 = vpop.f32.mrb[0].mxu0
    %v1771 = vadd.f32 0.0, %v1770
    %v1772 = vpop.f32.mrb[0].mxu0
    %v1773 = vpop.f32.mrb[0].mxu0
    %v1774 = vadd.f32 0.0, %v1773
    %v1775 = vpop.f32.mrb[0].mxu0
    %1776 = vmatprep.mubr.bf16.mxu0 0
    %1777 = vmatmul.mubr.bf16.gmra.mrb[0].mxu0 %v1665
    %v1778 = vpop.f32.mrb[0].mxu0
    %v1779 = vadd.f32 0.0, %v1778
    %v1780 = vpop.f32.mrb[0].mxu0
    %v1781 = vpop.f32.mrb[0].mxu0
    %v1782 = vadd.f32 0.0, %v1781
    %v1783 = vpop.f32.mrb[0].mxu0
    %1784 = vmatprep.mubr.bf16.mxu0 0
    %1785 = vmatmul.mubr.bf16.gmra.mrb[0].mxu0 %v1666
    %v1786 = vpop.f32.mrb[0].mxu0
    %v1787 = vadd.f32 0.0, %v1786
    %v1788 = vpop.f32.mrb[0].mxu0
    %v1789 = vpop.f32.mrb[0].mxu0
    %v1790 = vadd.f32 0.0, %v1789
    %v1791 = vpop.f32.mrb[0].mxu0
    %1792 = vmatprep.mubr.bf16.mxu0 0
    %1793 = vmatmul.mubr.bf16.gmra.mrb[0].mxu0 %v1667
    %v1794 = vpop.f32.mrb[0].mxu0
    %v1795 = vadd.f32 0.0, %v1794
    %v1796 = vpop.f32.mrb[0].mxu0
    %v1797 = vpop.f32.mrb[0].mxu0
    %v1798 = vadd.f32 0.0, %v1797
    %v1799 = vpop.f32.mrb[0].mxu0
    %1800 = vmatprep.mubr.bf16.mxu0 0
    %1801 = vmatmul.mubr.bf16.gmra.mrb[0].mxu0 %v1668
    %v1802 = vpop.f32.mrb[0].mxu0
    %v1803 = vadd.f32 0.0, %v1802
    %v1804 = vpop.f32.mrb[0].mxu0
    %v1805 = vpop.f32.mrb[0].mxu0
    %v1806 = vadd.f32 0.0, %v1805
    %v1807 = vpop.f32.mrb[0].mxu0
    %1808 = vmatprep.mubr.bf16.mxu0 0
    %1809 = vmatmul.mubr.bf16.gmra.mrb[0].mxu0 %v1669
    %v1810 = vpop.f32.mrb[0].mxu0
    %v1811 = vadd.f32 0.0, %v1810
    %v1812 = vpop.f32.mrb[0].mxu0
    %v1813 = vpop.f32.mrb[0].mxu0
    %v1814 = vadd.f32 0.0, %v1813
    %v1815 = vpop.f32.mrb[0].mxu0
    %1816 = vmatprep.mubr.bf16.mxu0 0
    %1817 = vmatmul.mubr.bf16.gmra.mrb[0].mxu0 %v1670
    %v1818 = vpop.f32.mrb[0].mxu0
    %v1819 = vadd.f32 0.0, %v1818
    %v1820 = vpop.f32.mrb[0].mxu0
    %v1821 = vpop.f32.mrb[0].mxu0
    %v1822 = vadd.f32 0.0, %v1821
    %v1823 = vpop.f32.mrb[0].mxu0
    %1824 = vmatprep.mubr.bf16.mxu0 0
    %1825 = vmatmul.mubr.bf16.gmra.mrb[0].mxu0 %v1671
    %v1826 = vpop.f32.mrb[0].mxu0
    %v1827 = vadd.f32 0.0, %v1826
    %v1828 = vpop.f32.mrb[0].mxu0
    %v1829 = vpop.f32.mrb[0].mxu0
    %v1830 = vadd.f32 0.0, %v1829
    %v1831 = vpop.f32.mrb[0].mxu0
    %1832 = vdwg.mxu0
    %v1833 = vmax.f32 %v1771, 0.0
    %v1834 = vmax.f32 %v1774, 0.0
    %v1835 = vmax.f32 %v1779, 0.0
    %v1836 = vmax.f32 %v1782, 0.0
    %v1837 = vmax.f32 %v1787, 0.0
    %v1838 = vmax.f32 %v1790, 0.0
    %v1839 = vmax.f32 %v1795, 0.0
    %v1840 = vmax.f32 %v1798, 0.0
    %v1841 = vmax.f32 %v1803, 0.0
    %v1842 = vmax.f32 %v1806, 0.0
    %v1843 = vmax.f32 %v1811, 0.0
    %v1844 = vmax.f32 %v1814, 0.0
    %v1845 = vmax.f32 %v1819, 0.0
    %v1846 = vmax.f32 %v1822, 0.0
    %v1847 = vmax.f32 %v1827, 0.0
    %v1848 = vmax.f32 %v1830, 0.0
    %1849 = vadd.xlane.f32.xlu0 %v1833
    %v1850 = vpop.xlane.xlu0 %1849
    %1851 = vadd.xlane.f32.xlu0 %v1834
    %v1852 = vpop.xlane.xlu0 %1851
    %1853 = vadd.xlane.f32.xlu0 %v1835
    %v1854 = vpop.xlane.xlu0 %1853
    %1855 = vadd.xlane.f32.xlu0 %v1836
    %v1856 = vpop.xlane.xlu0 %1855
    %1857 = vadd.xlane.f32.xlu0 %v1837
    %v1858 = vpop.xlane.xlu0 %1857
    %1859 = vadd.xlane.f32.xlu0 %v1838
    %v1860 = vpop.xlane.xlu0 %1859
    %1861 = vadd.xlane.f32.xlu0 %v1839
    %v1862 = vpop.xlane.xlu0 %1861
    %1863 = vadd.xlane.f32.xlu0 %v1840
    %v1864 = vpop.xlane.xlu0 %1863
    %1865 = vadd.xlane.f32.xlu0 %v1841
    %v1866 = vpop.xlane.xlu0 %1865
    %1867 = vadd.xlane.f32.xlu0 %v1842
    %v1868 = vpop.xlane.xlu0 %1867
    %1869 = vadd.xlane.f32.xlu0 %v1843
    %v1870 = vpop.xlane.xlu0 %1869
    %1871 = vadd.xlane.f32.xlu0 %v1844
    %v1872 = vpop.xlane.xlu0 %1871
    %1873 = vadd.xlane.f32.xlu0 %v1845
    %v1874 = vpop.xlane.xlu0 %1873
    %1875 = vadd.xlane.f32.xlu0 %v1846
    %v1876 = vpop.xlane.xlu0 %1875
    %1877 = vadd.xlane.f32.xlu0 %v1847
    %v1878 = vpop.xlane.xlu0 %1877
    %1879 = vadd.xlane.f32.xlu0 %v1848
    %v1880 = vpop.xlane.xlu0 %1879
    %v1881 = vmul.f32 %v1850, %v873
    %v1882 = vmul.f32 %v1852, %v873
    %v1883 = vmul.f32 %v1854, %v873
    %v1884 = vmul.f32 %v1856, %v873
    %v1885 = vmul.f32 %v1858, %v873
    %v1886 = vmul.f32 %v1860, %v873
    %v1887 = vmul.f32 %v1862, %v873
    %v1888 = vmul.f32 %v1864, %v873
    %v1889 = vmul.f32 %v1866, %v873
    %v1890 = vmul.f32 %v1868, %v873
    %v1891 = vmul.f32 %v1870, %v873
    %v1892 = vmul.f32 %v1872, %v873
    %v1893 = vmul.f32 %v1874, %v873
    %v1894 = vmul.f32 %v1876, %v873
    %v1895 = vmul.f32 %v1878, %v873
    %v1896 = vmul.f32 %v1880, %v873
    %v1897 = vsub.f32 %v1833, %v1881
    %v1898 = vsub.f32 %v1834, %v1882
    %v1899 = vsub.f32 %v1835, %v1883
    %v1900 = vsub.f32 %v1836, %v1884
    %v1901 = vsub.f32 %v1837, %v1885
    %v1902 = vsub.f32 %v1838, %v1886
    %v1903 = vsub.f32 %v1839, %v1887
    %v1904 = vsub.f32 %v1840, %v1888
    %v1905 = vsub.f32 %v1841, %v1889
    %v1906 = vsub.f32 %v1842, %v1890
    %v1907 = vsub.f32 %v1843, %v1891
    %v1908 = vsub.f32 %v1844, %v1892
    %v1909 = vsub.f32 %v1845, %v1893
    %v1910 = vsub.f32 %v1846, %v1894
    %v1911 = vsub.f32 %v1847, %v1895
    %v1912 = vsub.f32 %v1848, %v1896
    %v1913 = vmul.f32 %v1897, %v1897
    %v1914 = vmul.f32 %v1898, %v1898
    %v1915 = vmul.f32 %v1899, %v1899
    %v1916 = vmul.f32 %v1900, %v1900
    %v1917 = vmul.f32 %v1901, %v1901
    %v1918 = vmul.f32 %v1902, %v1902
    %v1919 = vmul.f32 %v1903, %v1903
    %v1920 = vmul.f32 %v1904, %v1904
    %v1921 = vmul.f32 %v1905, %v1905
    %v1922 = vmul.f32 %v1906, %v1906
    %v1923 = vmul.f32 %v1907, %v1907
    %v1924 = vmul.f32 %v1908, %v1908
    %v1925 = vmul.f32 %v1909, %v1909
    %v1926 = vmul.f32 %v1910, %v1910
    %v1927 = vmul.f32 %v1911, %v1911
    %v1928 = vmul.f32 %v1912, %v1912
    %1929 = vadd.xlane.f32.xlu0 %v1913
    %v1930 = vpop.xlane.xlu0 %1929
    %1931 = vadd.xlane.f32.xlu0 %v1914
    %v1932 = vpop.xlane.xlu0 %1931
    %1933 = vadd.xlane.f32.xlu0 %v1915
    %v1934 = vpop.xlane.xlu0 %1933
    %1935 = vadd.xlane.f32.xlu0 %v1916
    %v1936 = vpop.xlane.xlu0 %1935
    %1937 = vadd.xlane.f32.xlu0 %v1917
    %v1938 = vpop.xlane.xlu0 %1937
    %1939 = vadd.xlane.f32.xlu0 %v1918
    %v1940 = vpop.xlane.xlu0 %1939
    %1941 = vadd.xlane.f32.xlu0 %v1919
    %v1942 = vpop.xlane.xlu0 %1941
    %1943 = vadd.xlane.f32.xlu0 %v1920
    %v1944 = vpop.xlane.xlu0 %1943
    %1945 = vadd.xlane.f32.xlu0 %v1921
    %v1946 = vpop.xlane.xlu0 %1945
    %1947 = vadd.xlane.f32.xlu0 %v1922
    %v1948 = vpop.xlane.xlu0 %1947
    %1949 = vadd.xlane.f32.xlu0 %v1923
    %v1950 = vpop.xlane.xlu0 %1949
    %1951 = vadd.xlane.f32.xlu0 %v1924
    %v1952 = vpop.xlane.xlu0 %1951
    %1953 = vadd.xlane.f32.xlu0 %v1925
    %v1954 = vpop.xlane.xlu0 %1953
    %1955 = vadd.xlane.f32.xlu0 %v1926
    %v1956 = vpop.xlane.xlu0 %1955
    %1957 = vadd.xlane.f32.xlu0 %v1927
    %v1958 = vpop.xlane.xlu0 %1957
    %1959 = vadd.xlane.f32.xlu0 %v1928
    %v1960 = vpop.xlane.xlu0 %1959
    %v1961 = vmul.f32 %v1930, %v873
    %v1962 = vmul.f32 %v1932, %v873
    %v1963 = vmul.f32 %v1934, %v873
    %v1964 = vmul.f32 %v1936, %v873
    %v1965 = vmul.f32 %v1938, %v873
    %v1966 = vmul.f32 %v1940, %v873
    %v1967 = vmul.f32 %v1942, %v873
    %v1968 = vmul.f32 %v1944, %v873
    %v1969 = vmul.f32 %v1946, %v873
    %v1970 = vmul.f32 %v1948, %v873
    %v1971 = vmul.f32 %v1950, %v873
    %v1972 = vmul.f32 %v1952, %v873
    %v1973 = vmul.f32 %v1954, %v873
    %v1974 = vmul.f32 %v1956, %v873
    %v1975 = vmul.f32 %v1958, %v873
    %v1976 = vmul.f32 %v1960, %v873
    %v1977 = vadd.f32 %v1961, 1e-05
    %v1978 = vadd.f32 %v1962, 1e-05
    %v1979 = vadd.f32 %v1963, 1e-05
    %v1980 = vadd.f32 %v1964, 1e-05
    %v1981 = vadd.f32 %v1965, 1e-05
    %v1982 = vadd.f32 %v1966, 1e-05
    %v1983 = vadd.f32 %v1967, 1e-05
    %v1984 = vadd.f32 %v1968, 1e-05
    %v1985 = vadd.f32 %v1969, 1e-05
    %v1986 = vadd.f32 %v1970, 1e-05
    %v1987 = vadd.f32 %v1971, 1e-05
    %v1988 = vadd.f32 %v1972, 1e-05
    %v1989 = vadd.f32 %v1973, 1e-05
    %v1990 = vadd.f32 %v1974, 1e-05
    %v1991 = vadd.f32 %v1975, 1e-05
    %v1992 = vadd.f32 %v1976, 1e-05
    %v1993 = vrsqrt.pop %v1977
    %v1994 = vrsqrt.pop %v1978
    %v1995 = vrsqrt.pop %v1979
    %v1996 = vrsqrt.pop %v1980
    %v1997 = vrsqrt.pop %v1981
    %v1998 = vrsqrt.pop %v1982
    %v1999 = vrsqrt.pop %v1983
    %v2000 = vrsqrt.pop %v1984
    %v2001 = vrsqrt.pop %v1985
    %v2002 = vrsqrt.pop %v1986
    %v2003 = vrsqrt.pop %v1987
    %v2004 = vrsqrt.pop %v1988
    %v2005 = vrsqrt.pop %v1989
    %v2006 = vrsqrt.pop %v1990
    %v2007 = vrsqrt.pop %v1991
    %v2008 = vrsqrt.pop %v1992
    %v2009 = vmul.f32 %v1897, %v1993
    %v2010 = vmul.f32 %v1898, %v1994
    %v2011 = vmul.f32 %v1899, %v1995
    %v2012 = vmul.f32 %v1900, %v1996
    %v2013 = vmul.f32 %v1901, %v1997
    %v2014 = vmul.f32 %v1902, %v1998
    %v2015 = vmul.f32 %v1903, %v1999
    %v2016 = vmul.f32 %v1904, %v2000
    %v2017 = vmul.f32 %v1905, %v2001
    %v2018 = vmul.f32 %v1906, %v2002
    %v2019 = vmul.f32 %v1907, %v2003
    %v2020 = vmul.f32 %v1908, %v2004
    %v2021 = vmul.f32 %v1909, %v2005
    %v2022 = vmul.f32 %v1910, %v2006
    %v2023 = vmul.f32 %v1911, %v2007
    %v2024 = vmul.f32 %v1912, %v2008
    %v2025 = vmul.f32 %v2009, %v1022
    %v2026 = vmul.f32 %v2010, %v1022
    %v2027 = vmul.f32 %v2011, %v1022
    %v2028 = vmul.f32 %v2012, %v1022
    %v2029 = vmul.f32 %v2013, %v1022
    %v2030 = vmul.f32 %v2014, %v1022
    %v2031 = vmul.f32 %v2015, %v1022
    %v2032 = vmul.f32 %v2016, %v1022
    %v2033 = vmul.f32 %v2017, %v1022
    %v2034 = vmul.f32 %v2018, %v1022
    %v2035 = vmul.f32 %v2019, %v1022
    %v2036 = vmul.f32 %v2020, %v1022
    %v2037 = vmul.f32 %v2021, %v1022
    %v2038 = vmul.f32 %v2022, %v1022
    %v2039 = vmul.f32 %v2023, %v1022
    %v2040 = vmul.f32 %v2024, %v1022
    %v2041 = vadd.f32 %v2025, %v1044
    %v2042 = vadd.f32 %v2026, %v1044
    %v2043 = vadd.f32 %v2027, %v1044
    %v2044 = vadd.f32 %v2028, %v1044
    %v2045 = vadd.f32 %v2029, %v1044
    %v2046 = vadd.f32 %v2030, %v1044
    %v2047 = vadd.f32 %v2031, %v1044
    %v2048 = vadd.f32 %v2032, %v1044
    %v2049 = vadd.f32 %v2033, %v1044
    %v2050 = vadd.f32 %v2034, %v1044
    %v2051 = vadd.f32 %v2035, %v1044
    %v2052 = vadd.f32 %v2036, %v1044
    %v2053 = vadd.f32 %v2037, %v1044
    %v2054 = vadd.f32 %v2038, %v1044
    %v2055 = vadd.f32 %v2039, %v1044
    %v2056 = vadd.f32 %v2040, %v1044
    %2057 = vst [vmem:[#allocation8 + $0x80] sm:$0xff] %v2041
    %2058 = vst [vmem:[#allocation8 + $0x88] sm:$0xff] %v2042
    %2059 = vst [vmem:[#allocation8 + $0x90] sm:$0xff] %v2043
    %2060 = vst [vmem:[#allocation8 + $0x98] sm:$0xff] %v2044
    %2061 = vst [vmem:[#allocation8 + $0xa0] sm:$0xff] %v2045
    %2062 = vst [vmem:[#allocation8 + $0xa8] sm:$0xff] %v2046
    %2063 = vst [vmem:[#allocation8 + $0xb0] sm:$0xff] %v2047
    %2064 = vst [vmem:[#allocation8 + $0xb8] sm:$0xff] %v2048
    %2065 = vst [vmem:[#allocation8 + $0xc0] sm:$0xff] %v2049
    %2066 = vst [vmem:[#allocation8 + $0xc8] sm:$0xff] %v2050
    %2067 = vst [vmem:[#allocation8 + $0xd0] sm:$0xff] %v2051
    %2068 = vst [vmem:[#allocation8 + $0xd8] sm:$0xff] %v2052
    %2069 = vst [vmem:[#allocation8 + $0xe0] sm:$0xff] %v2053
    %2070 = vst [vmem:[#allocation8 + $0xe8] sm:$0xff] %v2054
    %2071 = vst [vmem:[#allocation8 + $0xf0] sm:$0xff] %v2055
    %2072 = vst [vmem:[#allocation8 + $0xf8] sm:$0xff] %v2056
    // Predicated region
    $region38: #{tpu_custom_call.1} parent=1 // pred_check
      _
    $region39: #{tpu_custom_call.1} parent=1 // pred_check_branch
      %2074 = sbr.rel (0) target = $region41
    $region40: #{tpu_custom_call.1} parent=1 // pred_region
      %s2076 = ssub.s32 4096, 4096
      %2077 = vsyncadd [#allocation4], %s2076
      %s2078 = sshll.u32 [#allocation8], 4
      %s2079 = int_to_ptr.vmem [resolvable:$true] %s2078
      %2084 = dma.vmem_to_hbm [thread:$0]  %s2079, 4096, %s6, [#allocation4], 128, 128, 8
    $region41: #{tpu_custom_call.1} parent=1 // pred_fallthru
      _
    // Predicated region
    $region42: #{tpu_custom_call.1} parent=1 // pred_check
      _
    $region43: #{tpu_custom_call.1} parent=1 // pred_check_branch
      %2086 = sbr.rel (0) target = $region45
    $region44: #{tpu_custom_call.1} parent=1 // pred_region
      %2087 = dma.done [#allocation4], 4096
    $region45: #{tpu_custom_call.1} parent=1 // pred_fallthru
      _
    %2088 = vsyncpa [#allocation3], 1
    %2089 = vsyncpa [#allocation6], 1
    %2090 = vsyncpa [#allocation4], 1

// kernel: tpu_custom_call.1
$region0: #{tpu_custom_call.1}
  #allocation0 [shape = 'u32[]', space=smem, size = 0x4, offset = 0x4, fixed_abs, tag = 'smem constant byte address 0x4 - core index']
  #allocation1 [shape = 'u32[144,128]{1,0:T(1,128)}', space=vmem, size = 0x12000, scoped, tag = 'internal scratch']
  %s0 = inlined_call_operand.hbm [shape: f32[256,128], index: 0, kind: input, shape index: {}]
  %s1 = inlined_call_operand.hbm [shape: bf16[3,128,128], index: 1, kind: input, shape index: {}]
  %s2 = inlined_call_operand.vmem [shape: f32[3,128], index: 2, kind: input, shape index: {}]
  %s3 = inlined_call_operand.hbm [shape: bf16[128,128], index: 3, kind: input, shape index: {}]
  %s4 = inlined_call_operand.vmem [shape: f32[1,128], index: 4, kind: input, shape index: {}]
  %s5 = inlined_call_operand.vmem [shape: f32[1,128], index: 5, kind: input, shape index: {}]
  %s6 = inlined_call_operand.hbm [shape: f32[256,128], index: 6, kind: output, shape index: {}]
  %s7 = sld [smem:[#allocation0]]
  $region46: #{tpu_custom_call.1} parent=0
    _
  %s9 = ssub.s32 1, %s7
  %s10 = scalar_select 0, %s9, %s7
  $region1: #{tpu_custom_call.1} parent=0
    #allocation2 [shape = 'u8[131072]{0}', space=vmem, size = 0x20000, scoped, tag = 'input window, operand 0, single buffered']
    #allocation3 [shape = 's32[1]{0}', space=sflag, size = 0x4, scoped, tag = 'scoped memory for tpu_custom_call.1']
    #allocation4 [shape = 's32[1]{0}', space=sflag, size = 0x4, scoped, tag = 'scoped memory for tpu_custom_call.1']
    #allocation5 [shape = 'u8[98304]{0}', space=vmem, size = 0x18000, scoped, tag = 'input window, operand 1, single buffered']
    #allocation6 [shape = 's32[1]{0}', space=sflag, size = 0x4, scoped, tag = 'scoped memory for tpu_custom_call.1']
    #allocation7 [shape = 'u8[32768]{0}', space=vmem, size = 0x8000, scoped, tag = 'input window, operand 3, single buffered']
    #allocation8 [shape = 'u8[131072]{0}', space=vmem, size = 0x20000, scoped, tag = 'output window, operand 0, single buffered']
    %11 = vsyncpa [#allocation3], 0
    %12 = vsyncpa [#allocation6], 0
    %13 = vsyncpa [#allocation4], 0
    // Predicated region
    $region2: #{tpu_custom_call.1} parent=1 // pred_check
      _
    $region3: #{tpu_custom_call.1} parent=1 // pred_check_branch
      %15 = sbr.rel (0) target = $region5
    $region4: #{tpu_custom_call.1} parent=1 // pred_region
      %s17 = ssub.s32 4096, 4096
      %18 = vsyncadd [#allocation3], %s17
      %s19 = sshll.u32 [#allocation2], 4
      %s20 = int_to_ptr.vmem [resolvable:$true] %s19
      %25 = dma.hbm_to_vmem [thread:$0]  %s0, 4096, %s20, [#allocation3], 128, 128, 8
    $region5: #{tpu_custom_call.1} parent=1 // pred_fallthru
      _
    // Predicated region
    $region6: #{tpu_custom_call.1} parent=1 // pred_check
      _
    $region7: #{tpu_custom_call.1} parent=1 // pred_check_branch
      %27 = sbr.rel (0) target = $region9
    $region8: #{tpu_custom_call.1} parent=1 // pred_region
      %s29 = ssub.s32 3072, 3072
      %30 = vsyncadd [#allocation6], %s29
      %s31 = sshll.u32 [#allocation5], 4
      %s32 = int_to_ptr.vmem [resolvable:$true] %s31
      %37 = dma.hbm_to_vmem [thread:$0]  %s1, 3072, %s32, [#allocation6], 64, 64, 4
    $region9: #{tpu_custom_call.1} parent=1 // pred_fallthru
      _
    // Predicated region
    $region10: #{tpu_custom_call.1} parent=1 // pred_check
      _
    $region11: #{tpu_custom_call.1} parent=1 // pred_check_branch
      %39 = sbr.rel (0) target = $region13
    $region12: #{tpu_custom_call.1} parent=1 // pred_region
      _
    $region13: #{tpu_custom_call.1} parent=1 // pred_fallthru
      _
    // Predicated region
    $region14: #{tpu_custom_call.1} parent=1 // pred_check
      _
    $region15: #{tpu_custom_call.1} parent=1 // pred_check_branch
      %41 = sbr.rel (0) target = $region17
    $region16: #{tpu_custom_call.1} parent=1 // pred_region
      %s43 = ssub.s32 1024, 1024
      %44 = vsyncadd [#allocation6], %s43
      %s45 = sshll.u32 [#allocation7], 4
      %s46 = int_to_ptr.vmem [resolvable:$true] %s45
      %51 = dma.hbm_to_vmem [thread:$0]  %s3, 1024, %s46, [#allocation6], 64, 64, 4
    $region17: #{tpu_custom_call.1} parent=1 // pred_fallthru
      _
    // Predicated region
    $region18: #{tpu_custom_call.1} parent=1 // pred_check
      _
    $region19: #{tpu_custom_call.1} parent=1 // pred_check_branch
      %53 = sbr.rel (0) target = $region21
    $region20: #{tpu_custom_call.1} parent=1 // pred_region
      _
    $region21: #{tpu_custom_call.1} parent=1 // pred_fallthru
      _
    // Predicated region
    $region22: #{tpu_custom_call.1} parent=1 // pred_check
      _
    $region23: #{tpu_custom_call.1} parent=1 // pred_check_branch
      %55 = sbr.rel (0) target = $region25
    $region24: #{tpu_custom_call.1} parent=1 // pred_region
      _
    $region25: #{tpu_custom_call.1} parent=1 // pred_fallthru
      _
    // Predicated region
    $region26: #{tpu_custom_call.1} parent=1 // pred_check
      _
    $region27: #{tpu_custom_call.1} parent=1 // pred_check_branch
      %57 = sbr.rel (0) target = $region29
    $region28: #{tpu_custom_call.1} parent=1 // pred_region
      %58 = dma.done [#allocation3], 4096
    $region29: #{tpu_custom_call.1} parent=1 // pred_fallthru
      _
    // Predicated region
    $region30: #{tpu_custom_call.1} parent=1 // pred_check
      _
    $region31: #{tpu_custom_call.1} parent=1 // pred_check_branch
      %60 = sbr.rel (0) target = $region33
    $region32: #{tpu_custom_call.1} parent=1 // pred_region
      %61 = dma.done [#allocation6], 3072
    $region33: #{tpu_custom_call.1} parent=1 // pred_fallthru
      _
    // Predicated region
    $region34: #{tpu_custom_call.1} parent=1 // pred_check
      _
    $region35: #{tpu_custom_call.1} parent=1 // pred_check_branch
      %63 = sbr.rel (0) target = $region37
    $region36: #{tpu_custom_call.1} parent=1 // pred_region
      %64 = dma.done [#allocation6], 1024
    $region37: #{tpu_custom_call.1} parent=1 // pred_fallthru
      _
    %v66 = vld [vmem:[%s4] sm:$0x1]
    %v67 = vld [vmem:[%s5] sm:$0x1]
    %v68 = vld [vmem:[#allocation2] sm:$0xff]
    %v69 = vld [vmem:[#allocation2 + $0x8] sm:$0xff]
    %v70 = vld [vmem:[#allocation2 + $0x10] sm:$0xff]
    %v71 = vld [vmem:[#allocation2 + $0x18] sm:$0xff]
    %v72 = vld [vmem:[#allocation2 + $0x20] sm:$0xff]
    %v73 = vld [vmem:[#allocation2 + $0x28] sm:$0xff]
    %v74 = vld [vmem:[#allocation2 + $0x30] sm:$0xff]
    %v75 = vld [vmem:[#allocation2 + $0x38] sm:$0xff]
    %v76 = vld [vmem:[#allocation2 + $0x40] sm:$0xff]
    %v77 = vld [vmem:[#allocation2 + $0x48] sm:$0xff]
    %v78 = vld [vmem:[#allocation2 + $0x50] sm:$0xff]
    %v79 = vld [vmem:[#allocation2 + $0x58] sm:$0xff]
    %v80 = vld [vmem:[#allocation2 + $0x60] sm:$0xff]
    %v81 = vld [vmem:[#allocation2 + $0x68] sm:$0xff]
    %v82 = vld [vmem:[#allocation2 + $0x70] sm:$0xff]
    %v83 = vld [vmem:[#allocation2 + $0x78] sm:$0xff]
    %v84 = vpack.c.bf16 %v69, %v68
    %v85 = vpack.c.bf16 %v71, %v70
    %v86 = vpack.c.bf16 %v73, %v72
    %v87 = vpack.c.bf16 %v75, %v74
    %v88 = vpack.c.bf16 %v77, %v76
    %v89 = vpack.c.bf16 %v79, %v78
    %v90 = vpack.c.bf16 %v81, %v80
    %v91 = vpack.c.bf16 %v83, %v82
    %v92 = vld [vmem:[#allocation5] sm:$0xf]
    %v93 = vld [vmem:[#allocation5 + $0x4] sm:$0xf]
    %v94 = vld [vmem:[#allocation5 + $0x8] sm:$0xf]
    %v95 = vld [vmem:[#allocation5 + $0xc] sm:$0xf]
    %v96 = vld [vmem:[#allocation5 + $0x10] sm:$0xf]
    %v97 = vld [vmem:[#allocation5 + $0x14] sm:$0xf]
    %v98 = vld [vmem:[#allocation5 + $0x18] sm:$0xf]
    %v99 = vld [vmem:[#allocation5 + $0x1c] sm:$0xf]
    %v100 = vld [vmem:[#allocation5 + $0x20] sm:$0xf]
    %v101 = vld [vmem:[#allocation5 + $0x24] sm:$0xf]
    %v102 = vld [vmem:[#allocation5 + $0x28] sm:$0xf]
    %v103 = vld [vmem:[#allocation5 + $0x2c] sm:$0xf]
    %v104 = vld [vmem:[#allocation5 + $0x30] sm:$0xf]
    %v105 = vld [vmem:[#allocation5 + $0x34] sm:$0xf]
    %v106 = vld [vmem:[#allocation5 + $0x38] sm:$0xf]
    %v107 = vld [vmem:[#allocation5 + $0x3c] sm:$0xf]
    %v108 = vld [vmem:[%s2] sm:$0x1]
    %v109 = vlaneseq
    %v110 = vshrl.u32 %v109, 7
    %v111 = vsub.s32 0, %v110
    %v112 = vrot.slane %v108, %v111
    %v129 = vunpack.c.l.b16 %v92
    %v130 = vunpack.c.l.b16 %v93
    %v131 = vunpack.c.l.b16 %v94
    %v132 = vunpack.c.l.b16 %v95
    %v133 = vunpack.c.l.b16 %v96
    %v134 = vunpack.c.l.b16 %v97
    %v135 = vunpack.c.l.b16 %v98
    %v136 = vunpack.c.l.b16 %v99
    %v137 = vunpack.c.l.b16 %v100
    %v138 = vunpack.c.l.b16 %v101
    %v139 = vunpack.c.l.b16 %v102
    %v140 = vunpack.c.l.b16 %v103
    %v141 = vunpack.c.l.b16 %v104
    %v142 = vunpack.c.l.b16 %v105
    %v143 = vunpack.c.l.b16 %v106
    %v144 = vunpack.c.l.b16 %v107
    %v145 = vpack.c.b16 %v130, %v129
    %v146 = vpack.c.b16 %v132, %v131
    %v147 = vpack.c.b16 %v134, %v133
    %v148 = vpack.c.b16 %v136, %v135
    %v149 = vpack.c.b16 %v138, %v137
    %v150 = vpack.c.b16 %v140, %v139
    %v151 = vpack.c.b16 %v142, %v141
    %v152 = vpack.c.b16 %v144, %v143
    %161 = vmatprep.subr.bf16.mxu0 0
    %162 = vmatpush1.bf16.msra.mxu0 %v145
    %163 = vmatprep.subr.bf16.mxu0 0
    %164 = vmatpush1.bf16.msra.mxu0 %v146
    %165 = vmatprep.subr.bf16.mxu0 0
    %166 = vmatpush1.bf16.msra.mxu0 %v147
    %167 = vmatprep.subr.bf16.mxu0 0
    %168 = vmatpush1.bf16.msra.mxu0 %v148
    %169 = vmatprep.subr.bf16.mxu0 0
    %170 = vmatpush1.bf16.msra.mxu0 %v149
    %171 = vmatprep.subr.bf16.mxu0 0
    %172 = vmatpush1.bf16.msra.mxu0 %v150
    %173 = vmatprep.subr.bf16.mxu0 0
    %174 = vmatpush1.bf16.msra.mxu0 %v151
    %175 = vmatprep.subr.bf16.mxu0 0
    %176 = vmatpush1.bf16.msra.mxu0 %v152
    %177 = vmatprep.subr.bf16.mxu0 0
    %178 = vmatpush1.bf16.msra.mxu0 0
    %179 = vmatprep.subr.bf16.mxu0 0
    %180 = vmatpush1.bf16.msra.mxu0 0
    %181 = vmatprep.subr.bf16.mxu0 0
    %182 = vmatpush1.bf16.msra.mxu0 0
    %183 = vmatprep.subr.bf16.mxu0 0
    %184 = vmatpush1.bf16.msra.mxu0 0
    %185 = vmatprep.subr.bf16.mxu0 0
    %186 = vmatpush1.bf16.msra.mxu0 0
    %187 = vmatprep.subr.bf16.mxu0 0
    %188 = vmatpush1.bf16.msra.mxu0 0
    %189 = vmatprep.subr.bf16.mxu0 0
    %190 = vmatpush1.bf16.msra.mxu0 0
    %191 = vmatprep.subr.bf16.mxu0 0
    %192 = vmatpush1.bf16.msra.mxu0 0
    %193 = vmatprep.mubr.bf16.mxu0 0
    %194 = vmatmul.mubr.bf16.gmra.mrb[0].mxu0 %v84
    %v195 = vpop.f32.mrb[0].mxu0
    %v196 = vadd.f32 %v112, %v195
    %v197 = vpop.f32.mrb[0].mxu0
    %v198 = vpop.f32.mrb[0].mxu0
    %v199 = vadd.f32 %v112, %v198
    %v200 = vpop.f32.mrb[0].mxu0
    %201 = vmatprep.mubr.bf16.mxu0 0
    %202 = vmatmul.mubr.bf16.gmra.mrb[0].mxu0 %v85
    %v203 = vpop.f32.mrb[0].mxu0
    %v204 = vadd.f32 %v112, %v203
    %v205 = vpop.f32.mrb[0].mxu0
    %v206 = vpop.f32.mrb[0].mxu0
    %v207 = vadd.f32 %v112, %v206
    %v208 = vpop.f32.mrb[0].mxu0
    %209 = vmatprep.mubr.bf16.mxu0 0
    %210 = vmatmul.mubr.bf16.gmra.mrb[0].mxu0 %v86
    %v211 = vpop.f32.mrb[0].mxu0
    %v212 = vadd.f32 %v112, %v211
    %v213 = vpop.f32.mrb[0].mxu0
    %v214 = vpop.f32.mrb[0].mxu0
    %v215 = vadd.f32 %v112, %v214
    %v216 = vpop.f32.mrb[0].mxu0
    %217 = vmatprep.mubr.bf16.mxu0 0
    %218 = vmatmul.mubr.bf16.gmra.mrb[0].mxu0 %v87
    %v219 = vpop.f32.mrb[0].mxu0
    %v220 = vadd.f32 %v112, %v219
    %v221 = vpop.f32.mrb[0].mxu0
    %v222 = vpop.f32.mrb[0].mxu0
    %v223 = vadd.f32 %v112, %v222
    %v224 = vpop.f32.mrb[0].mxu0
    %225 = vmatprep.mubr.bf16.mxu0 0
    %226 = vmatmul.mubr.bf16.gmra.mrb[0].mxu0 %v88
    %v227 = vpop.f32.mrb[0].mxu0
    %v228 = vadd.f32 %v112, %v227
    %v229 = vpop.f32.mrb[0].mxu0
    %v230 = vpop.f32.mrb[0].mxu0
    %v231 = vadd.f32 %v112, %v230
    %v232 = vpop.f32.mrb[0].mxu0
    %233 = vmatprep.mubr.bf16.mxu0 0
    %234 = vmatmul.mubr.bf16.gmra.mrb[0].mxu0 %v89
    %v235 = vpop.f32.mrb[0].mxu0
    %v236 = vadd.f32 %v112, %v235
    %v237 = vpop.f32.mrb[0].mxu0
    %v238 = vpop.f32.mrb[0].mxu0
    %v239 = vadd.f32 %v112, %v238
    %v240 = vpop.f32.mrb[0].mxu0
    %241 = vmatprep.mubr.bf16.mxu0 0
    %242 = vmatmul.mubr.bf16.gmra.mrb[0].mxu0 %v90
    %v243 = vpop.f32.mrb[0].mxu0
    %v244 = vadd.f32 %v112, %v243
    %v245 = vpop.f32.mrb[0].mxu0
    %v246 = vpop.f32.mrb[0].mxu0
    %v247 = vadd.f32 %v112, %v246
    %v248 = vpop.f32.mrb[0].mxu0
    %249 = vmatprep.mubr.bf16.mxu0 0
    %250 = vmatmul.mubr.bf16.gmra.mrb[0].mxu0 %v91
    %v251 = vpop.f32.mrb[0].mxu0
    %v252 = vadd.f32 %v112, %v251
    %v253 = vpop.f32.mrb[0].mxu0
    %v254 = vpop.f32.mrb[0].mxu0
    %v255 = vadd.f32 %v112, %v254
    %v256 = vpop.f32.mrb[0].mxu0
    %257 = vdwg.mxu0
    %v258 = vmax.f32 %v196, 0.0
    %v259 = vmax.f32 %v199, 0.0
    %v260 = vmax.f32 %v204, 0.0
    %v261 = vmax.f32 %v207, 0.0
    %v262 = vmax.f32 %v212, 0.0
    %v263 = vmax.f32 %v215, 0.0
    %v264 = vmax.f32 %v220, 0.0
    %v265 = vmax.f32 %v223, 0.0
    %v266 = vmax.f32 %v228, 0.0
    %v267 = vmax.f32 %v231, 0.0
    %v268 = vmax.f32 %v236, 0.0
    %v269 = vmax.f32 %v239, 0.0
    %v270 = vmax.f32 %v244, 0.0
    %v271 = vmax.f32 %v247, 0.0
    %v272 = vmax.f32 %v252, 0.0
    %v273 = vmax.f32 %v255, 0.0
    %v274 = vpack.c.bf16 %v259, %v258
    %v275 = vpack.c.bf16 %v261, %v260
    %v276 = vpack.c.bf16 %v263, %v262
    %v277 = vpack.c.bf16 %v265, %v264
    %v278 = vpack.c.bf16 %v267, %v266
    %v279 = vpack.c.bf16 %v269, %v268
    %v280 = vpack.c.bf16 %v271, %v270
    %v281 = vpack.c.bf16 %v273, %v272
    %s282 = scalar_lea.vmem [#allocation5], 64
    %v283 = vld [vmem:[%s282] sm:$0xf]
    %v284 = vld [vmem:[%s282 + $0x4] sm:$0xf]
    %v285 = vld [vmem:[%s282 + $0x8] sm:$0xf]
    %v286 = vld [vmem:[%s282 + $0xc] sm:$0xf]
    %v287 = vld [vmem:[%s282 + $0x10] sm:$0xf]
    %v288 = vld [vmem:[%s282 + $0x14] sm:$0xf]
    %v289 = vld [vmem:[%s282 + $0x18] sm:$0xf]
    %v290 = vld [vmem:[%s282 + $0x1c] sm:$0xf]
    %v291 = vld [vmem:[%s282 + $0x20] sm:$0xf]
    %v292 = vld [vmem:[%s282 + $0x24] sm:$0xf]
    %v293 = vld [vmem:[%s282 + $0x28] sm:$0xf]
    %v294 = vld [vmem:[%s282 + $0x2c] sm:$0xf]
    %v295 = vld [vmem:[%s282 + $0x30] sm:$0xf]
    %v296 = vld [vmem:[%s282 + $0x34] sm:$0xf]
    %v297 = vld [vmem:[%s282 + $0x38] sm:$0xf]
    %v298 = vld [vmem:[%s282 + $0x3c] sm:$0xf]
    %v299 = vld [vmem:[%s2 + $0x1] sm:$0x1]
    %v300 = vlaneseq
    %v301 = vshrl.u32 %v300, 7
    %v302 = vsub.s32 0, %v301
    %v303 = vrot.slane %v299, %v302
    %v320 = vunpack.c.l.b16 %v283
    %v321 = vunpack.c.l.b16 %v284
    %v322 = vunpack.c.l.b16 %v285
    %v323 = vunpack.c.l.b16 %v286
    %v324 = vunpack.c.l.b16 %v287
    %v325 = vunpack.c.l.b16 %v288
    %v326 = vunpack.c.l.b16 %v289
    %v327 = vunpack.c.l.b16 %v290
    %v328 = vunpack.c.l.b16 %v291
    %v329 = vunpack.c.l.b16 %v292
    %v330 = vunpack.c.l.b16 %v293
    %v331 = vunpack.c.l.b16 %v294
    %v332 = vunpack.c.l.b16 %v295
    %v333 = vunpack.c.l.b16 %v296
    %v334 = vunpack.c.l.b16 %v297
    %v335 = vunpack.c.l.b16 %v298
    %v336 = vpack.c.b16 %v321, %v320
    %v337 = vpack.c.b16 %v323, %v322
    %v338 = vpack.c.b16 %v325, %v324
    %v339 = vpack.c.b16 %v327, %v326
    %v340 = vpack.c.b16 %v329, %v328
    %v341 = vpack.c.b16 %v331, %v330
    %v342 = vpack.c.b16 %v333, %v332
    %v343 = vpack.c.b16 %v335, %v334
    %352 = vmatprep.subr.bf16.mxu0 0
    %353 = vmatpush1.bf16.msra.mxu0 %v336
    %354 = vmatprep.subr.bf16.mxu0 0
    %355 = vmatpush1.bf16.msra.mxu0 %v337
    %356 = vmatprep.subr.bf16.mxu0 0
    %357 = vmatpush1.bf16.msra.mxu0 %v338
    %358 = vmatprep.subr.bf16.mxu0 0
    %359 = vmatpush1.bf16.msra.mxu0 %v339
    %360 = vmatprep.subr.bf16.mxu0 0
    %361 = vmatpush1.bf16.msra.mxu0 %v340
    %362 = vmatprep.subr.bf16.mxu0 0
    %363 = vmatpush1.bf16.msra.mxu0 %v341
    %364 = vmatprep.subr.bf16.mxu0 0
    %365 = vmatpush1.bf16.msra.mxu0 %v342
    %366 = vmatprep.subr.bf16.mxu0 0
    %367 = vmatpush1.bf16.msra.mxu0 %v343
    %368 = vmatprep.subr.bf16.mxu0 0
    %369 = vmatpush1.bf16.msra.mxu0 0
    %370 = vmatprep.subr.bf16.mxu0 0
    %371 = vmatpush1.bf16.msra.mxu0 0
    %372 = vmatprep.subr.bf16.mxu0 0
    %373 = vmatpush1.bf16.msra.mxu0 0
    %374 = vmatprep.subr.bf16.mxu0 0
    %375 = vmatpush1.bf16.msra.mxu0 0
    %376 = vmatprep.subr.bf16.mxu0 0
    %377 = vmatpush1.bf16.msra.mxu0 0
    %378 = vmatprep.subr.bf16.mxu0 0
    %379 = vmatpush1.bf16.msra.mxu0 0
    %380 = vmatprep.subr.bf16.mxu0 0
    %381 = vmatpush1.bf16.msra.mxu0 0
    %382 = vmatprep.subr.bf16.mxu0 0
    %383 = vmatpush1.bf16.msra.mxu0 0
    %384 = vmatprep.mubr.bf16.mxu0 0
    %385 = vmatmul.mubr.bf16.gmra.mrb[0].mxu0 %v274
    %v386 = vpop.f32.mrb[0].mxu0
    %v387 = vadd.f32 %v303, %v386
    %v388 = vpop.f32.mrb[0].mxu0
    %v389 = vpop.f32.mrb[0].mxu0
    %v390 = vadd.f32 %v303, %v389
    %v391 = vpop.f32.mrb[0].mxu0
    %392 = vmatprep.mubr.bf16.mxu0 0
    %393 = vmatmul.mubr.bf16.gmra.mrb[0].mxu0 %v275
    %v394 = vpop.f32.mrb[0].mxu0
    %v395 = vadd.f32 %v303, %v394
    %v396 = vpop.f32.mrb[0].mxu0
    %v397 = vpop.f32.mrb[0].mxu0
    %v398 = vadd.f32 %v303, %v397
    %v399 = vpop.f32.mrb[0].mxu0
    %400 = vmatprep.mubr.bf16.mxu0 0
    %401 = vmatmul.mubr.bf16.gmra.mrb[0].mxu0 %v276
    %v402 = vpop.f32.mrb[0].mxu0
    %v403 = vadd.f32 %v303, %v402
    %v404 = vpop.f32.mrb[0].mxu0
    %v405 = vpop.f32.mrb[0].mxu0
    %v406 = vadd.f32 %v303, %v405
    %v407 = vpop.f32.mrb[0].mxu0
    %408 = vmatprep.mubr.bf16.mxu0 0
    %409 = vmatmul.mubr.bf16.gmra.mrb[0].mxu0 %v277
    %v410 = vpop.f32.mrb[0].mxu0
    %v411 = vadd.f32 %v303, %v410
    %v412 = vpop.f32.mrb[0].mxu0
    %v413 = vpop.f32.mrb[0].mxu0
    %v414 = vadd.f32 %v303, %v413
    %v415 = vpop.f32.mrb[0].mxu0
    %416 = vmatprep.mubr.bf16.mxu0 0
    %417 = vmatmul.mubr.bf16.gmra.mrb[0].mxu0 %v278
    %v418 = vpop.f32.mrb[0].mxu0
    %v419 = vadd.f32 %v303, %v418
    %v420 = vpop.f32.mrb[0].mxu0
    %v421 = vpop.f32.mrb[0].mxu0
    %v422 = vadd.f32 %v303, %v421
    %v423 = vpop.f32.mrb[0].mxu0
    %424 = vmatprep.mubr.bf16.mxu0 0
    %425 = vmatmul.mubr.bf16.gmra.mrb[0].mxu0 %v279
    %v426 = vpop.f32.mrb[0].mxu0
    %v427 = vadd.f32 %v303, %v426
    %v428 = vpop.f32.mrb[0].mxu0
    %v429 = vpop.f32.mrb[0].mxu0
    %v430 = vadd.f32 %v303, %v429
    %v431 = vpop.f32.mrb[0].mxu0
    %432 = vmatprep.mubr.bf16.mxu0 0
    %433 = vmatmul.mubr.bf16.gmra.mrb[0].mxu0 %v280
    %v434 = vpop.f32.mrb[0].mxu0
    %v435 = vadd.f32 %v303, %v434
    %v436 = vpop.f32.mrb[0].mxu0
    %v437 = vpop.f32.mrb[0].mxu0
    %v438 = vadd.f32 %v303, %v437
    %v439 = vpop.f32.mrb[0].mxu0
    %440 = vmatprep.mubr.bf16.mxu0 0
    %441 = vmatmul.mubr.bf16.gmra.mrb[0].mxu0 %v281
    %v442 = vpop.f32.mrb[0].mxu0
    %v443 = vadd.f32 %v303, %v442
    %v444 = vpop.f32.mrb[0].mxu0
    %v445 = vpop.f32.mrb[0].mxu0
    %v446 = vadd.f32 %v303, %v445
    %v447 = vpop.f32.mrb[0].mxu0
    %448 = vdwg.mxu0
    %v449 = vmax.f32 %v387, 0.0
    %v450 = vmax.f32 %v390, 0.0
    %v451 = vmax.f32 %v395, 0.0
    %v452 = vmax.f32 %v398, 0.0
    %v453 = vmax.f32 %v403, 0.0
    %v454 = vmax.f32 %v406, 0.0
    %v455 = vmax.f32 %v411, 0.0
    %v456 = vmax.f32 %v414, 0.0
    %v457 = vmax.f32 %v419, 0.0
    %v458 = vmax.f32 %v422, 0.0
    %v459 = vmax.f32 %v427, 0.0
    %v460 = vmax.f32 %v430, 0.0
    %v461 = vmax.f32 %v435, 0.0
    %v462 = vmax.f32 %v438, 0.0
    %v463 = vmax.f32 %v443, 0.0
    %v464 = vmax.f32 %v446, 0.0
    %v465 = vpack.c.bf16 %v450, %v449
    %v466 = vpack.c.bf16 %v452, %v451
    %v467 = vpack.c.bf16 %v454, %v453
    %v468 = vpack.c.bf16 %v456, %v455
    %v469 = vpack.c.bf16 %v458, %v457
    %v470 = vpack.c.bf16 %v460, %v459
    %v471 = vpack.c.bf16 %v462, %v461
    %v472 = vpack.c.bf16 %v464, %v463
    %s473 = scalar_lea.vmem [#allocation5], 128
    %v474 = vld [vmem:[%s473] sm:$0xf]
    %v475 = vld [vmem:[%s473 + $0x4] sm:$0xf]
    %v476 = vld [vmem:[%s473 + $0x8] sm:$0xf]
    %v477 = vld [vmem:[%s473 + $0xc] sm:$0xf]
    %v478 = vld [vmem:[%s473 + $0x10] sm:$0xf]
    %v479 = vld [vmem:[%s473 + $0x14] sm:$0xf]
    %v480 = vld [vmem:[%s473 + $0x18] sm:$0xf]
    %v481 = vld [vmem:[%s473 + $0x1c] sm:$0xf]
    %v482 = vld [vmem:[%s473 + $0x20] sm:$0xf]
    %v483 = vld [vmem:[%s473 + $0x24] sm:$0xf]
    %v484 = vld [vmem:[%s473 + $0x28] sm:$0xf]
    %v485 = vld [vmem:[%s473 + $0x2c] sm:$0xf]
    %v486 = vld [vmem:[%s473 + $0x30] sm:$0xf]
    %v487 = vld [vmem:[%s473 + $0x34] sm:$0xf]
    %v488 = vld [vmem:[%s473 + $0x38] sm:$0xf]
    %v489 = vld [vmem:[%s473 + $0x3c] sm:$0xf]
    %v490 = vld [vmem:[%s2 + $0x2] sm:$0x1]
    %v491 = vlaneseq
    %v492 = vshrl.u32 %v491, 7
    %v493 = vsub.s32 0, %v492
    %v494 = vrot.slane %v490, %v493
    %v511 = vunpack.c.l.b16 %v474
    %v512 = vunpack.c.l.b16 %v475
    %v513 = vunpack.c.l.b16 %v476
    %v514 = vunpack.c.l.b16 %v477
    %v515 = vunpack.c.l.b16 %v478
    %v516 = vunpack.c.l.b16 %v479
    %v517 = vunpack.c.l.b16 %v480
    %v518 = vunpack.c.l.b16 %v481
    %v519 = vunpack.c.l.b16 %v482
    %v520 = vunpack.c.l.b16 %v483
    %v521 = vunpack.c.l.b16 %v484
    %v522 = vunpack.c.l.b16 %v485
    %v523 = vunpack.c.l.b16 %v486
    %v524 = vunpack.c.l.b16 %v487
    %v525 = vunpack.c.l.b16 %v488
    %v526 = vunpack.c.l.b16 %v489
    %v527 = vpack.c.b16 %v512, %v511
    %v528 = vpack.c.b16 %v514, %v513
    %v529 = vpack.c.b16 %v516, %v515
    %v530 = vpack.c.b16 %v518, %v517
    %v531 = vpack.c.b16 %v520, %v519
    %v532 = vpack.c.b16 %v522, %v521
    %v533 = vpack.c.b16 %v524, %v523
    %v534 = vpack.c.b16 %v526, %v525
    %543 = vmatprep.subr.bf16.mxu0 0
    %544 = vmatpush1.bf16.msra.mxu0 %v527
    %545 = vmatprep.subr.bf16.mxu0 0
    %546 = vmatpush1.bf16.msra.mxu0 %v528
    %547 = vmatprep.subr.bf16.mxu0 0
    %548 = vmatpush1.bf16.msra.mxu0 %v529
    %549 = vmatprep.subr.bf16.mxu0 0
    %550 = vmatpush1.bf16.msra.mxu0 %v530
    %551 = vmatprep.subr.bf16.mxu0 0
    %552 = vmatpush1.bf16.msra.mxu0 %v531
    %553 = vmatprep.subr.bf16.mxu0 0
    %554 = vmatpush1.bf16.msra.mxu0 %v532
    %555 = vmatprep.subr.bf16.mxu0 0
    %556 = vmatpush1.bf16.msra.mxu0 %v533
    %557 = vmatprep.subr.bf16.mxu0 0
    %558 = vmatpush1.bf16.msra.mxu0 %v534
    %559 = vmatprep.subr.bf16.mxu0 0
    %560 = vmatpush1.bf16.msra.mxu0 0
    %561 = vmatprep.subr.bf16.mxu0 0
    %562 = vmatpush1.bf16.msra.mxu0 0
    %563 = vmatprep.subr.bf16.mxu0 0
    %564 = vmatpush1.bf16.msra.mxu0 0
    %565 = vmatprep.subr.bf16.mxu0 0
    %566 = vmatpush1.bf16.msra.mxu0 0
    %567 = vmatprep.subr.bf16.mxu0 0
    %568 = vmatpush1.bf16.msra.mxu0 0
    %569 = vmatprep.subr.bf16.mxu0 0
    %570 = vmatpush1.bf16.msra.mxu0 0
    %571 = vmatprep.subr.bf16.mxu0 0
    %572 = vmatpush1.bf16.msra.mxu0 0
    %573 = vmatprep.subr.bf16.mxu0 0
    %574 = vmatpush1.bf16.msra.mxu0 0
    %575 = vmatprep.mubr.bf16.mxu0 0
    %576 = vmatmul.mubr.bf16.gmra.mrb[0].mxu0 %v465
    %v577 = vpop.f32.mrb[0].mxu0
    %v578 = vadd.f32 %v494, %v577
    %v579 = vpop.f32.mrb[0].mxu0
    %v580 = vpop.f32.mrb[0].mxu0
    %v581 = vadd.f32 %v494, %v580
    %v582 = vpop.f32.mrb[0].mxu0
    %583 = vmatprep.mubr.bf16.mxu0 0
    %584 = vmatmul.mubr.bf16.gmra.mrb[0].mxu0 %v466
    %v585 = vpop.f32.mrb[0].mxu0
    %v586 = vadd.f32 %v494, %v585
    %v587 = vpop.f32.mrb[0].mxu0
    %v588 = vpop.f32.mrb[0].mxu0
    %v589 = vadd.f32 %v494, %v588
    %v590 = vpop.f32.mrb[0].mxu0
    %591 = vmatprep.mubr.bf16.mxu0 0
    %592 = vmatmul.mubr.bf16.gmra.mrb[0].mxu0 %v467
    %v593 = vpop.f32.mrb[0].mxu0
    %v594 = vadd.f32 %v494, %v593
    %v595 = vpop.f32.mrb[0].mxu0
    %v596 = vpop.f32.mrb[0].mxu0
    %v597 = vadd.f32 %v494, %v596
    %v598 = vpop.f32.mrb[0].mxu0
    %599 = vmatprep.mubr.bf16.mxu0 0
    %600 = vmatmul.mubr.bf16.gmra.mrb[0].mxu0 %v468
    %v601 = vpop.f32.mrb[0].mxu0
    %v602 = vadd.f32 %v494, %v601
    %v603 = vpop.f32.mrb[0].mxu0
    %v604 = vpop.f32.mrb[0].mxu0
    %v605 = vadd.f32 %v494, %v604
    %v606 = vpop.f32.mrb[0].mxu0
    %607 = vmatprep.mubr.bf16.mxu0 0
    %608 = vmatmul.mubr.bf16.gmra.mrb[0].mxu0 %v469
    %v609 = vpop.f32.mrb[0].mxu0
    %v610 = vadd.f32 %v494, %v609
    %v611 = vpop.f32.mrb[0].mxu0
    %v612 = vpop.f32.mrb[0].mxu0
    %v613 = vadd.f32 %v494, %v612
    %v614 = vpop.f32.mrb[0].mxu0
    %615 = vmatprep.mubr.bf16.mxu0 0
    %616 = vmatmul.mubr.bf16.gmra.mrb[0].mxu0 %v470
    %v617 = vpop.f32.mrb[0].mxu0
    %v618 = vadd.f32 %v494, %v617
    %v619 = vpop.f32.mrb[0].mxu0
    %v620 = vpop.f32.mrb[0].mxu0
    %v621 = vadd.f32 %v494, %v620
    %v622 = vpop.f32.mrb[0].mxu0
    %623 = vmatprep.mubr.bf16.mxu0 0
    %624 = vmatmul.mubr.bf16.gmra.mrb[0].mxu0 %v471
    %v625 = vpop.f32.mrb[0].mxu0
    %v626 = vadd.f32 %v494, %v625
    %v627 = vpop.f32.mrb[0].mxu0
    %v628 = vpop.f32.mrb[0].mxu0
    %v629 = vadd.f32 %v494, %v628
    %v630 = vpop.f32.mrb[0].mxu0
    %631 = vmatprep.mubr.bf16.mxu0 0
    %632 = vmatmul.mubr.bf16.gmra.mrb[0].mxu0 %v472
    %v633 = vpop.f32.mrb[0].mxu0
    %v634 = vadd.f32 %v494, %v633
    %v635 = vpop.f32.mrb[0].mxu0
    %v636 = vpop.f32.mrb[0].mxu0
    %v637 = vadd.f32 %v494, %v636
    %v638 = vpop.f32.mrb[0].mxu0
    %639 = vdwg.mxu0
    %v640 = vmax.f32 %v578, 0.0
    %v641 = vmax.f32 %v581, 0.0
    %v642 = vmax.f32 %v586, 0.0
    %v643 = vmax.f32 %v589, 0.0
    %v644 = vmax.f32 %v594, 0.0
    %v645 = vmax.f32 %v597, 0.0
    %v646 = vmax.f32 %v602, 0.0
    %v647 = vmax.f32 %v605, 0.0
    %v648 = vmax.f32 %v610, 0.0
    %v649 = vmax.f32 %v613, 0.0
    %v650 = vmax.f32 %v618, 0.0
    %v651 = vmax.f32 %v621, 0.0
    %v652 = vmax.f32 %v626, 0.0
    %v653 = vmax.f32 %v629, 0.0
    %v654 = vmax.f32 %v634, 0.0
    %v655 = vmax.f32 %v637, 0.0
    %v656 = vpack.c.bf16 %v641, %v640
    %v657 = vpack.c.bf16 %v643, %v642
    %v658 = vpack.c.bf16 %v645, %v644
    %v659 = vpack.c.bf16 %v647, %v646
    %v660 = vpack.c.bf16 %v649, %v648
    %v661 = vpack.c.bf16 %v651, %v650
    %v662 = vpack.c.bf16 %v653, %v652
    %v663 = vpack.c.bf16 %v655, %v654
    %v664 = vld [vmem:[#allocation7] sm:$0xf]
    %v665 = vld [vmem:[#allocation7 + $0x4] sm:$0xf]
    %v666 = vld [vmem:[#allocation7 + $0x8] sm:$0xf]
    %v667 = vld [vmem:[#allocation7 + $0xc] sm:$0xf]
    %v668 = vld [vmem:[#allocation7 + $0x10] sm:$0xf]
    %v669 = vld [vmem:[#allocation7 + $0x14] sm:$0xf]
    %v670 = vld [vmem:[#allocation7 + $0x18] sm:$0xf]
    %v671 = vld [vmem:[#allocation7 + $0x1c] sm:$0xf]
    %v672 = vld [vmem:[#allocation7 + $0x20] sm:$0xf]
    %v673 = vld [vmem:[#allocation7 + $0x24] sm:$0xf]
    %v674 = vld [vmem:[#allocation7 + $0x28] sm:$0xf]
    %v675 = vld [vmem:[#allocation7 + $0x2c] sm:$0xf]
    %v676 = vld [vmem:[#allocation7 + $0x30] sm:$0xf]
    %v677 = vld [vmem:[#allocation7 + $0x34] sm:$0xf]
    %v678 = vld [vmem:[#allocation7 + $0x38] sm:$0xf]
    %v679 = vld [vmem:[#allocation7 + $0x3c] sm:$0xf]
    %v696 = vunpack.c.l.b16 %v664
    %v697 = vunpack.c.l.b16 %v665
    %v698 = vunpack.c.l.b16 %v666
    %v699 = vunpack.c.l.b16 %v667
    %v700 = vunpack.c.l.b16 %v668
    %v701 = vunpack.c.l.b16 %v669
    %v702 = vunpack.c.l.b16 %v670
    %v703 = vunpack.c.l.b16 %v671
    %v704 = vunpack.c.l.b16 %v672
    %v705 = vunpack.c.l.b16 %v673
    %v706 = vunpack.c.l.b16 %v674
    %v707 = vunpack.c.l.b16 %v675
    %v708 = vunpack.c.l.b16 %v676
    %v709 = vunpack.c.l.b16 %v677
    %v710 = vunpack.c.l.b16 %v678
    %v711 = vunpack.c.l.b16 %v679
    %v712 = vpack.c.b16 %v697, %v696
    %v713 = vpack.c.b16 %v699, %v698
    %v714 = vpack.c.b16 %v701, %v700
    %v715 = vpack.c.b16 %v703, %v702
    %v716 = vpack.c.b16 %v705, %v704
    %v717 = vpack.c.b16 %v707, %v706
    %v718 = vpack.c.b16 %v709, %v708
    %v719 = vpack.c.b16 %v711, %v710
    %728 = vmatprep.subr.bf16.mxu0 0
    %729 = vmatpush1.bf16.msra.mxu0 %v712
    %730 = vmatprep.subr.bf16.mxu0 0
    %731 = vmatpush1.bf16.msra.mxu0 %v713
    %732 = vmatprep.subr.bf16.mxu0 0
    %733 = vmatpush1.bf16.msra.mxu0 %v714
    %734 = vmatprep.subr.bf16.mxu0 0
    %735 = vmatpush1.bf16.msra.mxu0 %v715
    %736 = vmatprep.subr.bf16.mxu0 0
    %737 = vmatpush1.bf16.msra.mxu0 %v716
    %738 = vmatprep.subr.bf16.mxu0 0
    %739 = vmatpush1.bf16.msra.mxu0 %v717
    %740 = vmatprep.subr.bf16.mxu0 0
    %741 = vmatpush1.bf16.msra.mxu0 %v718
    %742 = vmatprep.subr.bf16.mxu0 0
    %743 = vmatpush1.bf16.msra.mxu0 %v719
    %744 = vmatprep.subr.bf16.mxu0 0
    %745 = vmatpush1.bf16.msra.mxu0 0
    %746 = vmatprep.subr.bf16.mxu0 0
    %747 = vmatpush1.bf16.msra.mxu0 0
    %748 = vmatprep.subr.bf16.mxu0 0
    %749 = vmatpush1.bf16.msra.mxu0 0
    %750 = vmatprep.subr.bf16.mxu0 0
    %751 = vmatpush1.bf16.msra.mxu0 0
    %752 = vmatprep.subr.bf16.mxu0 0
    %753 = vmatpush1.bf16.msra.mxu0 0
    %754 = vmatprep.subr.bf16.mxu0 0
    %755 = vmatpush1.bf16.msra.mxu0 0
    %756 = vmatprep.subr.bf16.mxu0 0
    %757 = vmatpush1.bf16.msra.mxu0 0
    %758 = vmatprep.subr.bf16.mxu0 0
    %759 = vmatpush1.bf16.msra.mxu0 0
    %760 = vmatprep.mubr.bf16.mxu0 0
    %761 = vmatmul.mubr.bf16.gmra.mrb[0].mxu0 %v656
    %v762 = vpop.f32.mrb[0].mxu0
    %v763 = vadd.f32 0.0, %v762
    %v764 = vpop.f32.mrb[0].mxu0
    %v765 = vpop.f32.mrb[0].mxu0
    %v766 = vadd.f32 0.0, %v765
    %v767 = vpop.f32.mrb[0].mxu0
    %768 = vmatprep.mubr.bf16.mxu0 0
    %769 = vmatmul.mubr.bf16.gmra.mrb[0].mxu0 %v657
    %v770 = vpop.f32.mrb[0].mxu0
    %v771 = vadd.f32 0.0, %v770
    %v772 = vpop.f32.mrb[0].mxu0
    %v773 = vpop.f32.mrb[0].mxu0
    %v774 = vadd.f32 0.0, %v773
    %v775 = vpop.f32.mrb[0].mxu0
    %776 = vmatprep.mubr.bf16.mxu0 0
    %777 = vmatmul.mubr.bf16.gmra.mrb[0].mxu0 %v658
    %v778 = vpop.f32.mrb[0].mxu0
    %v779 = vadd.f32 0.0, %v778
    %v780 = vpop.f32.mrb[0].mxu0
    %v781 = vpop.f32.mrb[0].mxu0
    %v782 = vadd.f32 0.0, %v781
    %v783 = vpop.f32.mrb[0].mxu0
    %784 = vmatprep.mubr.bf16.mxu0 0
    %785 = vmatmul.mubr.bf16.gmra.mrb[0].mxu0 %v659
    %v786 = vpop.f32.mrb[0].mxu0
    %v787 = vadd.f32 0.0, %v786
    %v788 = vpop.f32.mrb[0].mxu0
    %v789 = vpop.f32.mrb[0].mxu0
    %v790 = vadd.f32 0.0, %v789
    %v791 = vpop.f32.mrb[0].mxu0
    %792 = vmatprep.mubr.bf16.mxu0 0
    %793 = vmatmul.mubr.bf16.gmra.mrb[0].mxu0 %v660
    %v794 = vpop.f32.mrb[0].mxu0
    %v795 = vadd.f32 0.0, %v794
    %v796 = vpop.f32.mrb[0].mxu0
    %v797 = vpop.f32.mrb[0].mxu0
    %v798 = vadd.f32 0.0, %v797
    %v799 = vpop.f32.mrb[0].mxu0
    %800 = vmatprep.mubr.bf16.mxu0 0
    %801 = vmatmul.mubr.bf16.gmra.mrb[0].mxu0 %v661
    %v802 = vpop.f32.mrb[0].mxu0
    %v803 = vadd.f32 0.0, %v802
    %v804 = vpop.f32.mrb[0].mxu0
    %v805 = vpop.f32.mrb[0].mxu0
    %v806 = vadd.f32 0.0, %v805
    %v807 = vpop.f32.mrb[0].mxu0
    %808 = vmatprep.mubr.bf16.mxu0 0
    %809 = vmatmul.mubr.bf16.gmra.mrb[0].mxu0 %v662
    %v810 = vpop.f32.mrb[0].mxu0
    %v811 = vadd.f32 0.0, %v810
    %v812 = vpop.f32.mrb[0].mxu0
    %v813 = vpop.f32.mrb[0].mxu0
    %v814 = vadd.f32 0.0, %v813
    %v815 = vpop.f32.mrb[0].mxu0
    %816 = vmatprep.mubr.bf16.mxu0 0
    %817 = vmatmul.mubr.bf16.gmra.mrb[0].mxu0 %v663
    %v818 = vpop.f32.mrb[0].mxu0
    %v819 = vadd.f32 0.0, %v818
    %v820 = vpop.f32.mrb[0].mxu0
    %v821 = vpop.f32.mrb[0].mxu0
    %v822 = vadd.f32 0.0, %v821
    %v823 = vpop.f32.mrb[0].mxu0
    %824 = vdwg.mxu0
    %v825 = vmax.f32 %v763, 0.0
    %v826 = vmax.f32 %v766, 0.0
    %v827 = vmax.f32 %v771, 0.0
    %v828 = vmax.f32 %v774, 0.0
    %v829 = vmax.f32 %v779, 0.0
    %v830 = vmax.f32 %v782, 0.0
    %v831 = vmax.f32 %v787, 0.0
    %v832 = vmax.f32 %v790, 0.0
    %v833 = vmax.f32 %v795, 0.0
    %v834 = vmax.f32 %v798, 0.0
    %v835 = vmax.f32 %v803, 0.0
    %v836 = vmax.f32 %v806, 0.0
    %v837 = vmax.f32 %v811, 0.0
    %v838 = vmax.f32 %v814, 0.0
    %v839 = vmax.f32 %v819, 0.0
    %v840 = vmax.f32 %v822, 0.0
    %841 = vadd.xlane.f32.xlu0 %v825
    %v842 = vpop.xlane.xlu0 %841
    %843 = vadd.xlane.f32.xlu0 %v826
    %v844 = vpop.xlane.xlu0 %843
    %845 = vadd.xlane.f32.xlu0 %v827
    %v846 = vpop.xlane.xlu0 %845
    %847 = vadd.xlane.f32.xlu0 %v828
    %v848 = vpop.xlane.xlu0 %847
    %849 = vadd.xlane.f32.xlu0 %v829
    %v850 = vpop.xlane.xlu0 %849
    %851 = vadd.xlane.f32.xlu0 %v830
    %v852 = vpop.xlane.xlu0 %851
    %853 = vadd.xlane.f32.xlu0 %v831
    %v854 = vpop.xlane.xlu0 %853
    %855 = vadd.xlane.f32.xlu0 %v832
    %v856 = vpop.xlane.xlu0 %855
    %857 = vadd.xlane.f32.xlu0 %v833
    %v858 = vpop.xlane.xlu0 %857
    %859 = vadd.xlane.f32.xlu0 %v834
    %v860 = vpop.xlane.xlu0 %859
    %861 = vadd.xlane.f32.xlu0 %v835
    %v862 = vpop.xlane.xlu0 %861
    %863 = vadd.xlane.f32.xlu0 %v836
    %v864 = vpop.xlane.xlu0 %863
    %865 = vadd.xlane.f32.xlu0 %v837
    %v866 = vpop.xlane.xlu0 %865
    %867 = vadd.xlane.f32.xlu0 %v838
    %v868 = vpop.xlane.xlu0 %867
    %869 = vadd.xlane.f32.xlu0 %v839
    %v870 = vpop.xlane.xlu0 %869
    %871 = vadd.xlane.f32.xlu0 %v840
    %v872 = vpop.xlane.xlu0 %871
    %v873 = vrcp.pop 128.0
    %v874 = vmul.f32 %v842, %v873
    %v875 = vmul.f32 %v844, %v873
    %v876 = vmul.f32 %v846, %v873
    %v877 = vmul.f32 %v848, %v873
    %v878 = vmul.f32 %v850, %v873
    %v879 = vmul.f32 %v852, %v873
    %v880 = vmul.f32 %v854, %v873
    %v881 = vmul.f32 %v856, %v873
    %v882 = vmul.f32 %v858, %v873
    %v883 = vmul.f32 %v860, %v873
    %v884 = vmul.f32 %v862, %v873
    %v885 = vmul.f32 %v864, %v873
    %v886 = vmul.f32 %v866, %v873
    %v887 = vmul.f32 %v868, %v873
    %v888 = vmul.f32 %v870, %v873
    %v889 = vmul.f32 %v872, %v873
    %v890 = vsub.f32 %v825, %v874
    %v891 = vsub.f32 %v826, %v875
    %v892 = vsub.f32 %v827, %v876
    %v893 = vsub.f32 %v828, %v877
    %v894 = vsub.f32 %v829, %v878
    %v895 = vsub.f32 %v830, %v879
    %v896 = vsub.f32 %v831, %v880
    %v897 = vsub.f32 %v832, %v881
    %v898 = vsub.f32 %v833, %v882
    %v899 = vsub.f32 %v834, %v883
    %v900 = vsub.f32 %v835, %v884
    %v901 = vsub.f32 %v836, %v885
    %v902 = vsub.f32 %v837, %v886
    %v903 = vsub.f32 %v838, %v887
    %v904 = vsub.f32 %v839, %v888
    %v905 = vsub.f32 %v840, %v889
    %v906 = vmul.f32 %v890, %v890
    %v907 = vmul.f32 %v891, %v891
    %v908 = vmul.f32 %v892, %v892
    %v909 = vmul.f32 %v893, %v893
    %v910 = vmul.f32 %v894, %v894
    %v911 = vmul.f32 %v895, %v895
    %v912 = vmul.f32 %v896, %v896
    %v913 = vmul.f32 %v897, %v897
    %v914 = vmul.f32 %v898, %v898
    %v915 = vmul.f32 %v899, %v899
    %v916 = vmul.f32 %v900, %v900
    %v917 = vmul.f32 %v901, %v901
    %v918 = vmul.f32 %v902, %v902
    %v919 = vmul.f32 %v903, %v903
    %v920 = vmul.f32 %v904, %v904
    %v921 = vmul.f32 %v905, %v905
    %922 = vadd.xlane.f32.xlu0 %v906
    %v923 = vpop.xlane.xlu0 %922
    %924 = vadd.xlane.f32.xlu0 %v907
    %v925 = vpop.xlane.xlu0 %924
    %926 = vadd.xlane.f32.xlu0 %v908
    %v927 = vpop.xlane.xlu0 %926
    %928 = vadd.xlane.f32.xlu0 %v909
    %v929 = vpop.xlane.xlu0 %928
    %930 = vadd.xlane.f32.xlu0 %v910
    %v931 = vpop.xlane.xlu0 %930
    %932 = vadd.xlane.f32.xlu0 %v911
    %v933 = vpop.xlane.xlu0 %932
    %934 = vadd.xlane.f32.xlu0 %v912
    %v935 = vpop.xlane.xlu0 %934
    %936 = vadd.xlane.f32.xlu0 %v913
    %v937 = vpop.xlane.xlu0 %936
    %938 = vadd.xlane.f32.xlu0 %v914
    %v939 = vpop.xlane.xlu0 %938
    %940 = vadd.xlane.f32.xlu0 %v915
    %v941 = vpop.xlane.xlu0 %940
    %942 = vadd.xlane.f32.xlu0 %v916
    %v943 = vpop.xlane.xlu0 %942
    %944 = vadd.xlane.f32.xlu0 %v917
    %v945 = vpop.xlane.xlu0 %944
    %946 = vadd.xlane.f32.xlu0 %v918
    %v947 = vpop.xlane.xlu0 %946
    %948 = vadd.xlane.f32.xlu0 %v919
    %v949 = vpop.xlane.xlu0 %948
    %950 = vadd.xlane.f32.xlu0 %v920
    %v951 = vpop.xlane.xlu0 %950
    %952 = vadd.xlane.f32.xlu0 %v921
    %v953 = vpop.xlane.xlu0 %952
    %v954 = vmul.f32 %v923, %v873
    %v955 = vmul.f32 %v925, %v873
    %v956 = vmul.f32 %v927, %v873
    %v957 = vmul.f32 %v929, %v873
    %v958 = vmul.f32 %v931, %v873
    %v959 = vmul.f32 %v933, %v873
    %v960 = vmul.f32 %v935, %v873
    %v961 = vmul.f32 %v937, %v873
    %v962 = vmul.f32 %v939, %v873
    %v963 = vmul.f32 %v941, %v873
    %v964 = vmul.f32 %v943, %v873
    %v965 = vmul.f32 %v945, %v873
    %v966 = vmul.f32 %v947, %v873
    %v967 = vmul.f32 %v949, %v873
    %v968 = vmul.f32 %v951, %v873
    %v969 = vmul.f32 %v953, %v873
    %v970 = vadd.f32 %v954, 1e-05
    %v971 = vadd.f32 %v955, 1e-05
    %v972 = vadd.f32 %v956, 1e-05
    %v973 = vadd.f32 %v957, 1e-05
    %v974 = vadd.f32 %v958, 1e-05
    %v975 = vadd.f32 %v959, 1e-05
    %v976 = vadd.f32 %v960, 1e-05
    %v977 = vadd.f32 %v961, 1e-05
    %v978 = vadd.f32 %v962, 1e-05
    %v979 = vadd.f32 %v963, 1e-05
    %v980 = vadd.f32 %v964, 1e-05
    %v981 = vadd.f32 %v965, 1e-05
    %v982 = vadd.f32 %v966, 1e-05
    %v983 = vadd.f32 %v967, 1e-05
    %v984 = vadd.f32 %v968, 1e-05
    %v985 = vadd.f32 %v969, 1e-05
    %v986 = vrsqrt.pop %v970
    %v987 = vrsqrt.pop %v971
    %v988 = vrsqrt.pop %v972
    %v989 = vrsqrt.pop %v973
    %v990 = vrsqrt.pop %v974
    %v991 = vrsqrt.pop %v975
    %v992 = vrsqrt.pop %v976
    %v993 = vrsqrt.pop %v977
    %v994 = vrsqrt.pop %v978
    %v995 = vrsqrt.pop %v979
    %v996 = vrsqrt.pop %v980
    %v997 = vrsqrt.pop %v981
    %v998 = vrsqrt.pop %v982
    %v999 = vrsqrt.pop %v983
    %v1000 = vrsqrt.pop %v984
    %v1001 = vrsqrt.pop %v985
    %v1002 = vmul.f32 %v890, %v986
    %v1003 = vmul.f32 %v891, %v987
    %v1004 = vmul.f32 %v892, %v988
    %v1005 = vmul.f32 %v893, %v989
    %v1006 = vmul.f32 %v894, %v990
    %v1007 = vmul.f32 %v895, %v991
    %v1008 = vmul.f32 %v896, %v992
    %v1009 = vmul.f32 %v897, %v993
    %v1010 = vmul.f32 %v898, %v994
    %v1011 = vmul.f32 %v899, %v995
    %v1012 = vmul.f32 %v900, %v996
    %v1013 = vmul.f32 %v901, %v997
    %v1014 = vmul.f32 %v902, %v998
    %v1015 = vmul.f32 %v903, %v999
    %v1016 = vmul.f32 %v904, %v1000
    %v1017 = vmul.f32 %v905, %v1001
    %v1019 = vlaneseq
    %v1020 = vshrl.u32 %v1019, 7
    %v1021 = vsub.s32 0, %v1020
    %v1022 = vrot.slane %v66, %v1021
    %v1024 = vmul.f32 %v1002, %v1022
    %v1025 = vmul.f32 %v1003, %v1022
    %v1026 = vmul.f32 %v1004, %v1022
    %v1027 = vmul.f32 %v1005, %v1022
    %v1028 = vmul.f32 %v1006, %v1022
    %v1029 = vmul.f32 %v1007, %v1022
    %v1030 = vmul.f32 %v1008, %v1022
    %v1031 = vmul.f32 %v1009, %v1022
    %v1032 = vmul.f32 %v1010, %v1022
    %v1033 = vmul.f32 %v1011, %v1022
    %v1034 = vmul.f32 %v1012, %v1022
    %v1035 = vmul.f32 %v1013, %v1022
    %v1036 = vmul.f32 %v1014, %v1022
    %v1037 = vmul.f32 %v1015, %v1022
    %v1038 = vmul.f32 %v1016, %v1022
    %v1039 = vmul.f32 %v1017, %v1022
    %v1041 = vlaneseq
    %v1042 = vshrl.u32 %v1041, 7
    %v1043 = vsub.s32 0, %v1042
    %v1044 = vrot.slane %v67, %v1043
    %v1046 = vadd.f32 %v1024, %v1044
    %v1047 = vadd.f32 %v1025, %v1044
    %v1048 = vadd.f32 %v1026, %v1044
    %v1049 = vadd.f32 %v1027, %v1044
    %v1050 = vadd.f32 %v1028, %v1044
    %v1051 = vadd.f32 %v1029, %v1044
    %v1052 = vadd.f32 %v1030, %v1044
    %v1053 = vadd.f32 %v1031, %v1044
    %v1054 = vadd.f32 %v1032, %v1044
    %v1055 = vadd.f32 %v1033, %v1044
    %v1056 = vadd.f32 %v1034, %v1044
    %v1057 = vadd.f32 %v1035, %v1044
    %v1058 = vadd.f32 %v1036, %v1044
    %v1059 = vadd.f32 %v1037, %v1044
    %v1060 = vadd.f32 %v1038, %v1044
    %v1061 = vadd.f32 %v1039, %v1044
    %1062 = vst [vmem:[#allocation8] sm:$0xff] %v1046
    %1063 = vst [vmem:[#allocation8 + $0x8] sm:$0xff] %v1047
    %1064 = vst [vmem:[#allocation8 + $0x10] sm:$0xff] %v1048
    %1065 = vst [vmem:[#allocation8 + $0x18] sm:$0xff] %v1049
    %1066 = vst [vmem:[#allocation8 + $0x20] sm:$0xff] %v1050
    %1067 = vst [vmem:[#allocation8 + $0x28] sm:$0xff] %v1051
    %1068 = vst [vmem:[#allocation8 + $0x30] sm:$0xff] %v1052
    %1069 = vst [vmem:[#allocation8 + $0x38] sm:$0xff] %v1053
    %1070 = vst [vmem:[#allocation8 + $0x40] sm:$0xff] %v1054
    %1071 = vst [vmem:[#allocation8 + $0x48] sm:$0xff] %v1055
    %1072 = vst [vmem:[#allocation8 + $0x50] sm:$0xff] %v1056
    %1073 = vst [vmem:[#allocation8 + $0x58] sm:$0xff] %v1057
    %1074 = vst [vmem:[#allocation8 + $0x60] sm:$0xff] %v1058
    %1075 = vst [vmem:[#allocation8 + $0x68] sm:$0xff] %v1059
    %1076 = vst [vmem:[#allocation8 + $0x70] sm:$0xff] %v1060
    %1077 = vst [vmem:[#allocation8 + $0x78] sm:$0xff] %v1061
    %v1078 = vld [vmem:[#allocation2 + $0x80] sm:$0xff]
    %v1079 = vld [vmem:[#allocation2 + $0x88] sm:$0xff]
    %v1080 = vld [vmem:[#allocation2 + $0x90] sm:$0xff]
    %v1081 = vld [vmem:[#allocation2 + $0x98] sm:$0xff]
    %v1082 = vld [vmem:[#allocation2 + $0xa0] sm:$0xff]
    %v1083 = vld [vmem:[#allocation2 + $0xa8] sm:$0xff]
    %v1084 = vld [vmem:[#allocation2 + $0xb0] sm:$0xff]
    %v1085 = vld [vmem:[#allocation2 + $0xb8] sm:$0xff]
    %v1086 = vld [vmem:[#allocation2 + $0xc0] sm:$0xff]
    %v1087 = vld [vmem:[#allocation2 + $0xc8] sm:$0xff]
    %v1088 = vld [vmem:[#allocation2 + $0xd0] sm:$0xff]
    %v1089 = vld [vmem:[#allocation2 + $0xd8] sm:$0xff]
    %v1090 = vld [vmem:[#allocation2 + $0xe0] sm:$0xff]
    %v1091 = vld [vmem:[#allocation2 + $0xe8] sm:$0xff]
    %v1092 = vld [vmem:[#allocation2 + $0xf0] sm:$0xff]
    %v1093 = vld [vmem:[#allocation2 + $0xf8] sm:$0xff]
    %v1094 = vpack.c.bf16 %v1079, %v1078
    %v1095 = vpack.c.bf16 %v1081, %v1080
    %v1096 = vpack.c.bf16 %v1083, %v1082
    %v1097 = vpack.c.bf16 %v1085, %v1084
    %v1098 = vpack.c.bf16 %v1087, %v1086
    %v1099 = vpack.c.bf16 %v1089, %v1088
    %v1100 = vpack.c.bf16 %v1091, %v1090
    %v1101 = vpack.c.bf16 %v1093, %v1092
    %v1102 = vld [vmem:[#allocation5] sm:$0xf]
    %v1103 = vld [vmem:[#allocation5 + $0x4] sm:$0xf]
    %v1104 = vld [vmem:[#allocation5 + $0x8] sm:$0xf]
    %v1105 = vld [vmem:[#allocation5 + $0xc] sm:$0xf]
    %v1106 = vld [vmem:[#allocation5 + $0x10] sm:$0xf]
    %v1107 = vld [vmem:[#allocation5 + $0x14] sm:$0xf]
    %v1108 = vld [vmem:[#allocation5 + $0x18] sm:$0xf]
    %v1109 = vld [vmem:[#allocation5 + $0x1c] sm:$0xf]
    %v1110 = vld [vmem:[#allocation5 + $0x20] sm:$0xf]
    %v1111 = vld [vmem:[#allocation5 + $0x24] sm:$0xf]
    %v1112 = vld [vmem:[#allocation5 + $0x28] sm:$0xf]
    %v1113 = vld [vmem:[#allocation5 + $0x2c] sm:$0xf]
    %v1114 = vld [vmem:[#allocation5 + $0x30] sm:$0xf]
    %v1115 = vld [vmem:[#allocation5 + $0x34] sm:$0xf]
    %v1116 = vld [vmem:[#allocation5 + $0x38] sm:$0xf]
    %v1117 = vld [vmem:[#allocation5 + $0x3c] sm:$0xf]
    %v1118 = vld [vmem:[%s2] sm:$0x1]
    %v1119 = vlaneseq
    %v1120 = vshrl.u32 %v1119, 7
    %v1121 = vsub.s32 0, %v1120
    %v1122 = vrot.slane %v1118, %v1121
    %v1139 = vunpack.c.l.b16 %v1102
    %v1140 = vunpack.c.l.b16 %v1103
    %v1141 = vunpack.c.l.b16 %v1104
    %v1142 = vunpack.c.l.b16 %v1105
    %v1143 = vunpack.c.l.b16 %v1106
    %v1144 = vunpack.c.l.b16 %v1107
    %v1145 = vunpack.c.l.b16 %v1108
    %v1146 = vunpack.c.l.b16 %v1109
    %v1147 = vunpack.c.l.b16 %v1110
    %v1148 = vunpack.c.l.b16 %v1111
    %v1149 = vunpack.c.l.b16 %v1112
    %v1150 = vunpack.c.l.b16 %v1113
    %v1151 = vunpack.c.l.b16 %v1114
    %v1152 = vunpack.c.l.b16 %v1115
    %v1153 = vunpack.c.l.b16 %v1116
    %v1154 = vunpack.c.l.b16 %v1117
    %v1155 = vpack.c.b16 %v1140, %v1139
    %v1156 = vpack.c.b16 %v1142, %v1141
    %v1157 = vpack.c.b16 %v1144, %v1143
    %v1158 = vpack.c.b16 %v1146, %v1145
    %v1159 = vpack.c.b16 %v1148, %v1147
    %v1160 = vpack.c.b16 %v1150, %v1149
    %v1161 = vpack.c.b16 %v1152, %v1151
    %v1162 = vpack.c.b16 %v1154, %v1153
    %1171 = vmatprep.subr.bf16.mxu0 0
    %1172 = vmatpush1.bf16.msra.mxu0 %v1155
    %1173 = vmatprep.subr.bf16.mxu0 0
    %1174 = vmatpush1.bf16.msra.mxu0 %v1156
    %1175 = vmatprep.subr.bf16.mxu0 0
    %1176 = vmatpush1.bf16.msra.mxu0 %v1157
    %1177 = vmatprep.subr.bf16.mxu0 0
    %1178 = vmatpush1.bf16.msra.mxu0 %v1158
    %1179 = vmatprep.subr.bf16.mxu0 0
    %1180 = vmatpush1.bf16.msra.mxu0 %v1159
    %1181 = vmatprep.subr.bf16.mxu0 0
    %1182 = vmatpush1.bf16.msra.mxu0 %v1160
    %1183 = vmatprep.subr.bf16.mxu0 0
    %1184 = vmatpush1.bf16.msra.mxu0 %v1161
    %1185 = vmatprep.subr.bf16.mxu0 0
    %1186 = vmatpush1.bf16.msra.mxu0 %v1162
    %1187 = vmatprep.subr.bf16.mxu0 0
    %1188 = vmatpush1.bf16.msra.mxu0 0
    %1189 = vmatprep.subr.bf16.mxu0 0
    %1190 = vmatpush1.bf16.msra.mxu0 0
    %1191 = vmatprep.subr.bf16.mxu0 0
    %1192 = vmatpush1.bf16.msra.mxu0 0
    %1193 = vmatprep.subr.bf16.mxu0 0
    %1194 = vmatpush1.bf16.msra.mxu0 0
    %1195 = vmatprep.subr.bf16.mxu0 0
    %1196 = vmatpush1.bf16.msra.mxu0 0
    %1197 = vmatprep.subr.bf16.mxu0 0
    %1198 = vmatpush1.bf16.msra.mxu0 0
    %1199 = vmatprep.subr.bf16.mxu0 0
    %1200 = vmatpush1.bf16.msra.mxu0 0
    %1201 = vmatprep.subr.bf16.mxu0 0
    %1202 = vmatpush1.bf16.msra.mxu0 0
    %1203 = vmatprep.mubr.bf16.mxu0 0
    %1204 = vmatmul.mubr.bf16.gmra.mrb[0].mxu0 %v1094
    %v1205 = vpop.f32.mrb[0].mxu0
    %v1206 = vadd.f32 %v1122, %v1205
    %v1207 = vpop.f32.mrb[0].mxu0
    %v1208 = vpop.f32.mrb[0].mxu0
    %v1209 = vadd.f32 %v1122, %v1208
    %v1210 = vpop.f32.mrb[0].mxu0
    %1211 = vmatprep.mubr.bf16.mxu0 0
    %1212 = vmatmul.mubr.bf16.gmra.mrb[0].mxu0 %v1095
    %v1213 = vpop.f32.mrb[0].mxu0
    %v1214 = vadd.f32 %v1122, %v1213
    %v1215 = vpop.f32.mrb[0].mxu0
    %v1216 = vpop.f32.mrb[0].mxu0
    %v1217 = vadd.f32 %v1122, %v1216
    %v1218 = vpop.f32.mrb[0].mxu0
    %1219 = vmatprep.mubr.bf16.mxu0 0
    %1220 = vmatmul.mubr.bf16.gmra.mrb[0].mxu0 %v1096
    %v1221 = vpop.f32.mrb[0].mxu0
    %v1222 = vadd.f32 %v1122, %v1221
    %v1223 = vpop.f32.mrb[0].mxu0
    %v1224 = vpop.f32.mrb[0].mxu0
    %v1225 = vadd.f32 %v1122, %v1224
    %v1226 = vpop.f32.mrb[0].mxu0
    %1227 = vmatprep.mubr.bf16.mxu0 0
    %1228 = vmatmul.mubr.bf16.gmra.mrb[0].mxu0 %v1097
    %v1229 = vpop.f32.mrb[0].mxu0
    %v1230 = vadd.f32 %v1122, %v1229
    %v1231 = vpop.f32.mrb[0].mxu0
    %v1232 = vpop.f32.mrb[0].mxu0
    %v1233 = vadd.f32 %v1122, %v1232
    %v1234 = vpop.f32.mrb[0].mxu0
    %1235 = vmatprep.mubr.bf16.mxu0 0
    %1236 = vmatmul.mubr.bf16.gmra.mrb[0].mxu0 %v1098
    %v1237 = vpop.f32.mrb[0].mxu0
    %v1238 = vadd.f32 %v1122, %v1237
    %v1239 = vpop.f32.mrb[0].mxu0
    %v1240 = vpop.f32.mrb[0].mxu0
    %v1241 = vadd.f32 %v1122, %v1240
    %v1242 = vpop.f32.mrb[0].mxu0
    %1243 = vmatprep.mubr.bf16.mxu0 0
    %1244 = vmatmul.mubr.bf16.gmra.mrb[0].mxu0 %v1099
    %v1245 = vpop.f32.mrb[0].mxu0
    %v1246 = vadd.f32 %v1122, %v1245
    %v1247 = vpop.f32.mrb[0].mxu0
    %v1248 = vpop.f32.mrb[0].mxu0
    %v1249 = vadd.f32 %v1122, %v1248
    %v1250 = vpop.f32.mrb[0].mxu0
    %1251 = vmatprep.mubr.bf16.mxu0 0
    %1252 = vmatmul.mubr.bf16.gmra.mrb[0].mxu0 %v1100
    %v1253 = vpop.f32.mrb[0].mxu0
    %v1254 = vadd.f32 %v1122, %v1253
    %v1255 = vpop.f32.mrb[0].mxu0
    %v1256 = vpop.f32.mrb[0].mxu0
    %v1257 = vadd.f32 %v1122, %v1256
    %v1258 = vpop.f32.mrb[0].mxu0
    %1259 = vmatprep.mubr.bf16.mxu0 0
    %1260 = vmatmul.mubr.bf16.gmra.mrb[0].mxu0 %v1101
    %v1261 = vpop.f32.mrb[0].mxu0
    %v1262 = vadd.f32 %v1122, %v1261
    %v1263 = vpop.f32.mrb[0].mxu0
    %v1264 = vpop.f32.mrb[0].mxu0
    %v1265 = vadd.f32 %v1122, %v1264
    %v1266 = vpop.f32.mrb[0].mxu0
    %1267 = vdwg.mxu0
    %v1268 = vmax.f32 %v1206, 0.0
    %v1269 = vmax.f32 %v1209, 0.0
    %v1270 = vmax.f32 %v1214, 0.0
    %v1271 = vmax.f32 %v1217, 0.0
    %v1272 = vmax.f32 %v1222, 0.0
    %v1273 = vmax.f32 %v1225, 0.0
    %v1274 = vmax.f32 %v1230, 0.0
    %v1275 = vmax.f32 %v1233, 0.0
    %v1276 = vmax.f32 %v1238, 0.0
    %v1277 = vmax.f32 %v1241, 0.0
    %v1278 = vmax.f32 %v1246, 0.0
    %v1279 = vmax.f32 %v1249, 0.0
    %v1280 = vmax.f32 %v1254, 0.0
    %v1281 = vmax.f32 %v1257, 0.0
    %v1282 = vmax.f32 %v1262, 0.0
    %v1283 = vmax.f32 %v1265, 0.0
    %v1284 = vpack.c.bf16 %v1269, %v1268
    %v1285 = vpack.c.bf16 %v1271, %v1270
    %v1286 = vpack.c.bf16 %v1273, %v1272
    %v1287 = vpack.c.bf16 %v1275, %v1274
    %v1288 = vpack.c.bf16 %v1277, %v1276
    %v1289 = vpack.c.bf16 %v1279, %v1278
    %v1290 = vpack.c.bf16 %v1281, %v1280
    %v1291 = vpack.c.bf16 %v1283, %v1282
    %v1292 = vld [vmem:[%s282] sm:$0xf]
    %v1293 = vld [vmem:[%s282 + $0x4] sm:$0xf]
    %v1294 = vld [vmem:[%s282 + $0x8] sm:$0xf]
    %v1295 = vld [vmem:[%s282 + $0xc] sm:$0xf]
    %v1296 = vld [vmem:[%s282 + $0x10] sm:$0xf]
    %v1297 = vld [vmem:[%s282 + $0x14] sm:$0xf]
    %v1298 = vld [vmem:[%s282 + $0x18] sm:$0xf]
    %v1299 = vld [vmem:[%s282 + $0x1c] sm:$0xf]
    %v1300 = vld [vmem:[%s282 + $0x20] sm:$0xf]
    %v1301 = vld [vmem:[%s282 + $0x24] sm:$0xf]
    %v1302 = vld [vmem:[%s282 + $0x28] sm:$0xf]
    %v1303 = vld [vmem:[%s282 + $0x2c] sm:$0xf]
    %v1304 = vld [vmem:[%s282 + $0x30] sm:$0xf]
    %v1305 = vld [vmem:[%s282 + $0x34] sm:$0xf]
    %v1306 = vld [vmem:[%s282 + $0x38] sm:$0xf]
    %v1307 = vld [vmem:[%s282 + $0x3c] sm:$0xf]
    %v1308 = vld [vmem:[%s2 + $0x1] sm:$0x1]
    %v1309 = vlaneseq
    %v1310 = vshrl.u32 %v1309, 7
    %v1311 = vsub.s32 0, %v1310
    %v1312 = vrot.slane %v1308, %v1311
    %v1329 = vunpack.c.l.b16 %v1292
    %v1330 = vunpack.c.l.b16 %v1293
    %v1331 = vunpack.c.l.b16 %v1294
    %v1332 = vunpack.c.l.b16 %v1295
    %v1333 = vunpack.c.l.b16 %v1296
    %v1334 = vunpack.c.l.b16 %v1297
    %v1335 = vunpack.c.l.b16 %v1298
    %v1336 = vunpack.c.l.b16 %v1299
    %v1337 = vunpack.c.l.b16 %v1300
    %v1338 = vunpack.c.l.b16 %v1301
    %v1339 = vunpack.c.l.b16 %v1302
    %v1340 = vunpack.c.l.b16 %v1303
    %v1341 = vunpack.c.l.b16 %v1304
    %v1342 = vunpack.c.l.b16 %v1305
    %v1343 = vunpack.c.l.b16 %v1306
    %v1344 = vunpack.c.l.b16 %v1307
    %v1345 = vpack.c.b16 %v1330, %v1329
    %v1346 = vpack.c.b16 %v1332, %v1331
    %v1347 = vpack.c.b16 %v1334, %v1333
    %v1348 = vpack.c.b16 %v1336, %v1335
    %v1349 = vpack.c.b16 %v1338, %v1337
    %v1350 = vpack.c.b16 %v1340, %v1339
    %v1351 = vpack.c.b16 %v1342, %v1341
    %v1352 = vpack.c.b16 %v1344, %v1343
    %1361 = vmatprep.subr.bf16.mxu0 0
    %1362 = vmatpush1.bf16.msra.mxu0 %v1345
    %1363 = vmatprep.subr.bf16.mxu0 0
    %1364 = vmatpush1.bf16.msra.mxu0 %v1346
    %1365 = vmatprep.subr.bf16.mxu0 0
    %1366 = vmatpush1.bf16.msra.mxu0 %v1347
    %1367 = vmatprep.subr.bf16.mxu0 0
    %1368 = vmatpush1.bf16.msra.mxu0 %v1348
    %1369 = vmatprep.subr.bf16.mxu0 0
    %1370 = vmatpush1.bf16.msra.mxu0 %v1349
    %1371 = vmatprep.subr.bf16.mxu0 0
    %1372 = vmatpush1.bf16.msra.mxu0 %v1350
    %1373 = vmatprep.subr.bf16.mxu0 0
    %1374 = vmatpush1.bf16.msra.mxu0 %v1351
    %1375 = vmatprep.subr.bf16.mxu0 0
    %1376 = vmatpush1.bf16.msra.mxu0 %v1352
    %1377 = vmatprep.subr.bf16.mxu0 0
    %1378 = vmatpush1.bf16.msra.mxu0 0
    %1379 = vmatprep.subr.bf16.mxu0 0
    %1380 = vmatpush1.bf16.msra.mxu0 0
    %1381 = vmatprep.subr.bf16.mxu0 0
    %1382 = vmatpush1.bf16.msra.mxu0 0
    %1383 = vmatprep.subr.bf16.mxu0 0
    %1384 = vmatpush1.bf16.msra.mxu0 0
    %1385 = vmatprep.subr.bf16.mxu0 0
    %1386 = vmatpush1.bf16.msra.mxu0 0
    %1387 = vmatprep.subr.bf16.mxu0 0
    %1388 = vmatpush1.bf16.msra.mxu0 0
    %1389 = vmatprep.subr.bf16.mxu0 0
    %1390 = vmatpush1.bf16.msra.mxu0 0
    %1391 = vmatprep.subr.bf16.mxu0 0
    %1392 = vmatpush1.bf16.msra.mxu0 0
    %1393 = vmatprep.mubr.bf16.mxu0 0
    %1394 = vmatmul.mubr.bf16.gmra.mrb[0].mxu0 %v1284
    %v1395 = vpop.f32.mrb[0].mxu0
    %v1396 = vadd.f32 %v1312, %v1395
    %v1397 = vpop.f32.mrb[0].mxu0
    %v1398 = vpop.f32.mrb[0].mxu0
    %v1399 = vadd.f32 %v1312, %v1398
    %v1400 = vpop.f32.mrb[0].mxu0
    %1401 = vmatprep.mubr.bf16.mxu0 0
    %1402 = vmatmul.mubr.bf16.gmra.mrb[0].mxu0 %v1285
    %v1403 = vpop.f32.mrb[0].mxu0
    %v1404 = vadd.f32 %v1312, %v1403
    %v1405 = vpop.f32.mrb[0].mxu0
    %v1406 = vpop.f32.mrb[0].mxu0
    %v1407 = vadd.f32 %v1312, %v1406
    %v1408 = vpop.f32.mrb[0].mxu0
    %1409 = vmatprep.mubr.bf16.mxu0 0
    %1410 = vmatmul.mubr.bf16.gmra.mrb[0].mxu0 %v1286
    %v1411 = vpop.f32.mrb[0].mxu0
    %v1412 = vadd.f32 %v1312, %v1411
    %v1413 = vpop.f32.mrb[0].mxu0
    %v1414 = vpop.f32.mrb[0].mxu0
    %v1415 = vadd.f32 %v1312, %v1414
    %v1416 = vpop.f32.mrb[0].mxu0
    %1417 = vmatprep.mubr.bf16.mxu0 0
    %1418 = vmatmul.mubr.bf16.gmra.mrb[0].mxu0 %v1287
    %v1419 = vpop.f32.mrb[0].mxu0
    %v1420 = vadd.f32 %v1312, %v1419
    %v1421 = vpop.f32.mrb[0].mxu0
    %v1422 = vpop.f32.mrb[0].mxu0
    %v1423 = vadd.f32 %v1312, %v1422
    %v1424 = vpop.f32.mrb[0].mxu0
    %1425 = vmatprep.mubr.bf16.mxu0 0
    %1426 = vmatmul.mubr.bf16.gmra.mrb[0].mxu0 %v1288
    %v1427 = vpop.f32.mrb[0].mxu0
    %v1428 = vadd.f32 %v1312, %v1427
    %v1429 = vpop.f32.mrb[0].mxu0
    %v1430 = vpop.f32.mrb[0].mxu0
    %v1431 = vadd.f32 %v1312, %v1430
    %v1432 = vpop.f32.mrb[0].mxu0
    %1433 = vmatprep.mubr.bf16.mxu0 0
    %1434 = vmatmul.mubr.bf16.gmra.mrb[0].mxu0 %v1289
    %v1435 = vpop.f32.mrb[0].mxu0
    %v1436 = vadd.f32 %v1312, %v1435
    %v1437 = vpop.f32.mrb[0].mxu0
    %v1438 = vpop.f32.mrb[0].mxu0
    %v1439 = vadd.f32 %v1312, %v1438
    %v1440 = vpop.f32.mrb[0].mxu0
    %1441 = vmatprep.mubr.bf16.mxu0 0
    %1442 = vmatmul.mubr.bf16.gmra.mrb[0].mxu0 %v1290
    %v1443 = vpop.f32.mrb[0].mxu0
    %v1444 = vadd.f32 %v1312, %v1443
    %v1445 = vpop.f32.mrb[0].mxu0
    %v1446 = vpop.f32.mrb[0].mxu0
    %v1447 = vadd.f32 %v1312, %v1446
    %v1448 = vpop.f32.mrb[0].mxu0
    %1449 = vmatprep.mubr.bf16.mxu0 0
    %1450 = vmatmul.mubr.bf16.gmra.mrb[0].mxu0 %v1291
    %v1451 = vpop.f32.mrb[0].mxu0
    %v1452 = vadd.f32 %v1312, %v1451
    %v1453 = vpop.f32.mrb[0].mxu0
    %v1454 = vpop.f32.mrb[0].mxu0
    %v1455 = vadd.f32 %v1312, %v1454
    %v1456 = vpop.f32.mrb[0].mxu0
    %1457 = vdwg.mxu0
    %v1458 = vmax.f32 %v1396, 0.0
    %v1459 = vmax.f32 %v1399, 0.0
    %v1460 = vmax.f32 %v1404, 0.0
    %v1461 = vmax.f32 %v1407, 0.0
    %v1462 = vmax.f32 %v1412, 0.0
    %v1463 = vmax.f32 %v1415, 0.0
    %v1464 = vmax.f32 %v1420, 0.0
    %v1465 = vmax.f32 %v1423, 0.0
    %v1466 = vmax.f32 %v1428, 0.0
    %v1467 = vmax.f32 %v1431, 0.0
    %v1468 = vmax.f32 %v1436, 0.0
    %v1469 = vmax.f32 %v1439, 0.0
    %v1470 = vmax.f32 %v1444, 0.0
    %v1471 = vmax.f32 %v1447, 0.0
    %v1472 = vmax.f32 %v1452, 0.0
    %v1473 = vmax.f32 %v1455, 0.0
    %v1474 = vpack.c.bf16 %v1459, %v1458
    %v1475 = vpack.c.bf16 %v1461, %v1460
    %v1476 = vpack.c.bf16 %v1463, %v1462
    %v1477 = vpack.c.bf16 %v1465, %v1464
    %v1478 = vpack.c.bf16 %v1467, %v1466
    %v1479 = vpack.c.bf16 %v1469, %v1468
    %v1480 = vpack.c.bf16 %v1471, %v1470
    %v1481 = vpack.c.bf16 %v1473, %v1472
    %v1482 = vld [vmem:[%s473] sm:$0xf]
    %v1483 = vld [vmem:[%s473 + $0x4] sm:$0xf]
    %v1484 = vld [vmem:[%s473 + $0x8] sm:$0xf]
    %v1485 = vld [vmem:[%s473 + $0xc] sm:$0xf]
    %v1486 = vld [vmem:[%s473 + $0x10] sm:$0xf]
    %v1487 = vld [vmem:[%s473 + $0x14] sm:$0xf]
    %v1488 = vld [vmem:[%s473 + $0x18] sm:$0xf]
    %v1489 = vld [vmem:[%s473 + $0x1c] sm:$0xf]
    %v1490 = vld [vmem:[%s473 + $0x20] sm:$0xf]
    %v1491 = vld [vmem:[%s473 + $0x24] sm:$0xf]
    %v1492 = vld [vmem:[%s473 + $0x28] sm:$0xf]
    %v1493 = vld [vmem:[%s473 + $0x2c] sm:$0xf]
    %v1494 = vld [vmem:[%s473 + $0x30] sm:$0xf]
    %v1495 = vld [vmem:[%s473 + $0x34] sm:$0xf]
    %v1496 = vld [vmem:[%s473 + $0x38] sm:$0xf]
    %v1497 = vld [vmem:[%s473 + $0x3c] sm:$0xf]
    %v1498 = vld [vmem:[%s2 + $0x2] sm:$0x1]
    %v1499 = vlaneseq
    %v1500 = vshrl.u32 %v1499, 7
    %v1501 = vsub.s32 0, %v1500
    %v1502 = vrot.slane %v1498, %v1501
    %v1519 = vunpack.c.l.b16 %v1482
    %v1520 = vunpack.c.l.b16 %v1483
    %v1521 = vunpack.c.l.b16 %v1484
    %v1522 = vunpack.c.l.b16 %v1485
    %v1523 = vunpack.c.l.b16 %v1486
    %v1524 = vunpack.c.l.b16 %v1487
    %v1525 = vunpack.c.l.b16 %v1488
    %v1526 = vunpack.c.l.b16 %v1489
    %v1527 = vunpack.c.l.b16 %v1490
    %v1528 = vunpack.c.l.b16 %v1491
    %v1529 = vunpack.c.l.b16 %v1492
    %v1530 = vunpack.c.l.b16 %v1493
    %v1531 = vunpack.c.l.b16 %v1494
    %v1532 = vunpack.c.l.b16 %v1495
    %v1533 = vunpack.c.l.b16 %v1496
    %v1534 = vunpack.c.l.b16 %v1497
    %v1535 = vpack.c.b16 %v1520, %v1519
    %v1536 = vpack.c.b16 %v1522, %v1521
    %v1537 = vpack.c.b16 %v1524, %v1523
    %v1538 = vpack.c.b16 %v1526, %v1525
    %v1539 = vpack.c.b16 %v1528, %v1527
    %v1540 = vpack.c.b16 %v1530, %v1529
    %v1541 = vpack.c.b16 %v1532, %v1531
    %v1542 = vpack.c.b16 %v1534, %v1533
    %1551 = vmatprep.subr.bf16.mxu0 0
    %1552 = vmatpush1.bf16.msra.mxu0 %v1535
    %1553 = vmatprep.subr.bf16.mxu0 0
    %1554 = vmatpush1.bf16.msra.mxu0 %v1536
    %1555 = vmatprep.subr.bf16.mxu0 0
    %1556 = vmatpush1.bf16.msra.mxu0 %v1537
    %1557 = vmatprep.subr.bf16.mxu0 0
    %1558 = vmatpush1.bf16.msra.mxu0 %v1538
    %1559 = vmatprep.subr.bf16.mxu0 0
    %1560 = vmatpush1.bf16.msra.mxu0 %v1539
    %1561 = vmatprep.subr.bf16.mxu0 0
    %1562 = vmatpush1.bf16.msra.mxu0 %v1540
    %1563 = vmatprep.subr.bf16.mxu0 0
    %1564 = vmatpush1.bf16.msra.mxu0 %v1541
    %1565 = vmatprep.subr.bf16.mxu0 0
    %1566 = vmatpush1.bf16.msra.mxu0 %v1542
    %1567 = vmatprep.subr.bf16.mxu0 0
    %1568 = vmatpush1.bf16.msra.mxu0 0
    %1569 = vmatprep.subr.bf16.mxu0 0
    %1570 = vmatpush1.bf16.msra.mxu0 0
    %1571 = vmatprep.subr.bf16.mxu0 0
    %1572 = vmatpush1.bf16.msra.mxu0 0
    %1573 = vmatprep.subr.bf16.mxu0 0
    %1574 = vmatpush1.bf16.msra.mxu0 0
    %1575 = vmatprep.subr.bf16.mxu0 0
    %1576 = vmatpush1.bf16.msra.mxu0 0
    %1577 = vmatprep.subr.bf16.mxu0 0
    %1578 = vmatpush1.bf16.msra.mxu0 0
    %1579 = vmatprep.subr.bf16.mxu0 0
    %1580 = vmatpush1.bf16.msra.mxu0 0
    %1581 = vmatprep.subr.bf16.mxu0 0
    %1582 = vmatpush1.bf16.msra.mxu0 0
    %1583 = vmatprep.mubr.bf16.mxu0 0
    %1584 = vmatmul.mubr.bf16.gmra.mrb[0].mxu0 %v1474
    %v1585 = vpop.f32.mrb[0].mxu0
    %v1586 = vadd.f32 %v1502, %v1585
    %v1587 = vpop.f32.mrb[0].mxu0
    %v1588 = vpop.f32.mrb[0].mxu0
    %v1589 = vadd.f32 %v1502, %v1588
    %v1590 = vpop.f32.mrb[0].mxu0
    %1591 = vmatprep.mubr.bf16.mxu0 0
    %1592 = vmatmul.mubr.bf16.gmra.mrb[0].mxu0 %v1475
    %v1593 = vpop.f32.mrb[0].mxu0
    %v1594 = vadd.f32 %v1502, %v1593
    %v1595 = vpop.f32.mrb[0].mxu0
    %v1596 = vpop.f32.mrb[0].mxu0
    %v1597 = vadd.f32 %v1502, %v1596
    %v1598 = vpop.f32.mrb[0].mxu0
    %1599 = vmatprep.mubr.bf16.mxu0 0
    %1600 = vmatmul.mubr.bf16.gmra.mrb[0].mxu0 %v1476
    %v1601 = vpop.f32.mrb[0].mxu0
    %v1602 = vadd.f32 %v1502, %v1601
    %v1603 = vpop.f32.mrb[0].mxu0
    %v1604 = vpop.f32.mrb[0].mxu0
    %v1605 = vadd.f32 %v1502, %v1604
    %v1606 = vpop.f32.mrb[0].mxu0
    %1607 = vmatprep.mubr.bf16.mxu0 0
    %1608 = vmatmul.mubr.bf16.gmra.mrb[0].mxu0 %v1477
    %v1609 = vpop.f32.mrb[0].mxu0
    %v1610 = vadd.f32 %v1502, %v1609
    %v1611 = vpop.f32.mrb[0].mxu0
    %v1612 = vpop.f32.mrb[0].mxu0
    %v1613 = vadd.f32 %v1502, %v1612
    %v1614 = vpop.f32.mrb[0].mxu0
    %1615 = vmatprep.mubr.bf16.mxu0 0
    %1616 = vmatmul.mubr.bf16.gmra.mrb[0].mxu0 %v1478
    %v1617 = vpop.f32.mrb[0].mxu0
    %v1618 = vadd.f32 %v1502, %v1617
    %v1619 = vpop.f32.mrb[0].mxu0
    %v1620 = vpop.f32.mrb[0].mxu0
    %v1621 = vadd.f32 %v1502, %v1620
    %v1622 = vpop.f32.mrb[0].mxu0
    %1623 = vmatprep.mubr.bf16.mxu0 0
    %1624 = vmatmul.mubr.bf16.gmra.mrb[0].mxu0 %v1479
    %v1625 = vpop.f32.mrb[0].mxu0
    %v1626 = vadd.f32 %v1502, %v1625
    %v1627 = vpop.f32.mrb[0].mxu0
    %v1628 = vpop.f32.mrb[0].mxu0
    %v1629 = vadd.f32 %v1502, %v1628
    %v1630 = vpop.f32.mrb[0].mxu0
    %1631 = vmatprep.mubr.bf16.mxu0 0
    %1632 = vmatmul.mubr.bf16.gmra.mrb[0].mxu0 %v1480
    %v1633 = vpop.f32.mrb[0].mxu0
    %v1634 = vadd.f32 %v1502, %v1633
    %v1635 = vpop.f32.mrb[0].mxu0
    %v1636 = vpop.f32.mrb[0].mxu0
    %v1637 = vadd.f32 %v1502, %v1636
    %v1638 = vpop.f32.mrb[0].mxu0
    %1639 = vmatprep.mubr.bf16.mxu0 0
    %1640 = vmatmul.mubr.bf16.gmra.mrb[0].mxu0 %v1481
    %v1641 = vpop.f32.mrb[0].mxu0
    %v1642 = vadd.f32 %v1502, %v1641
    %v1643 = vpop.f32.mrb[0].mxu0
    %v1644 = vpop.f32.mrb[0].mxu0
    %v1645 = vadd.f32 %v1502, %v1644
    %v1646 = vpop.f32.mrb[0].mxu0
    %1647 = vdwg.mxu0
    %v1648 = vmax.f32 %v1586, 0.0
    %v1649 = vmax.f32 %v1589, 0.0
    %v1650 = vmax.f32 %v1594, 0.0
    %v1651 = vmax.f32 %v1597, 0.0
    %v1652 = vmax.f32 %v1602, 0.0
    %v1653 = vmax.f32 %v1605, 0.0
    %v1654 = vmax.f32 %v1610, 0.0
    %v1655 = vmax.f32 %v1613, 0.0
    %v1656 = vmax.f32 %v1618, 0.0
    %v1657 = vmax.f32 %v1621, 0.0
    %v1658 = vmax.f32 %v1626, 0.0
    %v1659 = vmax.f32 %v1629, 0.0
    %v1660 = vmax.f32 %v1634, 0.0
    %v1661 = vmax.f32 %v1637, 0.0
    %v1662 = vmax.f32 %v1642, 0.0
    %v1663 = vmax.f32 %v1645, 0.0
    %v1664 = vpack.c.bf16 %v1649, %v1648
    %v1665 = vpack.c.bf16 %v1651, %v1650
    %v1666 = vpack.c.bf16 %v1653, %v1652
    %v1667 = vpack.c.bf16 %v1655, %v1654
    %v1668 = vpack.c.bf16 %v1657, %v1656
    %v1669 = vpack.c.bf16 %v1659, %v1658
    %v1670 = vpack.c.bf16 %v1661, %v1660
    %v1671 = vpack.c.bf16 %v1663, %v1662
    %v1672 = vld [vmem:[#allocation7] sm:$0xf]
    %v1673 = vld [vmem:[#allocation7 + $0x4] sm:$0xf]
    %v1674 = vld [vmem:[#allocation7 + $0x8] sm:$0xf]
    %v1675 = vld [vmem:[#allocation7 + $0xc] sm:$0xf]
    %v1676 = vld [vmem:[#allocation7 + $0x10] sm:$0xf]
    %v1677 = vld [vmem:[#allocation7 + $0x14] sm:$0xf]
    %v1678 = vld [vmem:[#allocation7 + $0x18] sm:$0xf]
    %v1679 = vld [vmem:[#allocation7 + $0x1c] sm:$0xf]
    %v1680 = vld [vmem:[#allocation7 + $0x20] sm:$0xf]
    %v1681 = vld [vmem:[#allocation7 + $0x24] sm:$0xf]
    %v1682 = vld [vmem:[#allocation7 + $0x28] sm:$0xf]
    %v1683 = vld [vmem:[#allocation7 + $0x2c] sm:$0xf]
    %v1684 = vld [vmem:[#allocation7 + $0x30] sm:$0xf]
    %v1685 = vld [vmem:[#allocation7 + $0x34] sm:$0xf]
    %v1686 = vld [vmem:[#allocation7 + $0x38] sm:$0xf]
    %v1687 = vld [vmem:[#allocation7 + $0x3c] sm:$0xf]
    %v1704 = vunpack.c.l.b16 %v1672
    %v1705 = vunpack.c.l.b16 %v1673
    %v1706 = vunpack.c.l.b16 %v1674
    %v1707 = vunpack.c.l.b16 %v1675
    %v1708 = vunpack.c.l.b16 %v1676
    %v1709 = vunpack.c.l.b16 %v1677
    %v1710 = vunpack.c.l.b16 %v1678
    %v1711 = vunpack.c.l.b16 %v1679
    %v1712 = vunpack.c.l.b16 %v1680
    %v1713 = vunpack.c.l.b16 %v1681
    %v1714 = vunpack.c.l.b16 %v1682
    %v1715 = vunpack.c.l.b16 %v1683
    %v1716 = vunpack.c.l.b16 %v1684
    %v1717 = vunpack.c.l.b16 %v1685
    %v1718 = vunpack.c.l.b16 %v1686
    %v1719 = vunpack.c.l.b16 %v1687
    %v1720 = vpack.c.b16 %v1705, %v1704
    %v1721 = vpack.c.b16 %v1707, %v1706
    %v1722 = vpack.c.b16 %v1709, %v1708
    %v1723 = vpack.c.b16 %v1711, %v1710
    %v1724 = vpack.c.b16 %v1713, %v1712
    %v1725 = vpack.c.b16 %v1715, %v1714
    %v1726 = vpack.c.b16 %v1717, %v1716
    %v1727 = vpack.c.b16 %v1719, %v1718
    %1736 = vmatprep.subr.bf16.mxu0 0
    %1737 = vmatpush1.bf16.msra.mxu0 %v1720
    %1738 = vmatprep.subr.bf16.mxu0 0
    %1739 = vmatpush1.bf16.msra.mxu0 %v1721
    %1740 = vmatprep.subr.bf16.mxu0 0
    %1741 = vmatpush1.bf16.msra.mxu0 %v1722
    %1742 = vmatprep.subr.bf16.mxu0 0
    %1743 = vmatpush1.bf16.msra.mxu0 %v1723
    %1744 = vmatprep.subr.bf16.mxu0 0
    %1745 = vmatpush1.bf16.msra.mxu0 %v1724
    %1746 = vmatprep.subr.bf16.mxu0 0
    %1747 = vmatpush1.bf16.msra.mxu0 %v1725
    %1748 = vmatprep.subr.bf16.mxu0 0
    %1749 = vmatpush1.bf16.msra.mxu0 %v1726
    %1750 = vmatprep.subr.bf16.mxu0 0
    %1751 = vmatpush1.bf16.msra.mxu0 %v1727
    %1752 = vmatprep.subr.bf16.mxu0 0
    %1753 = vmatpush1.bf16.msra.mxu0 0
    %1754 = vmatprep.subr.bf16.mxu0 0
    %1755 = vmatpush1.bf16.msra.mxu0 0
    %1756 = vmatprep.subr.bf16.mxu0 0
    %1757 = vmatpush1.bf16.msra.mxu0 0
    %1758 = vmatprep.subr.bf16.mxu0 0
    %1759 = vmatpush1.bf16.msra.mxu0 0
    %1760 = vmatprep.subr.bf16.mxu0 0
    %1761 = vmatpush1.bf16.msra.mxu0 0
    %1762 = vmatprep.subr.bf16.mxu0 0
    %1763 = vmatpush1.bf16.msra.mxu0 0
    %1764 = vmatprep.subr.bf16.mxu0 0
    %1765 = vmatpush1.bf16.msra.mxu0 0
    %1766 = vmatprep.subr.bf16.mxu0 0
    %1767 = vmatpush1.bf16.msra.mxu0 0
    %1768 = vmatprep.mubr.bf16.mxu0 0
    %1769 = vmatmul.mubr.bf16.gmra.mrb[0].mxu0 %v1664
    %v1770 = vpop.f32.mrb[0].mxu0
    %v1771 = vadd.f32 0.0, %v1770
    %v1772 = vpop.f32.mrb[0].mxu0
    %v1773 = vpop.f32.mrb[0].mxu0
    %v1774 = vadd.f32 0.0, %v1773
    %v1775 = vpop.f32.mrb[0].mxu0
    %1776 = vmatprep.mubr.bf16.mxu0 0
    %1777 = vmatmul.mubr.bf16.gmra.mrb[0].mxu0 %v1665
    %v1778 = vpop.f32.mrb[0].mxu0
    %v1779 = vadd.f32 0.0, %v1778
    %v1780 = vpop.f32.mrb[0].mxu0
    %v1781 = vpop.f32.mrb[0].mxu0
    %v1782 = vadd.f32 0.0, %v1781
    %v1783 = vpop.f32.mrb[0].mxu0
    %1784 = vmatprep.mubr.bf16.mxu0 0
    %1785 = vmatmul.mubr.bf16.gmra.mrb[0].mxu0 %v1666
    %v1786 = vpop.f32.mrb[0].mxu0
    %v1787 = vadd.f32 0.0, %v1786
    %v1788 = vpop.f32.mrb[0].mxu0
    %v1789 = vpop.f32.mrb[0].mxu0
    %v1790 = vadd.f32 0.0, %v1789
    %v1791 = vpop.f32.mrb[0].mxu0
    %1792 = vmatprep.mubr.bf16.mxu0 0
    %1793 = vmatmul.mubr.bf16.gmra.mrb[0].mxu0 %v1667
    %v1794 = vpop.f32.mrb[0].mxu0
    %v1795 = vadd.f32 0.0, %v1794
    %v1796 = vpop.f32.mrb[0].mxu0
    %v1797 = vpop.f32.mrb[0].mxu0
    %v1798 = vadd.f32 0.0, %v1797
    %v1799 = vpop.f32.mrb[0].mxu0
    %1800 = vmatprep.mubr.bf16.mxu0 0
    %1801 = vmatmul.mubr.bf16.gmra.mrb[0].mxu0 %v1668
    %v1802 = vpop.f32.mrb[0].mxu0
    %v1803 = vadd.f32 0.0, %v1802
    %v1804 = vpop.f32.mrb[0].mxu0
    %v1805 = vpop.f32.mrb[0].mxu0
    %v1806 = vadd.f32 0.0, %v1805
    %v1807 = vpop.f32.mrb[0].mxu0
    %1808 = vmatprep.mubr.bf16.mxu0 0
    %1809 = vmatmul.mubr.bf16.gmra.mrb[0].mxu0 %v1669
    %v1810 = vpop.f32.mrb[0].mxu0
    %v1811 = vadd.f32 0.0, %v1810
    %v1812 = vpop.f32.mrb[0].mxu0
    %v1813 = vpop.f32.mrb[0].mxu0
    %v1814 = vadd.f32 0.0, %v1813
    %v1815 = vpop.f32.mrb[0].mxu0
    %1816 = vmatprep.mubr.bf16.mxu0 0
    %1817 = vmatmul.mubr.bf16.gmra.mrb[0].mxu0 %v1670
    %v1818 = vpop.f32.mrb[0].mxu0
    %v1819 = vadd.f32 0.0, %v1818
    %v1820 = vpop.f32.mrb[0].mxu0
    %v1821 = vpop.f32.mrb[0].mxu0
    %v1822 = vadd.f32 0.0, %v1821
    %v1823 = vpop.f32.mrb[0].mxu0
    %1824 = vmatprep.mubr.bf16.mxu0 0
    %1825 = vmatmul.mubr.bf16.gmra.mrb[0].mxu0 %v1671
    %v1826 = vpop.f32.mrb[0].mxu0
    %v1827 = vadd.f32 0.0, %v1826
    %v1828 = vpop.f32.mrb[0].mxu0
    %v1829 = vpop.f32.mrb[0].mxu0
    %v1830 = vadd.f32 0.0, %v1829
    %v1831 = vpop.f32.mrb[0].mxu0
    %1832 = vdwg.mxu0
    %v1833 = vmax.f32 %v1771, 0.0
    %v1834 = vmax.f32 %v1774, 0.0
    %v1835 = vmax.f32 %v1779, 0.0
    %v1836 = vmax.f32 %v1782, 0.0
    %v1837 = vmax.f32 %v1787, 0.0
    %v1838 = vmax.f32 %v1790, 0.0
    %v1839 = vmax.f32 %v1795, 0.0
    %v1840 = vmax.f32 %v1798, 0.0
    %v1841 = vmax.f32 %v1803, 0.0
    %v1842 = vmax.f32 %v1806, 0.0
    %v1843 = vmax.f32 %v1811, 0.0
    %v1844 = vmax.f32 %v1814, 0.0
    %v1845 = vmax.f32 %v1819, 0.0
    %v1846 = vmax.f32 %v1822, 0.0
    %v1847 = vmax.f32 %v1827, 0.0
    %v1848 = vmax.f32 %v1830, 0.0
    %1849 = vadd.xlane.f32.xlu0 %v1833
    %v1850 = vpop.xlane.xlu0 %1849
    %1851 = vadd.xlane.f32.xlu0 %v1834
    %v1852 = vpop.xlane.xlu0 %1851
    %1853 = vadd.xlane.f32.xlu0 %v1835
    %v1854 = vpop.xlane.xlu0 %1853
    %1855 = vadd.xlane.f32.xlu0 %v1836
    %v1856 = vpop.xlane.xlu0 %1855
    %1857 = vadd.xlane.f32.xlu0 %v1837
    %v1858 = vpop.xlane.xlu0 %1857
    %1859 = vadd.xlane.f32.xlu0 %v1838
    %v1860 = vpop.xlane.xlu0 %1859
    %1861 = vadd.xlane.f32.xlu0 %v1839
    %v1862 = vpop.xlane.xlu0 %1861
    %1863 = vadd.xlane.f32.xlu0 %v1840
    %v1864 = vpop.xlane.xlu0 %1863
    %1865 = vadd.xlane.f32.xlu0 %v1841
    %v1866 = vpop.xlane.xlu0 %1865
    %1867 = vadd.xlane.f32.xlu0 %v1842
    %v1868 = vpop.xlane.xlu0 %1867
    %1869 = vadd.xlane.f32.xlu0 %v1843
    %v1870 = vpop.xlane.xlu0 %1869
    %1871 = vadd.xlane.f32.xlu0 %v1844
    %v1872 = vpop.xlane.xlu0 %1871
    %1873 = vadd.xlane.f32.xlu0 %v1845
    %v1874 = vpop.xlane.xlu0 %1873
    %1875 = vadd.xlane.f32.xlu0 %v1846
    %v1876 = vpop.xlane.xlu0 %1875
    %1877 = vadd.xlane.f32.xlu0 %v1847
    %v1878 = vpop.xlane.xlu0 %1877
    %1879 = vadd.xlane.f32.xlu0 %v1848
    %v1880 = vpop.xlane.xlu0 %1879
    %v1881 = vmul.f32 %v1850, %v873
    %v1882 = vmul.f32 %v1852, %v873
    %v1883 = vmul.f32 %v1854, %v873
    %v1884 = vmul.f32 %v1856, %v873
    %v1885 = vmul.f32 %v1858, %v873
    %v1886 = vmul.f32 %v1860, %v873
    %v1887 = vmul.f32 %v1862, %v873
    %v1888 = vmul.f32 %v1864, %v873
    %v1889 = vmul.f32 %v1866, %v873
    %v1890 = vmul.f32 %v1868, %v873
    %v1891 = vmul.f32 %v1870, %v873
    %v1892 = vmul.f32 %v1872, %v873
    %v1893 = vmul.f32 %v1874, %v873
    %v1894 = vmul.f32 %v1876, %v873
    %v1895 = vmul.f32 %v1878, %v873
    %v1896 = vmul.f32 %v1880, %v873
    %v1897 = vsub.f32 %v1833, %v1881
    %v1898 = vsub.f32 %v1834, %v1882
    %v1899 = vsub.f32 %v1835, %v1883
    %v1900 = vsub.f32 %v1836, %v1884
    %v1901 = vsub.f32 %v1837, %v1885
    %v1902 = vsub.f32 %v1838, %v1886
    %v1903 = vsub.f32 %v1839, %v1887
    %v1904 = vsub.f32 %v1840, %v1888
    %v1905 = vsub.f32 %v1841, %v1889
    %v1906 = vsub.f32 %v1842, %v1890
    %v1907 = vsub.f32 %v1843, %v1891
    %v1908 = vsub.f32 %v1844, %v1892
    %v1909 = vsub.f32 %v1845, %v1893
    %v1910 = vsub.f32 %v1846, %v1894
    %v1911 = vsub.f32 %v1847, %v1895
    %v1912 = vsub.f32 %v1848, %v1896
    %v1913 = vmul.f32 %v1897, %v1897
    %v1914 = vmul.f32 %v1898, %v1898
    %v1915 = vmul.f32 %v1899, %v1899
    %v1916 = vmul.f32 %v1900, %v1900
    %v1917 = vmul.f32 %v1901, %v1901
    %v1918 = vmul.f32 %v1902, %v1902
    %v1919 = vmul.f32 %v1903, %v1903
    %v1920 = vmul.f32 %v1904, %v1904
    %v1921 = vmul.f32 %v1905, %v1905
    %v1922 = vmul.f32 %v1906, %v1906
    %v1923 = vmul.f32 %v1907, %v1907
    %v1924 = vmul.f32 %v1908, %v1908
    %v1925 = vmul.f32 %v1909, %v1909
    %v1926 = vmul.f32 %v1910, %v1910
    %v1927 = vmul.f32 %v1911, %v1911
    %v1928 = vmul.f32 %v1912, %v1912
    %1929 = vadd.xlane.f32.xlu0 %v1913
    %v1930 = vpop.xlane.xlu0 %1929
    %1931 = vadd.xlane.f32.xlu0 %v1914
    %v1932 = vpop.xlane.xlu0 %1931
    %1933 = vadd.xlane.f32.xlu0 %v1915
    %v1934 = vpop.xlane.xlu0 %1933
    %1935 = vadd.xlane.f32.xlu0 %v1916
    %v1936 = vpop.xlane.xlu0 %1935
    %1937 = vadd.xlane.f32.xlu0 %v1917
    %v1938 = vpop.xlane.xlu0 %1937
    %1939 = vadd.xlane.f32.xlu0 %v1918
    %v1940 = vpop.xlane.xlu0 %1939
    %1941 = vadd.xlane.f32.xlu0 %v1919
    %v1942 = vpop.xlane.xlu0 %1941
    %1943 = vadd.xlane.f32.xlu0 %v1920
    %v1944 = vpop.xlane.xlu0 %1943
    %1945 = vadd.xlane.f32.xlu0 %v1921
    %v1946 = vpop.xlane.xlu0 %1945
    %1947 = vadd.xlane.f32.xlu0 %v1922
    %v1948 = vpop.xlane.xlu0 %1947
    %1949 = vadd.xlane.f32.xlu0 %v1923
    %v1950 = vpop.xlane.xlu0 %1949
    %1951 = vadd.xlane.f32.xlu0 %v1924
    %v1952 = vpop.xlane.xlu0 %1951
    %1953 = vadd.xlane.f32.xlu0 %v1925
    %v1954 = vpop.xlane.xlu0 %1953
    %1955 = vadd.xlane.f32.xlu0 %v1926
    %v1956 = vpop.xlane.xlu0 %1955
    %1957 = vadd.xlane.f32.xlu0 %v1927
    %v1958 = vpop.xlane.xlu0 %1957
    %1959 = vadd.xlane.f32.xlu0 %v1928
    %v1960 = vpop.xlane.xlu0 %1959
    %v1961 = vmul.f32 %v1930, %v873
    %v1962 = vmul.f32 %v1932, %v873
    %v1963 = vmul.f32 %v1934, %v873
    %v1964 = vmul.f32 %v1936, %v873
    %v1965 = vmul.f32 %v1938, %v873
    %v1966 = vmul.f32 %v1940, %v873
    %v1967 = vmul.f32 %v1942, %v873
    %v1968 = vmul.f32 %v1944, %v873
    %v1969 = vmul.f32 %v1946, %v873
    %v1970 = vmul.f32 %v1948, %v873
    %v1971 = vmul.f32 %v1950, %v873
    %v1972 = vmul.f32 %v1952, %v873
    %v1973 = vmul.f32 %v1954, %v873
    %v1974 = vmul.f32 %v1956, %v873
    %v1975 = vmul.f32 %v1958, %v873
    %v1976 = vmul.f32 %v1960, %v873
    %v1977 = vadd.f32 %v1961, 1e-05
    %v1978 = vadd.f32 %v1962, 1e-05
    %v1979 = vadd.f32 %v1963, 1e-05
    %v1980 = vadd.f32 %v1964, 1e-05
    %v1981 = vadd.f32 %v1965, 1e-05
    %v1982 = vadd.f32 %v1966, 1e-05
    %v1983 = vadd.f32 %v1967, 1e-05
    %v1984 = vadd.f32 %v1968, 1e-05
    %v1985 = vadd.f32 %v1969, 1e-05
    %v1986 = vadd.f32 %v1970, 1e-05
    %v1987 = vadd.f32 %v1971, 1e-05
    %v1988 = vadd.f32 %v1972, 1e-05
    %v1989 = vadd.f32 %v1973, 1e-05
    %v1990 = vadd.f32 %v1974, 1e-05
    %v1991 = vadd.f32 %v1975, 1e-05
    %v1992 = vadd.f32 %v1976, 1e-05
    %v1993 = vrsqrt.pop %v1977
    %v1994 = vrsqrt.pop %v1978
    %v1995 = vrsqrt.pop %v1979
    %v1996 = vrsqrt.pop %v1980
    %v1997 = vrsqrt.pop %v1981
    %v1998 = vrsqrt.pop %v1982
    %v1999 = vrsqrt.pop %v1983
    %v2000 = vrsqrt.pop %v1984
    %v2001 = vrsqrt.pop %v1985
    %v2002 = vrsqrt.pop %v1986
    %v2003 = vrsqrt.pop %v1987
    %v2004 = vrsqrt.pop %v1988
    %v2005 = vrsqrt.pop %v1989
    %v2006 = vrsqrt.pop %v1990
    %v2007 = vrsqrt.pop %v1991
    %v2008 = vrsqrt.pop %v1992
    %v2009 = vmul.f32 %v1897, %v1993
    %v2010 = vmul.f32 %v1898, %v1994
    %v2011 = vmul.f32 %v1899, %v1995
    %v2012 = vmul.f32 %v1900, %v1996
    %v2013 = vmul.f32 %v1901, %v1997
    %v2014 = vmul.f32 %v1902, %v1998
    %v2015 = vmul.f32 %v1903, %v1999
    %v2016 = vmul.f32 %v1904, %v2000
    %v2017 = vmul.f32 %v1905, %v2001
    %v2018 = vmul.f32 %v1906, %v2002
    %v2019 = vmul.f32 %v1907, %v2003
    %v2020 = vmul.f32 %v1908, %v2004
    %v2021 = vmul.f32 %v1909, %v2005
    %v2022 = vmul.f32 %v1910, %v2006
    %v2023 = vmul.f32 %v1911, %v2007
    %v2024 = vmul.f32 %v1912, %v2008
    %v2025 = vmul.f32 %v2009, %v1022
    %v2026 = vmul.f32 %v2010, %v1022
    %v2027 = vmul.f32 %v2011, %v1022
    %v2028 = vmul.f32 %v2012, %v1022
    %v2029 = vmul.f32 %v2013, %v1022
    %v2030 = vmul.f32 %v2014, %v1022
    %v2031 = vmul.f32 %v2015, %v1022
    %v2032 = vmul.f32 %v2016, %v1022
    %v2033 = vmul.f32 %v2017, %v1022
    %v2034 = vmul.f32 %v2018, %v1022
    %v2035 = vmul.f32 %v2019, %v1022
    %v2036 = vmul.f32 %v2020, %v1022
    %v2037 = vmul.f32 %v2021, %v1022
    %v2038 = vmul.f32 %v2022, %v1022
    %v2039 = vmul.f32 %v2023, %v1022
    %v2040 = vmul.f32 %v2024, %v1022
    %v2041 = vadd.f32 %v2025, %v1044
    %v2042 = vadd.f32 %v2026, %v1044
    %v2043 = vadd.f32 %v2027, %v1044
    %v2044 = vadd.f32 %v2028, %v1044
    %v2045 = vadd.f32 %v2029, %v1044
    %v2046 = vadd.f32 %v2030, %v1044
    %v2047 = vadd.f32 %v2031, %v1044
    %v2048 = vadd.f32 %v2032, %v1044
    %v2049 = vadd.f32 %v2033, %v1044
    %v2050 = vadd.f32 %v2034, %v1044
    %v2051 = vadd.f32 %v2035, %v1044
    %v2052 = vadd.f32 %v2036, %v1044
    %v2053 = vadd.f32 %v2037, %v1044
    %v2054 = vadd.f32 %v2038, %v1044
    %v2055 = vadd.f32 %v2039, %v1044
    %v2056 = vadd.f32 %v2040, %v1044
    %2057 = vst [vmem:[#allocation8 + $0x80] sm:$0xff] %v2041
    %2058 = vst [vmem:[#allocation8 + $0x88] sm:$0xff] %v2042
    %2059 = vst [vmem:[#allocation8 + $0x90] sm:$0xff] %v2043
    %2060 = vst [vmem:[#allocation8 + $0x98] sm:$0xff] %v2044
    %2061 = vst [vmem:[#allocation8 + $0xa0] sm:$0xff] %v2045
    %2062 = vst [vmem:[#allocation8 + $0xa8] sm:$0xff] %v2046
    %2063 = vst [vmem:[#allocation8 + $0xb0] sm:$0xff] %v2047
    %2064 = vst [vmem:[#allocation8 + $0xb8] sm:$0xff] %v2048
    %2065 = vst [vmem:[#allocation8 + $0xc0] sm:$0xff] %v2049
    %2066 = vst [vmem:[#allocation8 + $0xc8] sm:$0xff] %v2050
    %2067 = vst [vmem:[#allocation8 + $0xd0] sm:$0xff] %v2051
    %2068 = vst [vmem:[#allocation8 + $0xd8] sm:$0xff] %v2052
    %2069 = vst [vmem:[#allocation8 + $0xe0] sm:$0xff] %v2053
    %2070 = vst [vmem:[#allocation8 + $0xe8] sm:$0xff] %v2054
    %2071 = vst [vmem:[#allocation8 + $0xf0] sm:$0xff] %v2055
    %2072 = vst [vmem:[#allocation8 + $0xf8] sm:$0xff] %v2056
    // Predicated region
    $region38: #{tpu_custom_call.1} parent=1 // pred_check
      _
    $region39: #{tpu_custom_call.1} parent=1 // pred_check_branch
      %2074 = sbr.rel (0) target = $region41
    $region40: #{tpu_custom_call.1} parent=1 // pred_region
      %s2076 = ssub.s32 4096, 4096
      %2077 = vsyncadd [#allocation4], %s2076
      %s2078 = sshll.u32 [#allocation8], 4
      %s2079 = int_to_ptr.vmem [resolvable:$true] %s2078
      %2084 = dma.vmem_to_hbm [thread:$0]  %s2079, 4096, %s6, [#allocation4], 128, 128, 8
    $region41: #{tpu_custom_call.1} parent=1 // pred_fallthru
      _
    // Predicated region
    $region42: #{tpu_custom_call.1} parent=1 // pred_check
      _
    $region43: #{tpu_custom_call.1} parent=1 // pred_check_branch
      %2086 = sbr.rel (0) target = $region45
    $region44: #{tpu_custom_call.1} parent=1 // pred_region
      %2087 = dma.done [#allocation4], 4096
    $region45: #{tpu_custom_call.1} parent=1 // pred_fallthru
      _
    %2088 = vsyncpa [#allocation3], 1
    %2089 = vsyncpa [#allocation6], 1
    %2090 = vsyncpa [#allocation4], 1

</llo_original>
